<compile_context>
chip_gen: v6e
topology: v6e:2x2x1
jax: 0.10.0
libtpu: 0.0.40
codegen_flags: <defaults>
</compile_context>

<pallas_src>
import functools

import jax
import jax.numpy as jnp
from jax.experimental import pallas as pl
from jax.experimental.pallas import tpu as pltpu

BN_EPS = 1e-5


# ------------------------------ Pallas kernel ------------------------------ #
def _block_kernel(x_ref, dw_ref, pw_ref, b_ref, o_ref, pad_ref, *, H, W, C, d):
    # x_ref  : (1, H, W, C)   block input tile (one batch element), f32
    # dw_ref : (3, 9, C)      depthwise 3x3 weights per stage (tap = ky*3+kx), f32
    # pw_ref : (3, C, C)      folded pointwise weights per stage, bf16
    # b_ref  : (3, 1, C)      folded bias per stage, f32
    # o_ref  : (1, H, W, C)   output tile
    # pad_ref: (H+2d, W+2d, C) VMEM scratch used as the zero-padded stage input
    # Zero the padded scratch every step (cheap vs. 3 matmuls); interior is
    # overwritten each stage, halo stays zero -> implements fixed_padding.
    pad_ref[...] = jnp.zeros_like(pad_ref)

    cur = x_ref[0]  # f32 (H, W, C); also the residual
    for s in range(3):
        # relu (relu(0)=0, so relu-then-pad == pad-then-relu) into padded buf
        pad_ref[d:d + H, d:d + W, :] = jnp.maximum(cur, 0.0)

        # depthwise dilated 3x3, valid conv over the padded scratch (VPU, f32)
        acc = pad_ref[0:H, 0:W, :] * dw_ref[s, 0, :]
        for k in range(1, 9):
            ky, kx = divmod(k, 3)
            acc = acc + pad_ref[ky * d:ky * d + H, kx * d:kx * d + W, :] * dw_ref[s, k, :]

        # folded-BN pointwise 1x1 conv == channel matmul (MXU: bf16 in, f32 acc)
        y = jnp.dot(acc.reshape(H * W, C).astype(jnp.bfloat16), pw_ref[s],
                    preferred_element_type=jnp.float32)
        cur = y.reshape(H, W, C) + b_ref[s, 0, :]

    o_ref[0] = (cur + x_ref[0]).astype(o_ref.dtype)


def block_forward(x_nchw, folded_params, dilation=1):
    """Pallas implementation of Block.forward (BatchNorm in eval mode, folded)."""
    x = jnp.transpose(x_nchw, (0, 2, 3, 1)).astype(jnp.float32)   # NCHW -> NHWC
    dw_all, pw_all, b_all = folded_params
    N, H, W, C = x.shape
    d = int(dilation)
    Hp, Wp = H + 2 * d, W + 2 * d

    kernel = functools.partial(_block_kernel, H=H, W=W, C=C, d=d)
    out = pl.pallas_call(
        kernel,
        out_shape=jax.ShapeDtypeStruct((N, H, W, C), jnp.float32),
        grid=(N,),
        in_specs=[
            pl.BlockSpec((1, H, W, C), lambda n: (n, 0, 0, 0)),
            pl.BlockSpec((3, 9, C), lambda n: (0, 0, 0)),
            pl.BlockSpec((3, C, C), lambda n: (0, 0, 0)),
            pl.BlockSpec((3, 1, C), lambda n: (0, 0, 0)),
        ],
        out_specs=pl.BlockSpec((1, H, W, C), lambda n: (n, 0, 0, 0)),
        scratch_shapes=[pltpu.VMEM((Hp, Wp, C), jnp.float32)],
        compiler_params=pltpu.CompilerParams(
            dimension_semantics=("parallel",),
            vmem_limit_bytes=32 * 1024 * 1024),
    )(x, dw_all, pw_all, b_all)
    return jnp.transpose(out, (0, 3, 1, 2))                        # NHWC -> NCHW


# ------------------------------ params / glue ------------------------------ #
def make_raw_params(key, C):
    """Deterministic synthetic parameters for the 3 SeparableConv2d stages."""
    stages = []
    for s in range(3):
        keys = jax.random.split(jax.random.fold_in(key, s), 8)
        dw = 0.2 * jax.random.normal(keys[0], (3, 3, C), jnp.float32)
        pw = 0.2 * jax.random.normal(keys[1], (C, C), jnp.float32)
        # BN inside SeparableConv2d (on inplanes)
        bn_in = (1.0 + 0.1 * jax.random.normal(keys[2], (C,), jnp.float32),
                 0.1 * jax.random.normal(keys[3], (C,), jnp.float32),
                 0.05 * jax.random.normal(keys[4], (C,), jnp.float32),
                 1.0 + 0.1 * jax.random.uniform(keys[5], (C,), jnp.float32))
        # BN after SeparableConv2d (bn1/bn2/bn3 of Block, on planes)
        bn_out = (1.0 + 0.1 * jax.random.normal(keys[6], (C,), jnp.float32),
                  0.1 * jax.random.normal(keys[7], (C,), jnp.float32),
                  jnp.zeros((C,), jnp.float32),
                  jnp.ones((C,), jnp.float32))
        stages.append((dw, pw, bn_in, bn_out))
    return stages


def fold_params(raw_params):
    """Fold both BN affines into the pointwise weights / a single bias."""
    dws, pws, biases = [], [], []
    for dw, pw, (g_i, b_i, m_i, v_i), (g_o, b_o, m_o, v_o) in raw_params:
        s_in = g_i / jnp.sqrt(v_i + BN_EPS)
        bias_in = b_i - m_i * s_in
        s_out = g_o / jnp.sqrt(v_o + BN_EPS)
        bias_out = b_o - m_o * s_out
        pw_f = (s_in[:, None] * pw) * s_out[None, :]
        bias_f = (bias_in @ pw) * s_out + bias_out
        dws.append(dw.reshape(9, -1).astype(jnp.float32))
        pws.append(pw_f.astype(jnp.bfloat16))       # bf16 operands for the MXU
        biases.append(bias_f.reshape(1, -1).astype(jnp.float32))
    return jnp.stack(dws), jnp.stack(pws), jnp.stack(biases)


# ---------------------------- pure-JAX reference --------------------------- #
def _bn(x, g, b, m, v):
    return (x - m) / jnp.sqrt(v + BN_EPS) * g + b


def _ref_stage(x, dw, pw, bn_in, bn_out, d):
    x = jnp.maximum(x, 0.0)
    N, H, W, C = x.shape
    xp = jnp.pad(x, ((0, 0), (d, d), (d, d), (0, 0)))
    acc = jnp.zeros_like(x)
    for ky in range(3):
        for kx in range(3):
            acc = acc + xp[:, ky * d:ky * d + H, kx * d:kx * d + W, :] * dw[ky, kx]
    y = _bn(acc, *bn_in)
    y = jnp.einsum('nhwc,cd->nhwd', y, pw, precision=jax.lax.Precision.HIGHEST)
    return _bn(y, *bn_out)


def block_forward_ref(x_nchw, raw_params, dilation=1):
    x = jnp.transpose(x_nchw, (0, 2, 3, 1))
    inp = x
    for dw, pw, bn_in, bn_out in raw_params:
        x = _ref_stage(x, dw, pw, bn_in, bn_out, dilation)
    return jnp.transpose(x + inp, (0, 3, 1, 2))


# ----------------------------------- main ---------------------------------- #
if __name__ == "__main__":
    key = jax.random.PRNGKey(0)
    # Lane-dense channel count (Xception block widths are >= 128); residual
    # add requires inplanes == planes.
    N, C, H, W = 2, 128, 16, 16
    dilation = 1

    x = jax.random.normal(jax.random.fold_in(key, 100), (N, C, H, W), jnp.float32)
    raw_params = make_raw_params(key, C)
    folded_params = fold_params(raw_params)

    out = jax.block_until_ready(block_forward(x, folded_params, dilation))
    ref = jax.block_until_ready(block_forward_ref(x, raw_params, dilation))

    assert out.shape == (N, C, H, W), out.shape
    assert bool(jnp.all(jnp.isfinite(out)))
    # Kernel does the 1x1 convs with bf16 operands on the MXU (f32 accumulate);
    # reference is full-f32 HIGHEST, so allow bf16-level tolerance.
    max_err = float(jnp.max(jnp.abs(out - ref)))
    assert jnp.allclose(out, ref, atol=2e-2, rtol=2e-2), max_err
    print("KERNEL_OK")
</pallas_src>

<mosaic_0001>
module attributes {stable_mosaic.version = 11 : i64} {
  func.func @_block_kernel(%arg0: i32, %arg1: memref<1x16x16x128xf32, #tpu.memory_space<vmem>>, %arg2: memref<3x9x128xf32, #tpu.memory_space<vmem>>, %arg3: memref<3x128x128xbf16, #tpu.memory_space<vmem>>, %arg4: memref<3x1x128xf32, #tpu.memory_space<vmem>>, %arg5: memref<1x16x16x128xf32, #tpu.memory_space<vmem>>, %arg6: memref<18x18x128xf32, #tpu.memory_space<vmem>>) attributes {dimension_semantics = [#tpu.dimension_semantics<parallel>], iteration_bounds = array<i64: 2>, scalar_prefetch = 0 : i64, scratch_operands = 1 : i64, tpu.core_type = #tpu.core_type<tc>, window_params = [{transform_indices = @transform_0, window_bounds = array<i64: 1, 16, 16, 128>}, {pipeline_mode = #tpu.pipeline_mode<synchronous>, transform_indices = @transform_1, window_bounds = array<i64: 3, 9, 128>}, {pipeline_mode = #tpu.pipeline_mode<synchronous>, transform_indices = @transform_2, window_bounds = array<i64: 3, 128, 128>}, {pipeline_mode = #tpu.pipeline_mode<synchronous>, transform_indices = @transform_3, window_bounds = array<i64: 3, 1, 128>}, {transform_indices = @transform_4, window_bounds = array<i64: 1, 16, 16, 128>}]} {
    %cst = arith.constant 0.000000e+00 : f32
    %0 = vector.broadcast %cst : f32 to vector<18x18x128xf32>
    %c0 = arith.constant 0 : index
    %c0_0 = arith.constant 0 : index
    %c0_1 = arith.constant 0 : index
    %1 = vector.load %arg6[%c0, %c0_0, %c0_1] : memref<18x18x128xf32, #tpu.memory_space<vmem>>, vector<18x18x128xf32>
    tpu.vector_store %arg6[%c0, %c0_0, %c0_1], %0 {strides = array<i32>} : memref<18x18x128xf32, #tpu.memory_space<vmem>>, vector<18x18x128xf32>,
    %c0_2 = arith.constant 0 : index
    %c0_3 = arith.constant 0 : index
    %c0_4 = arith.constant 0 : index
    %c0_5 = arith.constant 0 : index
    %2 = vector.load %arg1[%c0_2, %c0_3, %c0_4, %c0_5] : memref<1x16x16x128xf32, #tpu.memory_space<vmem>>, vector<1x16x16x128xf32>
    %3 = vector.shape_cast %2 : vector<1x16x16x128xf32> to vector<16x16x128xf32>
    %cst_6 = arith.constant 0.000000e+00 : f32
    %4 = vector.broadcast %cst_6 : f32 to vector<16x16x128xf32>
    %5 = arith.maximumf %3, %4 : vector<16x16x128xf32>
    %c1 = arith.constant 1 : index
    %c1_7 = arith.constant 1 : index
    %c0_8 = arith.constant 0 : index
    %6 = vector.load %arg6[%c1, %c1_7, %c0_8] : memref<18x18x128xf32, #tpu.memory_space<vmem>>, vector<16x16x128xf32>
    tpu.vector_store %arg6[%c1, %c1_7, %c0_8], %5 {strides = array<i32>} : memref<18x18x128xf32, #tpu.memory_space<vmem>>, vector<16x16x128xf32>,
    %c0_9 = arith.constant 0 : index
    %c0_10 = arith.constant 0 : index
    %c0_11 = arith.constant 0 : index
    %7 = vector.load %arg6[%c0_9, %c0_10, %c0_11] : memref<18x18x128xf32, #tpu.memory_space<vmem>>, vector<16x16x128xf32>
    %c0_12 = arith.constant 0 : index
    %c0_13 = arith.constant 0 : index
    %c0_14 = arith.constant 0 : index
    %8 = vector.load %arg2[%c0_12, %c0_13, %c0_14] : memref<3x9x128xf32, #tpu.memory_space<vmem>>, vector<1x1x128xf32>
    %9 = vector.shape_cast %8 : vector<1x1x128xf32> to vector<128xf32>
    %10 = vector.shape_cast %9 : vector<128xf32> to vector<1x1x128xf32>
    %11 = vector.broadcast %10 : vector<1x1x128xf32> to vector<16x16x128xf32>
    %12 = arith.mulf %7, %11 : vector<16x16x128xf32>
    %c0_15 = arith.constant 0 : index
    %c1_16 = arith.constant 1 : index
    %c0_17 = arith.constant 0 : index
    %13 = vector.load %arg6[%c0_15, %c1_16, %c0_17] : memref<18x18x128xf32, #tpu.memory_space<vmem>>, vector<16x16x128xf32>
    %c0_18 = arith.constant 0 : index
    %c1_19 = arith.constant 1 : index
    %c0_20 = arith.constant 0 : index
    %14 = vector.load %arg2[%c0_18, %c1_19, %c0_20] : memref<3x9x128xf32, #tpu.memory_space<vmem>>, vector<1x1x128xf32>
    %15 = vector.shape_cast %14 : vector<1x1x128xf32> to vector<128xf32>
    %16 = vector.shape_cast %15 : vector<128xf32> to vector<1x1x128xf32>
    %17 = vector.broadcast %16 : vector<1x1x128xf32> to vector<16x16x128xf32>
    %18 = arith.mulf %13, %17 : vector<16x16x128xf32>
    %19 = arith.addf %12, %18 : vector<16x16x128xf32>
    %c0_21 = arith.constant 0 : index
    %c2 = arith.constant 2 : index
    %c0_22 = arith.constant 0 : index
    %20 = vector.load %arg6[%c0_21, %c2, %c0_22] : memref<18x18x128xf32, #tpu.memory_space<vmem>>, vector<16x16x128xf32>
    %c0_23 = arith.constant 0 : index
    %c2_24 = arith.constant 2 : index
    %c0_25 = arith.constant 0 : index
    %21 = vector.load %arg2[%c0_23, %c2_24, %c0_25] : memref<3x9x128xf32, #tpu.memory_space<vmem>>, vector<1x1x128xf32>
    %22 = vector.shape_cast %21 : vector<1x1x128xf32> to vector<128xf32>
    %23 = vector.shape_cast %22 : vector<128xf32> to vector<1x1x128xf32>
    %24 = vector.broadcast %23 : vector<1x1x128xf32> to vector<16x16x128xf32>
    %25 = arith.mulf %20, %24 : vector<16x16x128xf32>
    %26 = arith.addf %19, %25 : vector<16x16x128xf32>
    %c1_26 = arith.constant 1 : index
    %c0_27 = arith.constant 0 : index
    %c0_28 = arith.constant 0 : index
    %27 = vector.load %arg6[%c1_26, %c0_27, %c0_28] : memref<18x18x128xf32, #tpu.memory_space<vmem>>, vector<16x16x128xf32>
    %c0_29 = arith.constant 0 : index
    %c3 = arith.constant 3 : index
    %c0_30 = arith.constant 0 : index
    %28 = vector.load %arg2[%c0_29, %c3, %c0_30] : memref<3x9x128xf32, #tpu.memory_space<vmem>>, vector<1x1x128xf32>
    %29 = vector.shape_cast %28 : vector<1x1x128xf32> to vector<128xf32>
    %30 = vector.shape_cast %29 : vector<128xf32> to vector<1x1x128xf32>
    %31 = vector.broadcast %30 : vector<1x1x128xf32> to vector<16x16x128xf32>
    %32 = arith.mulf %27, %31 : vector<16x16x128xf32>
    %33 = arith.addf %26, %32 : vector<16x16x128xf32>
    %c1_31 = arith.constant 1 : index
    %c1_32 = arith.constant 1 : index
    %c0_33 = arith.constant 0 : index
    %34 = vector.load %arg6[%c1_31, %c1_32, %c0_33] : memref<18x18x128xf32, #tpu.memory_space<vmem>>, vector<16x16x128xf32>
    %c0_34 = arith.constant 0 : index
    %c4 = arith.constant 4 : index
    %c0_35 = arith.constant 0 : index
    %35 = vector.load %arg2[%c0_34, %c4, %c0_35] : memref<3x9x128xf32, #tpu.memory_space<vmem>>, vector<1x1x128xf32>
    %36 = vector.shape_cast %35 : vector<1x1x128xf32> to vector<128xf32>
    %37 = vector.shape_cast %36 : vector<128xf32> to vector<1x1x128xf32>
    %38 = vector.broadcast %37 : vector<1x1x128xf32> to vector<16x16x128xf32>
    %39 = arith.mulf %34, %38 : vector<16x16x128xf32>
    %40 = arith.addf %33, %39 : vector<16x16x128xf32>
    %c1_36 = arith.constant 1 : index
    %c2_37 = arith.constant 2 : index
    %c0_38 = arith.constant 0 : index
    %41 = vector.load %arg6[%c1_36, %c2_37, %c0_38] : memref<18x18x128xf32, #tpu.memory_space<vmem>>, vector<16x16x128xf32>
    %c0_39 = arith.constant 0 : index
    %c5 = arith.constant 5 : index
    %c0_40 = arith.constant 0 : index
    %42 = vector.load %arg2[%c0_39, %c5, %c0_40] : memref<3x9x128xf32, #tpu.memory_space<vmem>>, vector<1x1x128xf32>
    %43 = vector.shape_cast %42 : vector<1x1x128xf32> to vector<128xf32>
    %44 = vector.shape_cast %43 : vector<128xf32> to vector<1x1x128xf32>
    %45 = vector.broadcast %44 : vector<1x1x128xf32> to vector<16x16x128xf32>
    %46 = arith.mulf %41, %45 : vector<16x16x128xf32>
    %47 = arith.addf %40, %46 : vector<16x16x128xf32>
    %c2_41 = arith.constant 2 : index
    %c0_42 = arith.constant 0 : index
    %c0_43 = arith.constant 0 : index
    %48 = vector.load %arg6[%c2_41, %c0_42, %c0_43] : memref<18x18x128xf32, #tpu.memory_space<vmem>>, vector<16x16x128xf32>
    %c0_44 = arith.constant 0 : index
    %c6 = arith.constant 6 : index
    %c0_45 = arith.constant 0 : index
    %49 = vector.load %arg2[%c0_44, %c6, %c0_45] : memref<3x9x128xf32, #tpu.memory_space<vmem>>, vector<1x1x128xf32>
    %50 = vector.shape_cast %49 : vector<1x1x128xf32> to vector<128xf32>
    %51 = vector.shape_cast %50 : vector<128xf32> to vector<1x1x128xf32>
    %52 = vector.broadcast %51 : vector<1x1x128xf32> to vector<16x16x128xf32>
    %53 = arith.mulf %48, %52 : vector<16x16x128xf32>
    %54 = arith.addf %47, %53 : vector<16x16x128xf32>
    %c2_46 = arith.constant 2 : index
    %c1_47 = arith.constant 1 : index
    %c0_48 = arith.constant 0 : index
    %55 = vector.load %arg6[%c2_46, %c1_47, %c0_48] : memref<18x18x128xf32, #tpu.memory_space<vmem>>, vector<16x16x128xf32>
    %c0_49 = arith.constant 0 : index
    %c7 = arith.constant 7 : index
    %c0_50 = arith.constant 0 : index
    %56 = vector.load %arg2[%c0_49, %c7, %c0_50] : memref<3x9x128xf32, #tpu.memory_space<vmem>>, vector<1x1x128xf32>
    %57 = vector.shape_cast %56 : vector<1x1x128xf32> to vector<128xf32>
    %58 = vector.shape_cast %57 : vector<128xf32> to vector<1x1x128xf32>
    %59 = vector.broadcast %58 : vector<1x1x128xf32> to vector<16x16x128xf32>
    %60 = arith.mulf %55, %59 : vector<16x16x128xf32>
    %61 = arith.addf %54, %60 : vector<16x16x128xf32>
    %c2_51 = arith.constant 2 : index
    %c2_52 = arith.constant 2 : index
    %c0_53 = arith.constant 0 : index
    %62 = vector.load %arg6[%c2_51, %c2_52, %c0_53] : memref<18x18x128xf32, #tpu.memory_space<vmem>>, vector<16x16x128xf32>
    %c0_54 = arith.constant 0 : index
    %c8 = arith.constant 8 : index
    %c0_55 = arith.constant 0 : index
    %63 = vector.load %arg2[%c0_54, %c8, %c0_55] : memref<3x9x128xf32, #tpu.memory_space<vmem>>, vector<1x1x128xf32>
    %64 = vector.shape_cast %63 : vector<1x1x128xf32> to vector<128xf32>
    %65 = vector.shape_cast %64 : vector<128xf32> to vector<1x1x128xf32>
    %66 = vector.broadcast %65 : vector<1x1x128xf32> to vector<16x16x128xf32>
    %67 = arith.mulf %62, %66 : vector<16x16x128xf32>
    %68 = arith.addf %61, %67 : vector<16x16x128xf32>
    %69 = vector.shape_cast %68 : vector<16x16x128xf32> to vector<256x128xf32>
    %70 = arith.truncf %69 : vector<256x128xf32> to vector<256x128xbf16>
    %c0_56 = arith.constant 0 : index
    %c0_57 = arith.constant 0 : index
    %c0_58 = arith.constant 0 : index
    %71 = vector.load %arg3[%c0_56, %c0_57, %c0_58] : memref<3x128x128xbf16, #tpu.memory_space<vmem>>, vector<1x128x128xbf16>
    %72 = vector.shape_cast %71 : vector<1x128x128xbf16> to vector<128x128xbf16>
    %cst_59 = arith.constant dense<0.000000e+00> : vector<256x128xf32>
    %73 = tpu.matmul %70, %72, %cst_59 {dimension_numbers = #tpu.dot_dimension_numbers<[1], [0], [0], [1], [0, 0, 1, 1], [], []>} : vector<256x128xbf16>, vector<128x128xbf16>, vector<256x128xf32> -> vector<256x128xf32>
    %74 = vector.shape_cast %73 : vector<256x128xf32> to vector<16x16x128xf32>
    %c0_60 = arith.constant 0 : index
    %c0_61 = arith.constant 0 : index
    %c0_62 = arith.constant 0 : index
    %75 = vector.load %arg4[%c0_60, %c0_61, %c0_62] : memref<3x1x128xf32, #tpu.memory_space<vmem>>, vector<1x1x128xf32>
    %76 = vector.shape_cast %75 : vector<1x1x128xf32> to vector<128xf32>
    %77 = vector.shape_cast %76 : vector<128xf32> to vector<1x1x128xf32>
    %78 = vector.broadcast %77 : vector<1x1x128xf32> to vector<16x16x128xf32>
    %79 = arith.addf %74, %78 : vector<16x16x128xf32>
    %cst_63 = arith.constant 0.000000e+00 : f32
    %80 = vector.broadcast %cst_63 : f32 to vector<16x16x128xf32>
    %81 = arith.maximumf %79, %80 : vector<16x16x128xf32>
    %c1_64 = arith.constant 1 : index
    %c1_65 = arith.constant 1 : index
    %c0_66 = arith.constant 0 : index
    %82 = vector.load %arg6[%c1_64, %c1_65, %c0_66] : memref<18x18x128xf32, #tpu.memory_space<vmem>>, vector<16x16x128xf32>
    tpu.vector_store %arg6[%c1_64, %c1_65, %c0_66], %81 {strides = array<i32>} : memref<18x18x128xf32, #tpu.memory_space<vmem>>, vector<16x16x128xf32>,
    %c0_67 = arith.constant 0 : index
    %c0_68 = arith.constant 0 : index
    %c0_69 = arith.constant 0 : index
    %83 = vector.load %arg6[%c0_67, %c0_68, %c0_69] : memref<18x18x128xf32, #tpu.memory_space<vmem>>, vector<16x16x128xf32>
    %c1_70 = arith.constant 1 : index
    %c0_71 = arith.constant 0 : index
    %c0_72 = arith.constant 0 : index
    %84 = vector.load %arg2[%c1_70, %c0_71, %c0_72] : memref<3x9x128xf32, #tpu.memory_space<vmem>>, vector<1x1x128xf32>
    %85 = vector.shape_cast %84 : vector<1x1x128xf32> to vector<128xf32>
    %86 = vector.shape_cast %85 : vector<128xf32> to vector<1x1x128xf32>
    %87 = vector.broadcast %86 : vector<1x1x128xf32> to vector<16x16x128xf32>
    %88 = arith.mulf %83, %87 : vector<16x16x128xf32>
    %c0_73 = arith.constant 0 : index
    %c1_74 = arith.constant 1 : index
    %c0_75 = arith.constant 0 : index
    %89 = vector.load %arg6[%c0_73, %c1_74, %c0_75] : memref<18x18x128xf32, #tpu.memory_space<vmem>>, vector<16x16x128xf32>
    %c1_76 = arith.constant 1 : index
    %c1_77 = arith.constant 1 : index
    %c0_78 = arith.constant 0 : index
    %90 = vector.load %arg2[%c1_76, %c1_77, %c0_78] : memref<3x9x128xf32, #tpu.memory_space<vmem>>, vector<1x1x128xf32>
    %91 = vector.shape_cast %90 : vector<1x1x128xf32> to vector<128xf32>
    %92 = vector.shape_cast %91 : vector<128xf32> to vector<1x1x128xf32>
    %93 = vector.broadcast %92 : vector<1x1x128xf32> to vector<16x16x128xf32>
    %94 = arith.mulf %89, %93 : vector<16x16x128xf32>
    %95 = arith.addf %88, %94 : vector<16x16x128xf32>
    %c0_79 = arith.constant 0 : index
    %c2_80 = arith.constant 2 : index
    %c0_81 = arith.constant 0 : index
    %96 = vector.load %arg6[%c0_79, %c2_80, %c0_81] : memref<18x18x128xf32, #tpu.memory_space<vmem>>, vector<16x16x128xf32>
    %c1_82 = arith.constant 1 : index
    %c2_83 = arith.constant 2 : index
    %c0_84 = arith.constant 0 : index
    %97 = vector.load %arg2[%c1_82, %c2_83, %c0_84] : memref<3x9x128xf32, #tpu.memory_space<vmem>>, vector<1x1x128xf32>
    %98 = vector.shape_cast %97 : vector<1x1x128xf32> to vector<128xf32>
    %99 = vector.shape_cast %98 : vector<128xf32> to vector<1x1x128xf32>
    %100 = vector.broadcast %99 : vector<1x1x128xf32> to vector<16x16x128xf32>
    %101 = arith.mulf %96, %100 : vector<16x16x128xf32>
    %102 = arith.addf %95, %101 : vector<16x16x128xf32>
    %c1_85 = arith.constant 1 : index
    %c0_86 = arith.constant 0 : index
    %c0_87 = arith.constant 0 : index
    %103 = vector.load %arg6[%c1_85, %c0_86, %c0_87] : memref<18x18x128xf32, #tpu.memory_space<vmem>>, vector<16x16x128xf32>
    %c1_88 = arith.constant 1 : index
    %c3_89 = arith.constant 3 : index
    %c0_90 = arith.constant 0 : index
    %104 = vector.load %arg2[%c1_88, %c3_89, %c0_90] : memref<3x9x128xf32, #tpu.memory_space<vmem>>, vector<1x1x128xf32>
    %105 = vector.shape_cast %104 : vector<1x1x128xf32> to vector<128xf32>
    %106 = vector.shape_cast %105 : vector<128xf32> to vector<1x1x128xf32>
    %107 = vector.broadcast %106 : vector<1x1x128xf32> to vector<16x16x128xf32>
    %108 = arith.mulf %103, %107 : vector<16x16x128xf32>
    %109 = arith.addf %102, %108 : vector<16x16x128xf32>
    %c1_91 = arith.constant 1 : index
    %c1_92 = arith.constant 1 : index
    %c0_93 = arith.constant 0 : index
    %110 = vector.load %arg6[%c1_91, %c1_92, %c0_93] : memref<18x18x128xf32, #tpu.memory_space<vmem>>, vector<16x16x128xf32>
    %c1_94 = arith.constant 1 : index
    %c4_95 = arith.constant 4 : index
    %c0_96 = arith.constant 0 : index
    %111 = vector.load %arg2[%c1_94, %c4_95, %c0_96] : memref<3x9x128xf32, #tpu.memory_space<vmem>>, vector<1x1x128xf32>
    %112 = vector.shape_cast %111 : vector<1x1x128xf32> to vector<128xf32>
    %113 = vector.shape_cast %112 : vector<128xf32> to vector<1x1x128xf32>
    %114 = vector.broadcast %113 : vector<1x1x128xf32> to vector<16x16x128xf32>
    %115 = arith.mulf %110, %114 : vector<16x16x128xf32>
    %116 = arith.addf %109, %115 : vector<16x16x128xf32>
    %c1_97 = arith.constant 1 : index
    %c2_98 = arith.constant 2 : index
    %c0_99 = arith.constant 0 : index
    %117 = vector.load %arg6[%c1_97, %c2_98, %c0_99] : memref<18x18x128xf32, #tpu.memory_space<vmem>>, vector<16x16x128xf32>
    %c1_100 = arith.constant 1 : index
    %c5_101 = arith.constant 5 : index
    %c0_102 = arith.constant 0 : index
    %118 = vector.load %arg2[%c1_100, %c5_101, %c0_102] : memref<3x9x128xf32, #tpu.memory_space<vmem>>, vector<1x1x128xf32>
    %119 = vector.shape_cast %118 : vector<1x1x128xf32> to vector<128xf32>
    %120 = vector.shape_cast %119 : vector<128xf32> to vector<1x1x128xf32>
    %121 = vector.broadcast %120 : vector<1x1x128xf32> to vector<16x16x128xf32>
    %122 = arith.mulf %117, %121 : vector<16x16x128xf32>
    %123 = arith.addf %116, %122 : vector<16x16x128xf32>
    %c2_103 = arith.constant 2 : index
    %c0_104 = arith.constant 0 : index
    %c0_105 = arith.constant 0 : index
    %124 = vector.load %arg6[%c2_103, %c0_104, %c0_105] : memref<18x18x128xf32, #tpu.memory_space<vmem>>, vector<16x16x128xf32>
    %c1_106 = arith.constant 1 : index
    %c6_107 = arith.constant 6 : index
    %c0_108 = arith.constant 0 : index
    %125 = vector.load %arg2[%c1_106, %c6_107, %c0_108] : memref<3x9x128xf32, #tpu.memory_space<vmem>>, vector<1x1x128xf32>
    %126 = vector.shape_cast %125 : vector<1x1x128xf32> to vector<128xf32>
    %127 = vector.shape_cast %126 : vector<128xf32> to vector<1x1x128xf32>
    %128 = vector.broadcast %127 : vector<1x1x128xf32> to vector<16x16x128xf32>
    %129 = arith.mulf %124, %128 : vector<16x16x128xf32>
    %130 = arith.addf %123, %129 : vector<16x16x128xf32>
    %c2_109 = arith.constant 2 : index
    %c1_110 = arith.constant 1 : index
    %c0_111 = arith.constant 0 : index
    %131 = vector.load %arg6[%c2_109, %c1_110, %c0_111] : memref<18x18x128xf32, #tpu.memory_space<vmem>>, vector<16x16x128xf32>
    %c1_112 = arith.constant 1 : index
    %c7_113 = arith.constant 7 : index
    %c0_114 = arith.constant 0 : index
    %132 = vector.load %arg2[%c1_112, %c7_113, %c0_114] : memref<3x9x128xf32, #tpu.memory_space<vmem>>, vector<1x1x128xf32>
    %133 = vector.shape_cast %132 : vector<1x1x128xf32> to vector<128xf32>
    %134 = vector.shape_cast %133 : vector<128xf32> to vector<1x1x128xf32>
    %135 = vector.broadcast %134 : vector<1x1x128xf32> to vector<16x16x128xf32>
    %136 = arith.mulf %131, %135 : vector<16x16x128xf32>
    %137 = arith.addf %130, %136 : vector<16x16x128xf32>
    %c2_115 = arith.constant 2 : index
    %c2_116 = arith.constant 2 : index
    %c0_117 = arith.constant 0 : index
    %138 = vector.load %arg6[%c2_115, %c2_116, %c0_117] : memref<18x18x128xf32, #tpu.memory_space<vmem>>, vector<16x16x128xf32>
    %c1_118 = arith.constant 1 : index
    %c8_119 = arith.constant 8 : index
    %c0_120 = arith.constant 0 : index
    %139 = vector.load %arg2[%c1_118, %c8_119, %c0_120] : memref<3x9x128xf32, #tpu.memory_space<vmem>>, vector<1x1x128xf32>
    %140 = vector.shape_cast %139 : vector<1x1x128xf32> to vector<128xf32>
    %141 = vector.shape_cast %140 : vector<128xf32> to vector<1x1x128xf32>
    %142 = vector.broadcast %141 : vector<1x1x128xf32> to vector<16x16x128xf32>
    %143 = arith.mulf %138, %142 : vector<16x16x128xf32>
    %144 = arith.addf %137, %143 : vector<16x16x128xf32>
    %145 = vector.shape_cast %144 : vector<16x16x128xf32> to vector<256x128xf32>
    %146 = arith.truncf %145 : vector<256x128xf32> to vector<256x128xbf16>
    %c1_121 = arith.constant 1 : index
    %c0_122 = arith.constant 0 : index
    %c0_123 = arith.constant 0 : index
    %147 = vector.load %arg3[%c1_121, %c0_122, %c0_123] : memref<3x128x128xbf16, #tpu.memory_space<vmem>>, vector<1x128x128xbf16>
    %148 = vector.shape_cast %147 : vector<1x128x128xbf16> to vector<128x128xbf16>
    %cst_124 = arith.constant dense<0.000000e+00> : vector<256x128xf32>
    %149 = tpu.matmul %146, %148, %cst_124 {dimension_numbers = #tpu.dot_dimension_numbers<[1], [0], [0], [1], [0, 0, 1, 1], [], []>} : vector<256x128xbf16>, vector<128x128xbf16>, vector<256x128xf32> -> vector<256x128xf32>
    %150 = vector.shape_cast %149 : vector<256x128xf32> to vector<16x16x128xf32>
    %c1_125 = arith.constant 1 : index
    %c0_126 = arith.constant 0 : index
    %c0_127 = arith.constant 0 : index
    %151 = vector.load %arg4[%c1_125, %c0_126, %c0_127] : memref<3x1x128xf32, #tpu.memory_space<vmem>>, vector<1x1x128xf32>
    %152 = vector.shape_cast %151 : vector<1x1x128xf32> to vector<128xf32>
    %153 = vector.shape_cast %152 : vector<128xf32> to vector<1x1x128xf32>
    %154 = vector.broadcast %153 : vector<1x1x128xf32> to vector<16x16x128xf32>
    %155 = arith.addf %150, %154 : vector<16x16x128xf32>
    %cst_128 = arith.constant 0.000000e+00 : f32
    %156 = vector.broadcast %cst_128 : f32 to vector<16x16x128xf32>
    %157 = arith.maximumf %155, %156 : vector<16x16x128xf32>
    %c1_129 = arith.constant 1 : index
    %c1_130 = arith.constant 1 : index
    %c0_131 = arith.constant 0 : index
    %158 = vector.load %arg6[%c1_129, %c1_130, %c0_131] : memref<18x18x128xf32, #tpu.memory_space<vmem>>, vector<16x16x128xf32>
    tpu.vector_store %arg6[%c1_129, %c1_130, %c0_131], %157 {strides = array<i32>} : memref<18x18x128xf32, #tpu.memory_space<vmem>>, vector<16x16x128xf32>,
    %c0_132 = arith.constant 0 : index
    %c0_133 = arith.constant 0 : index
    %c0_134 = arith.constant 0 : index
    %159 = vector.load %arg6[%c0_132, %c0_133, %c0_134] : memref<18x18x128xf32, #tpu.memory_space<vmem>>, vector<16x16x128xf32>
    %c2_135 = arith.constant 2 : index
    %c0_136 = arith.constant 0 : index
    %c0_137 = arith.constant 0 : index
    %160 = vector.load %arg2[%c2_135, %c0_136, %c0_137] : memref<3x9x128xf32, #tpu.memory_space<vmem>>, vector<1x1x128xf32>
    %161 = vector.shape_cast %160 : vector<1x1x128xf32> to vector<128xf32>
    %162 = vector.shape_cast %161 : vector<128xf32> to vector<1x1x128xf32>
    %163 = vector.broadcast %162 : vector<1x1x128xf32> to vector<16x16x128xf32>
    %164 = arith.mulf %159, %163 : vector<16x16x128xf32>
    %c0_138 = arith.constant 0 : index
    %c1_139 = arith.constant 1 : index
    %c0_140 = arith.constant 0 : index
    %165 = vector.load %arg6[%c0_138, %c1_139, %c0_140] : memref<18x18x128xf32, #tpu.memory_space<vmem>>, vector<16x16x128xf32>
    %c2_141 = arith.constant 2 : index
    %c1_142 = arith.constant 1 : index
    %c0_143 = arith.constant 0 : index
    %166 = vector.load %arg2[%c2_141, %c1_142, %c0_143] : memref<3x9x128xf32, #tpu.memory_space<vmem>>, vector<1x1x128xf32>
    %167 = vector.shape_cast %166 : vector<1x1x128xf32> to vector<128xf32>
    %168 = vector.shape_cast %167 : vector<128xf32> to vector<1x1x128xf32>
    %169 = vector.broadcast %168 : vector<1x1x128xf32> to vector<16x16x128xf32>
    %170 = arith.mulf %165, %169 : vector<16x16x128xf32>
    %171 = arith.addf %164, %170 : vector<16x16x128xf32>
    %c0_144 = arith.constant 0 : index
    %c2_145 = arith.constant 2 : index
    %c0_146 = arith.constant 0 : index
    %172 = vector.load %arg6[%c0_144, %c2_145, %c0_146] : memref<18x18x128xf32, #tpu.memory_space<vmem>>, vector<16x16x128xf32>
    %c2_147 = arith.constant 2 : index
    %c2_148 = arith.constant 2 : index
    %c0_149 = arith.constant 0 : index
    %173 = vector.load %arg2[%c2_147, %c2_148, %c0_149] : memref<3x9x128xf32, #tpu.memory_space<vmem>>, vector<1x1x128xf32>
    %174 = vector.shape_cast %173 : vector<1x1x128xf32> to vector<128xf32>
    %175 = vector.shape_cast %174 : vector<128xf32> to vector<1x1x128xf32>
    %176 = vector.broadcast %175 : vector<1x1x128xf32> to vector<16x16x128xf32>
    %177 = arith.mulf %172, %176 : vector<16x16x128xf32>
    %178 = arith.addf %171, %177 : vector<16x16x128xf32>
    %c1_150 = arith.constant 1 : index
    %c0_151 = arith.constant 0 : index
    %c0_152 = arith.constant 0 : index
    %179 = vector.load %arg6[%c1_150, %c0_151, %c0_152] : memref<18x18x128xf32, #tpu.memory_space<vmem>>, vector<16x16x128xf32>
    %c2_153 = arith.constant 2 : index
    %c3_154 = arith.constant 3 : index
    %c0_155 = arith.constant 0 : index
    %180 = vector.load %arg2[%c2_153, %c3_154, %c0_155] : memref<3x9x128xf32, #tpu.memory_space<vmem>>, vector<1x1x128xf32>
    %181 = vector.shape_cast %180 : vector<1x1x128xf32> to vector<128xf32>
    %182 = vector.shape_cast %181 : vector<128xf32> to vector<1x1x128xf32>
    %183 = vector.broadcast %182 : vector<1x1x128xf32> to vector<16x16x128xf32>
    %184 = arith.mulf %179, %183 : vector<16x16x128xf32>
    %185 = arith.addf %178, %184 : vector<16x16x128xf32>
    %c1_156 = arith.constant 1 : index
    %c1_157 = arith.constant 1 : index
    %c0_158 = arith.constant 0 : index
    %186 = vector.load %arg6[%c1_156, %c1_157, %c0_158] : memref<18x18x128xf32, #tpu.memory_space<vmem>>, vector<16x16x128xf32>
    %c2_159 = arith.constant 2 : index
    %c4_160 = arith.constant 4 : index
    %c0_161 = arith.constant 0 : index
    %187 = vector.load %arg2[%c2_159, %c4_160, %c0_161] : memref<3x9x128xf32, #tpu.memory_space<vmem>>, vector<1x1x128xf32>
    %188 = vector.shape_cast %187 : vector<1x1x128xf32> to vector<128xf32>
    %189 = vector.shape_cast %188 : vector<128xf32> to vector<1x1x128xf32>
    %190 = vector.broadcast %189 : vector<1x1x128xf32> to vector<16x16x128xf32>
    %191 = arith.mulf %186, %190 : vector<16x16x128xf32>
    %192 = arith.addf %185, %191 : vector<16x16x128xf32>
    %c1_162 = arith.constant 1 : index
    %c2_163 = arith.constant 2 : index
    %c0_164 = arith.constant 0 : index
    %193 = vector.load %arg6[%c1_162, %c2_163, %c0_164] : memref<18x18x128xf32, #tpu.memory_space<vmem>>, vector<16x16x128xf32>
    %c2_165 = arith.constant 2 : index
    %c5_166 = arith.constant 5 : index
    %c0_167 = arith.constant 0 : index
    %194 = vector.load %arg2[%c2_165, %c5_166, %c0_167] : memref<3x9x128xf32, #tpu.memory_space<vmem>>, vector<1x1x128xf32>
    %195 = vector.shape_cast %194 : vector<1x1x128xf32> to vector<128xf32>
    %196 = vector.shape_cast %195 : vector<128xf32> to vector<1x1x128xf32>
    %197 = vector.broadcast %196 : vector<1x1x128xf32> to vector<16x16x128xf32>
    %198 = arith.mulf %193, %197 : vector<16x16x128xf32>
    %199 = arith.addf %192, %198 : vector<16x16x128xf32>
    %c2_168 = arith.constant 2 : index
    %c0_169 = arith.constant 0 : index
    %c0_170 = arith.constant 0 : index
    %200 = vector.load %arg6[%c2_168, %c0_169, %c0_170] : memref<18x18x128xf32, #tpu.memory_space<vmem>>, vector<16x16x128xf32>
    %c2_171 = arith.constant 2 : index
    %c6_172 = arith.constant 6 : index
    %c0_173 = arith.constant 0 : index
    %201 = vector.load %arg2[%c2_171, %c6_172, %c0_173] : memref<3x9x128xf32, #tpu.memory_space<vmem>>, vector<1x1x128xf32>
    %202 = vector.shape_cast %201 : vector<1x1x128xf32> to vector<128xf32>
    %203 = vector.shape_cast %202 : vector<128xf32> to vector<1x1x128xf32>
    %204 = vector.broadcast %203 : vector<1x1x128xf32> to vector<16x16x128xf32>
    %205 = arith.mulf %200, %204 : vector<16x16x128xf32>
    %206 = arith.addf %199, %205 : vector<16x16x128xf32>
    %c2_174 = arith.constant 2 : index
    %c1_175 = arith.constant 1 : index
    %c0_176 = arith.constant 0 : index
    %207 = vector.load %arg6[%c2_174, %c1_175, %c0_176] : memref<18x18x128xf32, #tpu.memory_space<vmem>>, vector<16x16x128xf32>
    %c2_177 = arith.constant 2 : index
    %c7_178 = arith.constant 7 : index
    %c0_179 = arith.constant 0 : index
    %208 = vector.load %arg2[%c2_177, %c7_178, %c0_179] : memref<3x9x128xf32, #tpu.memory_space<vmem>>, vector<1x1x128xf32>
    %209 = vector.shape_cast %208 : vector<1x1x128xf32> to vector<128xf32>
    %210 = vector.shape_cast %209 : vector<128xf32> to vector<1x1x128xf32>
    %211 = vector.broadcast %210 : vector<1x1x128xf32> to vector<16x16x128xf32>
    %212 = arith.mulf %207, %211 : vector<16x16x128xf32>
    %213 = arith.addf %206, %212 : vector<16x16x128xf32>
    %c2_180 = arith.constant 2 : index
    %c2_181 = arith.constant 2 : index
    %c0_182 = arith.constant 0 : index
    %214 = vector.load %arg6[%c2_180, %c2_181, %c0_182] : memref<18x18x128xf32, #tpu.memory_space<vmem>>, vector<16x16x128xf32>
    %c2_183 = arith.constant 2 : index
    %c8_184 = arith.constant 8 : index
    %c0_185 = arith.constant 0 : index
    %215 = vector.load %arg2[%c2_183, %c8_184, %c0_185] : memref<3x9x128xf32, #tpu.memory_space<vmem>>, vector<1x1x128xf32>
    %216 = vector.shape_cast %215 : vector<1x1x128xf32> to vector<128xf32>
    %217 = vector.shape_cast %216 : vector<128xf32> to vector<1x1x128xf32>
    %218 = vector.broadcast %217 : vector<1x1x128xf32> to vector<16x16x128xf32>
    %219 = arith.mulf %214, %218 : vector<16x16x128xf32>
    %220 = arith.addf %213, %219 : vector<16x16x128xf32>
    %221 = vector.shape_cast %220 : vector<16x16x128xf32> to vector<256x128xf32>
    %222 = arith.truncf %221 : vector<256x128xf32> to vector<256x128xbf16>
    %c2_186 = arith.constant 2 : index
    %c0_187 = arith.constant 0 : index
    %c0_188 = arith.constant 0 : index
    %223 = vector.load %arg3[%c2_186, %c0_187, %c0_188] : memref<3x128x128xbf16, #tpu.memory_space<vmem>>, vector<1x128x128xbf16>
    %224 = vector.shape_cast %223 : vector<1x128x128xbf16> to vector<128x128xbf16>
    %cst_189 = arith.constant dense<0.000000e+00> : vector<256x128xf32>
    %225 = tpu.matmul %222, %224, %cst_189 {dimension_numbers = #tpu.dot_dimension_numbers<[1], [0], [0], [1], [0, 0, 1, 1], [], []>} : vector<256x128xbf16>, vector<128x128xbf16>, vector<256x128xf32> -> vector<256x128xf32>
    %226 = vector.shape_cast %225 : vector<256x128xf32> to vector<16x16x128xf32>
    %c2_190 = arith.constant 2 : index
    %c0_191 = arith.constant 0 : index
    %c0_192 = arith.constant 0 : index
    %227 = vector.load %arg4[%c2_190, %c0_191, %c0_192] : memref<3x1x128xf32, #tpu.memory_space<vmem>>, vector<1x1x128xf32>
    %228 = vector.shape_cast %227 : vector<1x1x128xf32> to vector<128xf32>
    %229 = vector.shape_cast %228 : vector<128xf32> to vector<1x1x128xf32>
    %230 = vector.broadcast %229 : vector<1x1x128xf32> to vector<16x16x128xf32>
    %231 = arith.addf %226, %230 : vector<16x16x128xf32>
    %c0_193 = arith.constant 0 : index
    %c0_194 = arith.constant 0 : index
    %c0_195 = arith.constant 0 : index
    %c0_196 = arith.constant 0 : index
    %232 = vector.load %arg1[%c0_193, %c0_194, %c0_195, %c0_196] : memref<1x16x16x128xf32, #tpu.memory_space<vmem>>, vector<1x16x16x128xf32>
    %233 = vector.shape_cast %232 : vector<1x16x16x128xf32> to vector<16x16x128xf32>
    %234 = arith.addf %231, %233 : vector<16x16x128xf32>
    %c0_197 = arith.constant 0 : index
    %c0_198 = arith.constant 0 : index
    %c0_199 = arith.constant 0 : index
    %c0_200 = arith.constant 0 : index
    %235 = vector.load %arg5[%c0_197, %c0_198, %c0_199, %c0_200] : memref<1x16x16x128xf32, #tpu.memory_space<vmem>>, vector<1x16x16x128xf32>
    %236 = vector.shape_cast %235 : vector<1x16x16x128xf32> to vector<16x16x128xf32>
    %237 = vector.shape_cast %234 : vector<16x16x128xf32> to vector<1x16x16x128xf32>
    tpu.vector_store %arg5[%c0_197, %c0_198, %c0_199, %c0_200], %237 {strides = array<i32>} : memref<1x16x16x128xf32, #tpu.memory_space<vmem>>, vector<1x16x16x128xf32>,
    return
  }
  func.func @transform_0(%arg0: i32) -> (i32, i32, i32, i32) {
    %c0_i32 = arith.constant 0 : i32
    %c0_i32_0 = arith.constant 0 : i32
    %c0_i32_1 = arith.constant 0 : i32
    %c0_i32_2 = arith.constant 0 : i32
    return %arg0, %c0_i32, %c0_i32_0, %c0_i32_1 : i32, i32, i32, i32
  }
  func.func @transform_1(%arg0: i32) -> (i32, i32, i32) {
    %c0_i32 = arith.constant 0 : i32
    %c0_i32_0 = arith.constant 0 : i32
    %c0_i32_1 = arith.constant 0 : i32
    %c0_i32_2 = arith.constant 0 : i32
    return %c0_i32, %c0_i32_0, %c0_i32_1 : i32, i32, i32
  }
  func.func @transform_2(%arg0: i32) -> (i32, i32, i32) {
    %c0_i32 = arith.constant 0 : i32
    %c0_i32_0 = arith.constant 0 : i32
    %c0_i32_1 = arith.constant 0 : i32
    %c0_i32_2 = arith.constant 0 : i32
    return %c0_i32, %c0_i32_0, %c0_i32_1 : i32, i32, i32
  }
  func.func @transform_3(%arg0: i32) -> (i32, i32, i32) {
    %c0_i32 = arith.constant 0 : i32
    %c0_i32_0 = arith.constant 0 : i32
    %c0_i32_1 = arith.constant 0 : i32
    %c0_i32_2 = arith.constant 0 : i32
    return %c0_i32, %c0_i32_0, %c0_i32_1 : i32, i32, i32
  }
  func.func @transform_4(%arg0: i32) -> (i32, i32, i32, i32) {
    %c0_i32 = arith.constant 0 : i32
    %c0_i32_0 = arith.constant 0 : i32
    %c0_i32_1 = arith.constant 0 : i32
    %c0_i32_2 = arith.constant 0 : i32
    return %arg0, %c0_i32, %c0_i32_0, %c0_i32_1 : i32, i32, i32, i32
  }
}

</mosaic_0001>

<llo_original>
// kernel: tpu_custom_call.1
$region0: #{tpu_custom_call.1}
  #allocation0 [shape = 'u32[]', space=smem, size = 0x4, offset = 0x4, fixed_abs, tag = 'smem constant byte address 0x4 - core index']
  #allocation1 [shape = 'u32[144,128]{1,0:T(1,128)}', space=vmem, size = 0x12000, scoped, tag = 'internal scratch']
  #allocation2 [shape = 'f32[18,18,128]{2,1,0:T(8,128)}', space=vmem, size = 0x36000, scoped, tag = 'scratch operand']
  %s0 = inlined_call_operand.hbm [shape: f32[2,16,16,128], index: 0, kind: input, shape index: {}]
  %s1 = inlined_call_operand.vmem [shape: f32[3,9,128], index: 1, kind: input, shape index: {}]
  %s2 = inlined_call_operand.hbm [shape: bf16[3,128,128], index: 2, kind: input, shape index: {}]
  %s3 = inlined_call_operand.vmem [shape: f32[3,1,128], index: 3, kind: input, shape index: {}]
  %s4 = inlined_call_operand.hbm [shape: f32[2,16,16,128], index: 4, kind: output, shape index: {}]
  %s5 = sld [smem:[#allocation0]]
  $region57: #{tpu_custom_call.1} parent=0
    _
  %s7 = ssub.s32 1, %s5
  %s8 = scalar_select 0, %s7, %s5
  $region1: #{tpu_custom_call.1} parent=0
    #allocation3 [shape = 'u8[262144]{0}', space=vmem, size = 0x40000, scoped, tag = 'input window, operand 0']
    #allocation4 [shape = 's32[2]{0}', space=sflag, size = 0x8, scoped, tag = 'scoped memory for tpu_custom_call.1']
    #allocation5 [shape = 's32[2]{0}', space=sflag, size = 0x8, scoped, tag = 'scoped memory for tpu_custom_call.1']
    #allocation6 [shape = 'u8[98304]{0}', space=vmem, size = 0x18000, scoped, tag = 'input window, operand 2, single buffered']
    #allocation7 [shape = 's32[1]{0}', space=sflag, size = 0x4, scoped, tag = 'scoped memory for tpu_custom_call.1']
    #allocation8 [shape = 'u8[262144]{0}', space=vmem, size = 0x40000, scoped, tag = 'output window, operand 0']
    %9 = vsyncpa [#allocation4], 0
    %s10 = scalar_lea.sflag [#allocation4], 1
    %11 = vsyncpa %s10, 0
    %12 = vsyncpa [#allocation7], 0
    %13 = vsyncpa [#allocation5], 0
    %s14 = scalar_lea.sflag [#allocation5], 1
    %15 = vsyncpa %s14, 0
    loop: start=0, step=1, limit=4
    $region2: #{tpu_custom_call.1} parent=1 // loop_pre_header
      _
    $region3: #{tpu_custom_call.1} parent=1 // loop_header
      %s17 = sphi 0, %s21
      %p18 = scmp.ge.s32.totalorder %s17, 4
      %s27 = sphi 0, %s29
      %s30 = sphi 0, %s27
      %s31 = sphi 0, %s30
      %s47 = sphi 0, %s31
      %s51 = sphi 0, %s51
      %s53 = sphi 0, %s51
      %s54 = sphi 0, %s53
      %s68 = sphi 0, %s54
      %s72 = sphi 0, %s72
      %s74 = sphi 0, %s72
      %s75 = sphi 0, %s74
      %s89 = sphi 0, %s75
      %s93 = sphi 0, %s93
      %s95 = sphi 0, %s93
      %s96 = sphi 0, %s95
      %s110 = sphi 0, %s96
      %s116 = sphi 0, %s118
      %s119 = sphi 0, %s116
      %s120 = sphi 0, %s119
      %s136 = sphi 0, %s120
    $region4: #{tpu_custom_call.1} parent=1 // loop_header_branch
      %20 = sbr.rel (%p18) target = $region8
    $region5: #{tpu_custom_call.1} parent=1 // loop_body
      %s22 = ssub.s32 %s17, 1
      %s23 = ssub.s32 %s17, 2
      %s24 = sadd.s32 %s17, 1
      %s25 = ssub.s32 %s17, %s24
      %p26 = scmp.eq.s32.totalorder %s25, 0
      %s28 = sadd.s32 %s27, 1
      %s29 = scalar_select %p26, %s27, %s28
      %p32 = pneg %p26
      %p33 = scmp.eq.s32.totalorder %s17, 1
      %p34 = por %p32, %p33
      %p35 = scmp.ne.s32.totalorder %s27, %s30
      %p36 = scmp.eq.s32.totalorder %s17, 0
      %p37 = por %p35, %p36
      %p38 = scmp.ne.s32.totalorder %s27, %s30
      %p39 = scmp.eq.s32.totalorder %s22, 1
      %p40 = por %p38, %p39
      %p41 = scmp.ne.s32.totalorder %s30, %s31
      %p42 = scmp.eq.s32.totalorder %s22, 0
      %p43 = por %p41, %p42
      %p44 = scmp.ne.s32.totalorder %s30, %s31
      %p45 = scmp.eq.s32.totalorder %s23, 1
      %p46 = por %p44, %p45
      %p48 = scmp.ne.s32.totalorder %s31, %s47
      %p49 = scmp.eq.s32.totalorder %s23, 0
      %p50 = por %p48, %p49
      %s52 = sadd.s32 %s51, 1
      %p55 = scmp.eq.s32.totalorder %s17, 1
      %p56 = scmp.ne.s32.totalorder %s51, %s53
      %p57 = scmp.eq.s32.totalorder %s17, 0
      %p58 = por %p56, %p57
      %p59 = scmp.ne.s32.totalorder %s51, %s53
      %p60 = scmp.eq.s32.totalorder %s22, 1
      %p61 = por %p59, %p60
      %p62 = scmp.ne.s32.totalorder %s53, %s54
      %p63 = scmp.eq.s32.totalorder %s22, 0
      %p64 = por %p62, %p63
      %p65 = scmp.ne.s32.totalorder %s53, %s54
      %p66 = scmp.eq.s32.totalorder %s23, 1
      %p67 = por %p65, %p66
      %p69 = scmp.ne.s32.totalorder %s54, %s68
      %p70 = scmp.eq.s32.totalorder %s23, 0
      %p71 = por %p69, %p70
      %s73 = sadd.s32 %s72, 1
      %p76 = scmp.eq.s32.totalorder %s17, 1
      %p77 = scmp.ne.s32.totalorder %s72, %s74
      %p78 = scmp.eq.s32.totalorder %s17, 0
      %p79 = por %p77, %p78
      %p80 = scmp.ne.s32.totalorder %s72, %s74
      %p81 = scmp.eq.s32.totalorder %s22, 1
      %p82 = por %p80, %p81
      %p83 = scmp.ne.s32.totalorder %s74, %s75
      %p84 = scmp.eq.s32.totalorder %s22, 0
      %p85 = por %p83, %p84
      %p86 = scmp.ne.s32.totalorder %s74, %s75
      %p87 = scmp.eq.s32.totalorder %s23, 1
      %p88 = por %p86, %p87
      %p90 = scmp.ne.s32.totalorder %s75, %s89
      %p91 = scmp.eq.s32.totalorder %s23, 0
      %p92 = por %p90, %p91
      %s94 = sadd.s32 %s93, 1
      %p97 = scmp.eq.s32.totalorder %s17, 1
      %p98 = scmp.ne.s32.totalorder %s93, %s95
      %p99 = scmp.eq.s32.totalorder %s17, 0
      %p100 = por %p98, %p99
      %p101 = scmp.ne.s32.totalorder %s93, %s95
      %p102 = scmp.eq.s32.totalorder %s22, 1
      %p103 = por %p101, %p102
      %p104 = scmp.ne.s32.totalorder %s95, %s96
      %p105 = scmp.eq.s32.totalorder %s22, 0
      %p106 = por %p104, %p105
      %p107 = scmp.ne.s32.totalorder %s95, %s96
      %p108 = scmp.eq.s32.totalorder %s23, 1
      %p109 = por %p107, %p108
      %p111 = scmp.ne.s32.totalorder %s96, %s110
      %p112 = scmp.eq.s32.totalorder %s23, 0
      %p113 = por %p111, %p112
      %s114 = ssub.s32 %s17, %s24
      %p115 = scmp.eq.s32.totalorder %s114, 0
      %s117 = sadd.s32 %s116, 1
      %s118 = scalar_select %p115, %s116, %s117
      %p121 = pneg %p115
      %p122 = scmp.eq.s32.totalorder %s17, 1
      %p123 = por %p121, %p122
      %p124 = scmp.ne.s32.totalorder %s116, %s119
      %p125 = scmp.eq.s32.totalorder %s17, 0
      %p126 = por %p124, %p125
      %p127 = scmp.ne.s32.totalorder %s116, %s119
      %p128 = scmp.eq.s32.totalorder %s22, 1
      %p129 = por %p127, %p128
      %p130 = scmp.ne.s32.totalorder %s119, %s120
      %p131 = scmp.eq.s32.totalorder %s22, 0
      %p132 = por %p130, %p131
      %p133 = scmp.ne.s32.totalorder %s119, %s120
      %p134 = scmp.eq.s32.totalorder %s23, 1
      %p135 = por %p133, %p134
      %p137 = scmp.ne.s32.totalorder %s120, %s136
      %p138 = scmp.eq.s32.totalorder %s23, 0
      %p139 = por %p137, %p138
      %p140 = scmp.le.s32.totalorder 1, %s17
      %p141 = scmp.lt.s32.totalorder %s17, 3
      %p142 = pnand %p140, %p141
      %p143 = pneg %p142
      // Predicated region
      $region9: #{tpu_custom_call.1} parent=5 // pred_check
        _
      $region10: #{tpu_custom_call.1} parent=5 // pred_check_branch
        %145 = sbr.rel (%p142) target = $region12
      $region11: #{tpu_custom_call.1} parent=5 // pred_region
        %s146 = ssub.s32 %s17, 1
        // Predicated region
        $region13: #{tpu_custom_call.1} parent=11 // pred_check
          %p147 = pneg %p64
        $region14: #{tpu_custom_call.1} parent=11 // pred_check_branch
          %149 = sbr.rel (%p147) target = $region16
        $region15: #{tpu_custom_call.1} parent=11 // pred_region
          _
        $region16: #{tpu_custom_call.1} parent=11 // pred_fallthru
          _
        // Predicated region
        $region17: #{tpu_custom_call.1} parent=11 // pred_check
          %p150 = pneg %p85
        $region18: #{tpu_custom_call.1} parent=11 // pred_check_branch
          %152 = sbr.rel (%p150) target = $region20
        $region19: #{tpu_custom_call.1} parent=11 // pred_region
          %s154 = ssub.s32 3072, 3072
          %155 = vsyncadd [#allocation7], %s154
          %s156 = sshll.u32 [#allocation6], 4
          %s157 = int_to_ptr.vmem [resolvable:$true] %s156
          %162 = dma.hbm_to_vmem [thread:$0]  %s2, 3072, %s157, [#allocation7], 64, 64, 4
        $region20: #{tpu_custom_call.1} parent=11 // pred_fallthru
          _
        // Predicated region
        $region21: #{tpu_custom_call.1} parent=11 // pred_check
          %p163 = pneg %p106
        $region22: #{tpu_custom_call.1} parent=11 // pred_check_branch
          %165 = sbr.rel (%p163) target = $region24
        $region23: #{tpu_custom_call.1} parent=11 // pred_region
          _
        $region24: #{tpu_custom_call.1} parent=11 // pred_fallthru
          _
      $region12: #{tpu_custom_call.1} parent=5 // pred_fallthru
        _
      %p166 = scmp.lt.s32.totalorder %s17, 2
      // Predicated region
      $region25: #{tpu_custom_call.1} parent=5 // pred_check
        %p167 = pneg %p166
      $region26: #{tpu_custom_call.1} parent=5 // pred_check_branch
        %169 = sbr.rel (%p167) target = $region28
      $region27: #{tpu_custom_call.1} parent=5 // pred_region
        // Predicated region
        $region29: #{tpu_custom_call.1} parent=27 // pred_check
          %p170 = pneg %p37
        $region30: #{tpu_custom_call.1} parent=27 // pred_check_branch
          %172 = sbr.rel (%p170) target = $region32
        $region31: #{tpu_custom_call.1} parent=27 // pred_region
          %s173 = sand.u32 %s27, 1
          %s174 = scalar_lea.sflag [#allocation4], %s173
          %s175 = sand.u32 %s27, 1
          %s176 = smul.addr %s175, 256
          %s177 = scalar_lea.vmem [#allocation3], %s176
          %s179 = ssub.s32 4096, 4096
          %180 = vsyncadd %s174, %s179
          %s181 = smul.addr %s17, 32
          %s182 = smul.addr %s181, 128
          %s183 = scalar_lea.hbm %s0, %s182
          %s184 = sshll.u32 %s177, 4
          %s185 = int_to_ptr.vmem [resolvable:$true] %s184
          %190 = dma.hbm_to_vmem [thread:$0]  %s183, 4096, %s185, %s174, 128, 128, 8
        $region32: #{tpu_custom_call.1} parent=27 // pred_fallthru
          _
      $region28: #{tpu_custom_call.1} parent=5 // pred_fallthru
        _
      %p191 = scmp.le.s32.totalorder 1, %s17
      %p192 = scmp.lt.s32.totalorder %s17, 3
      %p193 = pnand %p191, %p192
      %p194 = pneg %p193
      // Predicated region
      $region33: #{tpu_custom_call.1} parent=5 // pred_check
        _
      $region34: #{tpu_custom_call.1} parent=5 // pred_check_branch
        %196 = sbr.rel (%p193) target = $region36
      $region35: #{tpu_custom_call.1} parent=5 // pred_region
        %s197 = ssub.s32 %s17, 1
        %s198 = sand.u32 %s30, 1
        %s199 = scalar_lea.sflag [#allocation4], %s198
        %s200 = sand.u32 %s30, 1
        %s201 = smul.addr %s200, 256
        %s202 = scalar_lea.vmem [#allocation3], %s201
        // Predicated region
        $region37: #{tpu_custom_call.1} parent=35 // pred_check
          %p203 = pneg %p43
        $region38: #{tpu_custom_call.1} parent=35 // pred_check_branch
          %205 = sbr.rel (%p203) target = $region40
        $region39: #{tpu_custom_call.1} parent=35 // pred_region
          %206 = dma.done %s199, 4096
        $region40: #{tpu_custom_call.1} parent=35 // pred_fallthru
          _
        // Predicated region
        $region41: #{tpu_custom_call.1} parent=35 // pred_check
          %p207 = pneg %p85
        $region42: #{tpu_custom_call.1} parent=35 // pred_check_branch
          %209 = sbr.rel (%p207) target = $region44
        $region43: #{tpu_custom_call.1} parent=35 // pred_region
          %210 = dma.done [#allocation7], 3072
        $region44: #{tpu_custom_call.1} parent=35 // pred_fallthru
          _
        %s211 = sand.u32 %s30, 1
        %s212 = scalar_lea.sflag [#allocation4], %s211
        %s213 = sand.u32 %s30, 1
        %s214 = smul.addr %s213, 256
        %s215 = scalar_lea.vmem [#allocation3], %s214
        %p216 = pneg %p43
        %p217 = pneg %p40
        %p218 = pneg %p64
        %p219 = pneg %p61
        %p220 = pneg %p85
        %p221 = pneg %p82
        %p222 = pneg %p106
        %p223 = pneg %p103
        %p224 = pneg %p132
        %p225 = pneg %p129
        %s226 = sand.u32 %s119, 1
        %s227 = scalar_lea.sflag [#allocation5], %s226
        %s228 = sand.u32 %s119, 1
        %s229 = smul.addr %s228, 256
        %s230 = scalar_lea.vmem [#allocation8], %s229
        %232 = vst [vmem:[#allocation2] sm:$0xff] 0.0
        %233 = vst [vmem:[#allocation2 + $0x8] sm:$0xff] 0.0
        %234 = vst [vmem:[#allocation2 + $0x10] sm:$0x3] 0.0
        %235 = vst [vmem:[#allocation2 + $0x18] sm:$0xff] 0.0
        %236 = vst [vmem:[#allocation2 + $0x20] sm:$0xff] 0.0
        %237 = vst [vmem:[#allocation2 + $0x28] sm:$0x3] 0.0
        %238 = vst [vmem:[#allocation2 + $0x30] sm:$0xff] 0.0
        %239 = vst [vmem:[#allocation2 + $0x38] sm:$0xff] 0.0
        %240 = vst [vmem:[#allocation2 + $0x40] sm:$0x3] 0.0
        %241 = vst [vmem:[#allocation2 + $0x48] sm:$0xff] 0.0
        %242 = vst [vmem:[#allocation2 + $0x50] sm:$0xff] 0.0
        %243 = vst [vmem:[#allocation2 + $0x58] sm:$0x3] 0.0
        %244 = vst [vmem:[#allocation2 + $0x60] sm:$0xff] 0.0
        %245 = vst [vmem:[#allocation2 + $0x68] sm:$0xff] 0.0
        %246 = vst [vmem:[#allocation2 + $0x70] sm:$0x3] 0.0
        %247 = vst [vmem:[#allocation2 + $0x78] sm:$0xff] 0.0
        %248 = vst [vmem:[#allocation2 + $0x80] sm:$0xff] 0.0
        %249 = vst [vmem:[#allocation2 + $0x88] sm:$0x3] 0.0
        %250 = vst [vmem:[#allocation2 + $0x90] sm:$0xff] 0.0
        %251 = vst [vmem:[#allocation2 + $0x98] sm:$0xff] 0.0
        %252 = vst [vmem:[#allocation2 + $0xa0] sm:$0x3] 0.0
        %253 = vst [vmem:[#allocation2 + $0xa8] sm:$0xff] 0.0
        %254 = vst [vmem:[#allocation2 + $0xb0] sm:$0xff] 0.0
        %255 = vst [vmem:[#allocation2 + $0xb8] sm:$0x3] 0.0
        %256 = vst [vmem:[#allocation2 + $0xc0] sm:$0xff] 0.0
        %257 = vst [vmem:[#allocation2 + $0xc8] sm:$0xff] 0.0
        %258 = vst [vmem:[#allocation2 + $0xd0] sm:$0x3] 0.0
        %259 = vst [vmem:[#allocation2 + $0xd8] sm:$0xff] 0.0
        %260 = vst [vmem:[#allocation2 + $0xe0] sm:$0xff] 0.0
        %261 = vst [vmem:[#allocation2 + $0xe8] sm:$0x3] 0.0
        %262 = vst [vmem:[#allocation2 + $0xf0] sm:$0xff] 0.0
        %263 = vst [vmem:[#allocation2 + $0xf8] sm:$0xff] 0.0
        %264 = vst [vmem:[#allocation2 + $0x100] sm:$0x3] 0.0
        %265 = vst [vmem:[#allocation2 + $0x108] sm:$0xff] 0.0
        %266 = vst [vmem:[#allocation2 + $0x110] sm:$0xff] 0.0
        %267 = vst [vmem:[#allocation2 + $0x118] sm:$0x3] 0.0
        %268 = vst [vmem:[#allocation2 + $0x120] sm:$0xff] 0.0
        %269 = vst [vmem:[#allocation2 + $0x128] sm:$0xff] 0.0
        %270 = vst [vmem:[#allocation2 + $0x130] sm:$0x3] 0.0
        %271 = vst [vmem:[#allocation2 + $0x138] sm:$0xff] 0.0
        %272 = vst [vmem:[#allocation2 + $0x140] sm:$0xff] 0.0
        %273 = vst [vmem:[#allocation2 + $0x148] sm:$0x3] 0.0
        %274 = vst [vmem:[#allocation2 + $0x150] sm:$0xff] 0.0
        %275 = vst [vmem:[#allocation2 + $0x158] sm:$0xff] 0.0
        %276 = vst [vmem:[#allocation2 + $0x160] sm:$0x3] 0.0
        %277 = vst [vmem:[#allocation2 + $0x168] sm:$0xff] 0.0
        %278 = vst [vmem:[#allocation2 + $0x170] sm:$0xff] 0.0
        %279 = vst [vmem:[#allocation2 + $0x178] sm:$0x3] 0.0
        %280 = vst [vmem:[#allocation2 + $0x180] sm:$0xff] 0.0
        %281 = vst [vmem:[#allocation2 + $0x188] sm:$0xff] 0.0
        %282 = vst [vmem:[#allocation2 + $0x190] sm:$0x3] 0.0
        %283 = vst [vmem:[#allocation2 + $0x198] sm:$0xff] 0.0
        %284 = vst [vmem:[#allocation2 + $0x1a0] sm:$0xff] 0.0
        %285 = vst [vmem:[#allocation2 + $0x1a8] sm:$0x3] 0.0
        %v286 = vld [vmem:[%s202] sm:$0xff]
        %v287 = vld [vmem:[%s202 + $0x8] sm:$0xff]
        %v288 = vld [vmem:[%s202 + $0x10] sm:$0xff]
        %v289 = vld [vmem:[%s202 + $0x18] sm:$0xff]
        %v290 = vld [vmem:[%s202 + $0x20] sm:$0xff]
        %v291 = vld [vmem:[%s202 + $0x28] sm:$0xff]
        %v292 = vld [vmem:[%s202 + $0x30] sm:$0xff]
        %v293 = vld [vmem:[%s202 + $0x38] sm:$0xff]
        %v294 = vld [vmem:[%s202 + $0x40] sm:$0xff]
        %v295 = vld [vmem:[%s202 + $0x48] sm:$0xff]
        %v296 = vld [vmem:[%s202 + $0x50] sm:$0xff]
        %v297 = vld [vmem:[%s202 + $0x58] sm:$0xff]
        %v298 = vld [vmem:[%s202 + $0x60] sm:$0xff]
        %v299 = vld [vmem:[%s202 + $0x68] sm:$0xff]
        %v300 = vld [vmem:[%s202 + $0x70] sm:$0xff]
        %v301 = vld [vmem:[%s202 + $0x78] sm:$0xff]
        %v302 = vld [vmem:[%s202 + $0x80] sm:$0xff]
        %v303 = vld [vmem:[%s202 + $0x88] sm:$0xff]
        %v304 = vld [vmem:[%s202 + $0x90] sm:$0xff]
        %v305 = vld [vmem:[%s202 + $0x98] sm:$0xff]
        %v306 = vld [vmem:[%s202 + $0xa0] sm:$0xff]
        %v307 = vld [vmem:[%s202 + $0xa8] sm:$0xff]
        %v308 = vld [vmem:[%s202 + $0xb0] sm:$0xff]
        %v309 = vld [vmem:[%s202 + $0xb8] sm:$0xff]
        %v310 = vld [vmem:[%s202 + $0xc0] sm:$0xff]
        %v311 = vld [vmem:[%s202 + $0xc8] sm:$0xff]
        %v312 = vld [vmem:[%s202 + $0xd0] sm:$0xff]
        %v313 = vld [vmem:[%s202 + $0xd8] sm:$0xff]
        %v314 = vld [vmem:[%s202 + $0xe0] sm:$0xff]
        %v315 = vld [vmem:[%s202 + $0xe8] sm:$0xff]
        %v316 = vld [vmem:[%s202 + $0xf0] sm:$0xff]
        %v317 = vld [vmem:[%s202 + $0xf8] sm:$0xff]
        %v318 = vmax.f32 %v286, 0.0
        %v319 = vmax.f32 %v287, 0.0
        %v320 = vmax.f32 %v288, 0.0
        %v321 = vmax.f32 %v289, 0.0
        %v322 = vmax.f32 %v290, 0.0
        %v323 = vmax.f32 %v291, 0.0
        %v324 = vmax.f32 %v292, 0.0
        %v325 = vmax.f32 %v293, 0.0
        %v326 = vmax.f32 %v294, 0.0
        %v327 = vmax.f32 %v295, 0.0
        %v328 = vmax.f32 %v296, 0.0
        %v329 = vmax.f32 %v297, 0.0
        %v330 = vmax.f32 %v298, 0.0
        %v331 = vmax.f32 %v299, 0.0
        %v332 = vmax.f32 %v300, 0.0
        %v333 = vmax.f32 %v301, 0.0
        %v334 = vmax.f32 %v302, 0.0
        %v335 = vmax.f32 %v303, 0.0
        %v336 = vmax.f32 %v304, 0.0
        %v337 = vmax.f32 %v305, 0.0
        %v338 = vmax.f32 %v306, 0.0
        %v339 = vmax.f32 %v307, 0.0
        %v340 = vmax.f32 %v308, 0.0
        %v341 = vmax.f32 %v309, 0.0
        %v342 = vmax.f32 %v310, 0.0
        %v343 = vmax.f32 %v311, 0.0
        %v344 = vmax.f32 %v312, 0.0
        %v345 = vmax.f32 %v313, 0.0
        %v346 = vmax.f32 %v314, 0.0
        %v347 = vmax.f32 %v315, 0.0
        %v348 = vmax.f32 %v316, 0.0
        %v349 = vmax.f32 %v317, 0.0
        %s350 = scalar_lea.vmem [#allocation2], 24
        %351 = vst [vmem:[%s350 + $0x1] sm:$0xff] %v318
        %352 = vst [vmem:[%s350 + $0x9] sm:$0xff] %v319
        %353 = vst [vmem:[%s350 + $0x19] sm:$0xff] %v320
        %354 = vst [vmem:[%s350 + $0x21] sm:$0xff] %v321
        %355 = vst [vmem:[%s350 + $0x31] sm:$0xff] %v322
        %356 = vst [vmem:[%s350 + $0x39] sm:$0xff] %v323
        %357 = vst [vmem:[%s350 + $0x49] sm:$0xff] %v324
        %358 = vst [vmem:[%s350 + $0x51] sm:$0xff] %v325
        %359 = vst [vmem:[%s350 + $0x61] sm:$0xff] %v326
        %360 = vst [vmem:[%s350 + $0x69] sm:$0xff] %v327
        %361 = vst [vmem:[%s350 + $0x79] sm:$0xff] %v328
        %362 = vst [vmem:[%s350 + $0x81] sm:$0xff] %v329
        %363 = vst [vmem:[%s350 + $0x91] sm:$0xff] %v330
        %364 = vst [vmem:[%s350 + $0x99] sm:$0xff] %v331
        %365 = vst [vmem:[%s350 + $0xa9] sm:$0xff] %v332
        %366 = vst [vmem:[%s350 + $0xb1] sm:$0xff] %v333
        %367 = vst [vmem:[%s350 + $0xc1] sm:$0xff] %v334
        %368 = vst [vmem:[%s350 + $0xc9] sm:$0xff] %v335
        %369 = vst [vmem:[%s350 + $0xd9] sm:$0xff] %v336
        %370 = vst [vmem:[%s350 + $0xe1] sm:$0xff] %v337
        %371 = vst [vmem:[%s350 + $0xf1] sm:$0xff] %v338
        %372 = vst [vmem:[%s350 + $0xf9] sm:$0xff] %v339
        %373 = vst [vmem:[%s350 + $0x109] sm:$0xff] %v340
        %374 = vst [vmem:[%s350 + $0x111] sm:$0xff] %v341
        %375 = vst [vmem:[%s350 + $0x121] sm:$0xff] %v342
        %376 = vst [vmem:[%s350 + $0x129] sm:$0xff] %v343
        %377 = vst [vmem:[%s350 + $0x139] sm:$0xff] %v344
        %378 = vst [vmem:[%s350 + $0x141] sm:$0xff] %v345
        %379 = vst [vmem:[%s350 + $0x151] sm:$0xff] %v346
        %380 = vst [vmem:[%s350 + $0x159] sm:$0xff] %v347
        %381 = vst [vmem:[%s350 + $0x169] sm:$0xff] %v348
        %382 = vst [vmem:[%s350 + $0x171] sm:$0xff] %v349
        %v383 = vld [vmem:[#allocation2] sm:$0xff]
        %v384 = vld [vmem:[#allocation2 + $0x8] sm:$0xff]
        %v385 = vld [vmem:[#allocation2 + $0x18] sm:$0xff]
        %v386 = vld [vmem:[#allocation2 + $0x20] sm:$0xff]
        %v387 = vld [vmem:[#allocation2 + $0x30] sm:$0xff]
        %v388 = vld [vmem:[#allocation2 + $0x38] sm:$0xff]
        %v389 = vld [vmem:[#allocation2 + $0x48] sm:$0xff]
        %v390 = vld [vmem:[#allocation2 + $0x50] sm:$0xff]
        %v391 = vld [vmem:[#allocation2 + $0x60] sm:$0xff]
        %v392 = vld [vmem:[#allocation2 + $0x68] sm:$0xff]
        %v393 = vld [vmem:[#allocation2 + $0x78] sm:$0xff]
        %v394 = vld [vmem:[#allocation2 + $0x80] sm:$0xff]
        %v395 = vld [vmem:[#allocation2 + $0x90] sm:$0xff]
        %v396 = vld [vmem:[#allocation2 + $0x98] sm:$0xff]
        %v397 = vld [vmem:[#allocation2 + $0xa8] sm:$0xff]
        %v398 = vld [vmem:[#allocation2 + $0xb0] sm:$0xff]
        %v399 = vld [vmem:[#allocation2 + $0xc0] sm:$0xff]
        %v400 = vld [vmem:[#allocation2 + $0xc8] sm:$0xff]
        %v401 = vld [vmem:[#allocation2 + $0xd8] sm:$0xff]
        %v402 = vld [vmem:[#allocation2 + $0xe0] sm:$0xff]
        %v403 = vld [vmem:[#allocation2 + $0xf0] sm:$0xff]
        %v404 = vld [vmem:[#allocation2 + $0xf8] sm:$0xff]
        %v405 = vld [vmem:[#allocation2 + $0x108] sm:$0xff]
        %v406 = vld [vmem:[#allocation2 + $0x110] sm:$0xff]
        %v407 = vld [vmem:[#allocation2 + $0x120] sm:$0xff]
        %v408 = vld [vmem:[#allocation2 + $0x128] sm:$0xff]
        %v409 = vld [vmem:[#allocation2 + $0x138] sm:$0xff]
        %v410 = vld [vmem:[#allocation2 + $0x140] sm:$0xff]
        %v411 = vld [vmem:[#allocation2 + $0x150] sm:$0xff]
        %v412 = vld [vmem:[#allocation2 + $0x158] sm:$0xff]
        %v413 = vld [vmem:[#allocation2 + $0x168] sm:$0xff]
        %v414 = vld [vmem:[#allocation2 + $0x170] sm:$0xff]
        %v415 = vld [vmem:[%s1] sm:$0x1]
        %v416 = vlaneseq
        %v417 = vshrl.u32 %v416, 7
        %v418 = vsub.s32 0, %v417
        %v419 = vrot.slane %v415, %v418
        %v420 = vmul.f32 %v383, %v419
        %v421 = vmul.f32 %v384, %v419
        %v422 = vmul.f32 %v385, %v419
        %v423 = vmul.f32 %v386, %v419
        %v424 = vmul.f32 %v387, %v419
        %v425 = vmul.f32 %v388, %v419
        %v426 = vmul.f32 %v389, %v419
        %v427 = vmul.f32 %v390, %v419
        %v428 = vmul.f32 %v391, %v419
        %v429 = vmul.f32 %v392, %v419
        %v430 = vmul.f32 %v393, %v419
        %v431 = vmul.f32 %v394, %v419
        %v432 = vmul.f32 %v395, %v419
        %v433 = vmul.f32 %v396, %v419
        %v434 = vmul.f32 %v397, %v419
        %v435 = vmul.f32 %v398, %v419
        %v436 = vmul.f32 %v399, %v419
        %v437 = vmul.f32 %v400, %v419
        %v438 = vmul.f32 %v401, %v419
        %v439 = vmul.f32 %v402, %v419
        %v440 = vmul.f32 %v403, %v419
        %v441 = vmul.f32 %v404, %v419
        %v442 = vmul.f32 %v405, %v419
        %v443 = vmul.f32 %v406, %v419
        %v444 = vmul.f32 %v407, %v419
        %v445 = vmul.f32 %v408, %v419
        %v446 = vmul.f32 %v409, %v419
        %v447 = vmul.f32 %v410, %v419
        %v448 = vmul.f32 %v411, %v419
        %v449 = vmul.f32 %v412, %v419
        %v450 = vmul.f32 %v413, %v419
        %v451 = vmul.f32 %v414, %v419
        %v452 = vld [vmem:[#allocation2 + $0x1] sm:$0xff]
        %v453 = vld [vmem:[#allocation2 + $0x9] sm:$0xff]
        %v454 = vld [vmem:[#allocation2 + $0x19] sm:$0xff]
        %v455 = vld [vmem:[#allocation2 + $0x21] sm:$0xff]
        %v456 = vld [vmem:[#allocation2 + $0x31] sm:$0xff]
        %v457 = vld [vmem:[#allocation2 + $0x39] sm:$0xff]
        %v458 = vld [vmem:[#allocation2 + $0x49] sm:$0xff]
        %v459 = vld [vmem:[#allocation2 + $0x51] sm:$0xff]
        %v460 = vld [vmem:[#allocation2 + $0x61] sm:$0xff]
        %v461 = vld [vmem:[#allocation2 + $0x69] sm:$0xff]
        %v462 = vld [vmem:[#allocation2 + $0x79] sm:$0xff]
        %v463 = vld [vmem:[#allocation2 + $0x81] sm:$0xff]
        %v464 = vld [vmem:[#allocation2 + $0x91] sm:$0xff]
        %v465 = vld [vmem:[#allocation2 + $0x99] sm:$0xff]
        %v466 = vld [vmem:[#allocation2 + $0xa9] sm:$0xff]
        %v467 = vld [vmem:[#allocation2 + $0xb1] sm:$0xff]
        %v468 = vld [vmem:[#allocation2 + $0xc1] sm:$0xff]
        %v469 = vld [vmem:[#allocation2 + $0xc9] sm:$0xff]
        %v470 = vld [vmem:[#allocation2 + $0xd9] sm:$0xff]
        %v471 = vld [vmem:[#allocation2 + $0xe1] sm:$0xff]
        %v472 = vld [vmem:[#allocation2 + $0xf1] sm:$0xff]
        %v473 = vld [vmem:[#allocation2 + $0xf9] sm:$0xff]
        %v474 = vld [vmem:[#allocation2 + $0x109] sm:$0xff]
        %v475 = vld [vmem:[#allocation2 + $0x111] sm:$0xff]
        %v476 = vld [vmem:[#allocation2 + $0x121] sm:$0xff]
        %v477 = vld [vmem:[#allocation2 + $0x129] sm:$0xff]
        %v478 = vld [vmem:[#allocation2 + $0x139] sm:$0xff]
        %v479 = vld [vmem:[#allocation2 + $0x141] sm:$0xff]
        %v480 = vld [vmem:[#allocation2 + $0x151] sm:$0xff]
        %v481 = vld [vmem:[#allocation2 + $0x159] sm:$0xff]
        %v482 = vld [vmem:[#allocation2 + $0x169] sm:$0xff]
        %v483 = vld [vmem:[#allocation2 + $0x171] sm:$0xff]
        %v484 = vld [vmem:[%s1 + $0x1] sm:$0x1]
        %v485 = vlaneseq
        %v486 = vshrl.u32 %v485, 7
        %v487 = vsub.s32 0, %v486
        %v488 = vrot.slane %v484, %v487
        %v489 = vmul.f32 %v452, %v488
        %v490 = vmul.f32 %v453, %v488
        %v491 = vmul.f32 %v454, %v488
        %v492 = vmul.f32 %v455, %v488
        %v493 = vmul.f32 %v456, %v488
        %v494 = vmul.f32 %v457, %v488
        %v495 = vmul.f32 %v458, %v488
        %v496 = vmul.f32 %v459, %v488
        %v497 = vmul.f32 %v460, %v488
        %v498 = vmul.f32 %v461, %v488
        %v499 = vmul.f32 %v462, %v488
        %v500 = vmul.f32 %v463, %v488
        %v501 = vmul.f32 %v464, %v488
        %v502 = vmul.f32 %v465, %v488
        %v503 = vmul.f32 %v466, %v488
        %v504 = vmul.f32 %v467, %v488
        %v505 = vmul.f32 %v468, %v488
        %v506 = vmul.f32 %v469, %v488
        %v507 = vmul.f32 %v470, %v488
        %v508 = vmul.f32 %v471, %v488
        %v509 = vmul.f32 %v472, %v488
        %v510 = vmul.f32 %v473, %v488
        %v511 = vmul.f32 %v474, %v488
        %v512 = vmul.f32 %v475, %v488
        %v513 = vmul.f32 %v476, %v488
        %v514 = vmul.f32 %v477, %v488
        %v515 = vmul.f32 %v478, %v488
        %v516 = vmul.f32 %v479, %v488
        %v517 = vmul.f32 %v480, %v488
        %v518 = vmul.f32 %v481, %v488
        %v519 = vmul.f32 %v482, %v488
        %v520 = vmul.f32 %v483, %v488
        %v521 = vadd.f32 %v420, %v489
        %v522 = vadd.f32 %v421, %v490
        %v523 = vadd.f32 %v422, %v491
        %v524 = vadd.f32 %v423, %v492
        %v525 = vadd.f32 %v424, %v493
        %v526 = vadd.f32 %v425, %v494
        %v527 = vadd.f32 %v426, %v495
        %v528 = vadd.f32 %v427, %v496
        %v529 = vadd.f32 %v428, %v497
        %v530 = vadd.f32 %v429, %v498
        %v531 = vadd.f32 %v430, %v499
        %v532 = vadd.f32 %v431, %v500
        %v533 = vadd.f32 %v432, %v501
        %v534 = vadd.f32 %v433, %v502
        %v535 = vadd.f32 %v434, %v503
        %v536 = vadd.f32 %v435, %v504
        %v537 = vadd.f32 %v436, %v505
        %v538 = vadd.f32 %v437, %v506
        %v539 = vadd.f32 %v438, %v507
        %v540 = vadd.f32 %v439, %v508
        %v541 = vadd.f32 %v440, %v509
        %v542 = vadd.f32 %v441, %v510
        %v543 = vadd.f32 %v442, %v511
        %v544 = vadd.f32 %v443, %v512
        %v545 = vadd.f32 %v444, %v513
        %v546 = vadd.f32 %v445, %v514
        %v547 = vadd.f32 %v446, %v515
        %v548 = vadd.f32 %v447, %v516
        %v549 = vadd.f32 %v448, %v517
        %v550 = vadd.f32 %v449, %v518
        %v551 = vadd.f32 %v450, %v519
        %v552 = vadd.f32 %v451, %v520
        %v553 = vld [vmem:[#allocation2 + $0x2] sm:$0xff]
        %v554 = vld [vmem:[#allocation2 + $0xa] sm:$0xff]
        %v555 = vld [vmem:[#allocation2 + $0x1a] sm:$0xff]
        %v556 = vld [vmem:[#allocation2 + $0x22] sm:$0xff]
        %v557 = vld [vmem:[#allocation2 + $0x32] sm:$0xff]
        %v558 = vld [vmem:[#allocation2 + $0x3a] sm:$0xff]
        %v559 = vld [vmem:[#allocation2 + $0x4a] sm:$0xff]
        %v560 = vld [vmem:[#allocation2 + $0x52] sm:$0xff]
        %v561 = vld [vmem:[#allocation2 + $0x62] sm:$0xff]
        %v562 = vld [vmem:[#allocation2 + $0x6a] sm:$0xff]
        %v563 = vld [vmem:[#allocation2 + $0x7a] sm:$0xff]
        %v564 = vld [vmem:[#allocation2 + $0x82] sm:$0xff]
        %v565 = vld [vmem:[#allocation2 + $0x92] sm:$0xff]
        %v566 = vld [vmem:[#allocation2 + $0x9a] sm:$0xff]
        %v567 = vld [vmem:[#allocation2 + $0xaa] sm:$0xff]
        %v568 = vld [vmem:[#allocation2 + $0xb2] sm:$0xff]
        %v569 = vld [vmem:[#allocation2 + $0xc2] sm:$0xff]
        %v570 = vld [vmem:[#allocation2 + $0xca] sm:$0xff]
        %v571 = vld [vmem:[#allocation2 + $0xda] sm:$0xff]
        %v572 = vld [vmem:[#allocation2 + $0xe2] sm:$0xff]
        %v573 = vld [vmem:[#allocation2 + $0xf2] sm:$0xff]
        %v574 = vld [vmem:[#allocation2 + $0xfa] sm:$0xff]
        %v575 = vld [vmem:[#allocation2 + $0x10a] sm:$0xff]
        %v576 = vld [vmem:[#allocation2 + $0x112] sm:$0xff]
        %v577 = vld [vmem:[#allocation2 + $0x122] sm:$0xff]
        %v578 = vld [vmem:[#allocation2 + $0x12a] sm:$0xff]
        %v579 = vld [vmem:[#allocation2 + $0x13a] sm:$0xff]
        %v580 = vld [vmem:[#allocation2 + $0x142] sm:$0xff]
        %v581 = vld [vmem:[#allocation2 + $0x152] sm:$0xff]
        %v582 = vld [vmem:[#allocation2 + $0x15a] sm:$0xff]
        %v583 = vld [vmem:[#allocation2 + $0x16a] sm:$0xff]
        %v584 = vld [vmem:[#allocation2 + $0x172] sm:$0xff]
        %v585 = vld [vmem:[%s1 + $0x2] sm:$0x1]
        %v586 = vlaneseq
        %v587 = vshrl.u32 %v586, 7
        %v588 = vsub.s32 0, %v587
        %v589 = vrot.slane %v585, %v588
        %v590 = vmul.f32 %v553, %v589
        %v591 = vmul.f32 %v554, %v589
        %v592 = vmul.f32 %v555, %v589
        %v593 = vmul.f32 %v556, %v589
        %v594 = vmul.f32 %v557, %v589
        %v595 = vmul.f32 %v558, %v589
        %v596 = vmul.f32 %v559, %v589
        %v597 = vmul.f32 %v560, %v589
        %v598 = vmul.f32 %v561, %v589
        %v599 = vmul.f32 %v562, %v589
        %v600 = vmul.f32 %v563, %v589
        %v601 = vmul.f32 %v564, %v589
        %v602 = vmul.f32 %v565, %v589
        %v603 = vmul.f32 %v566, %v589
        %v604 = vmul.f32 %v567, %v589
        %v605 = vmul.f32 %v568, %v589
        %v606 = vmul.f32 %v569, %v589
        %v607 = vmul.f32 %v570, %v589
        %v608 = vmul.f32 %v571, %v589
        %v609 = vmul.f32 %v572, %v589
        %v610 = vmul.f32 %v573, %v589
        %v611 = vmul.f32 %v574, %v589
        %v612 = vmul.f32 %v575, %v589
        %v613 = vmul.f32 %v576, %v589
        %v614 = vmul.f32 %v577, %v589
        %v615 = vmul.f32 %v578, %v589
        %v616 = vmul.f32 %v579, %v589
        %v617 = vmul.f32 %v580, %v589
        %v618 = vmul.f32 %v581, %v589
        %v619 = vmul.f32 %v582, %v589
        %v620 = vmul.f32 %v583, %v589
        %v621 = vmul.f32 %v584, %v589
        %v622 = vadd.f32 %v521, %v590
        %v623 = vadd.f32 %v522, %v591
        %v624 = vadd.f32 %v523, %v592
        %v625 = vadd.f32 %v524, %v593
        %v626 = vadd.f32 %v525, %v594
        %v627 = vadd.f32 %v526, %v595
        %v628 = vadd.f32 %v527, %v596
        %v629 = vadd.f32 %v528, %v597
        %v630 = vadd.f32 %v529, %v598
        %v631 = vadd.f32 %v530, %v599
        %v632 = vadd.f32 %v531, %v600
        %v633 = vadd.f32 %v532, %v601
        %v634 = vadd.f32 %v533, %v602
        %v635 = vadd.f32 %v534, %v603
        %v636 = vadd.f32 %v535, %v604
        %v637 = vadd.f32 %v536, %v605
        %v638 = vadd.f32 %v537, %v606
        %v639 = vadd.f32 %v538, %v607
        %v640 = vadd.f32 %v539, %v608
        %v641 = vadd.f32 %v540, %v609
        %v642 = vadd.f32 %v541, %v610
        %v643 = vadd.f32 %v542, %v611
        %v644 = vadd.f32 %v543, %v612
        %v645 = vadd.f32 %v544, %v613
        %v646 = vadd.f32 %v545, %v614
        %v647 = vadd.f32 %v546, %v615
        %v648 = vadd.f32 %v547, %v616
        %v649 = vadd.f32 %v548, %v617
        %v650 = vadd.f32 %v549, %v618
        %v651 = vadd.f32 %v550, %v619
        %v652 = vadd.f32 %v551, %v620
        %v653 = vadd.f32 %v552, %v621
        %v654 = vld [vmem:[%s350] sm:$0xff]
        %v655 = vld [vmem:[%s350 + $0x8] sm:$0xff]
        %v656 = vld [vmem:[%s350 + $0x18] sm:$0xff]
        %v657 = vld [vmem:[%s350 + $0x20] sm:$0xff]
        %v658 = vld [vmem:[%s350 + $0x30] sm:$0xff]
        %v659 = vld [vmem:[%s350 + $0x38] sm:$0xff]
        %v660 = vld [vmem:[%s350 + $0x48] sm:$0xff]
        %v661 = vld [vmem:[%s350 + $0x50] sm:$0xff]
        %v662 = vld [vmem:[%s350 + $0x60] sm:$0xff]
        %v663 = vld [vmem:[%s350 + $0x68] sm:$0xff]
        %v664 = vld [vmem:[%s350 + $0x78] sm:$0xff]
        %v665 = vld [vmem:[%s350 + $0x80] sm:$0xff]
        %v666 = vld [vmem:[%s350 + $0x90] sm:$0xff]
        %v667 = vld [vmem:[%s350 + $0x98] sm:$0xff]
        %v668 = vld [vmem:[%s350 + $0xa8] sm:$0xff]
        %v669 = vld [vmem:[%s350 + $0xb0] sm:$0xff]
        %v670 = vld [vmem:[%s350 + $0xc0] sm:$0xff]
        %v671 = vld [vmem:[%s350 + $0xc8] sm:$0xff]
        %v672 = vld [vmem:[%s350 + $0xd8] sm:$0xff]
        %v673 = vld [vmem:[%s350 + $0xe0] sm:$0xff]
        %v674 = vld [vmem:[%s350 + $0xf0] sm:$0xff]
        %v675 = vld [vmem:[%s350 + $0xf8] sm:$0xff]
        %v676 = vld [vmem:[%s350 + $0x108] sm:$0xff]
        %v677 = vld [vmem:[%s350 + $0x110] sm:$0xff]
        %v678 = vld [vmem:[%s350 + $0x120] sm:$0xff]
        %v679 = vld [vmem:[%s350 + $0x128] sm:$0xff]
        %v680 = vld [vmem:[%s350 + $0x138] sm:$0xff]
        %v681 = vld [vmem:[%s350 + $0x140] sm:$0xff]
        %v682 = vld [vmem:[%s350 + $0x150] sm:$0xff]
        %v683 = vld [vmem:[%s350 + $0x158] sm:$0xff]
        %v684 = vld [vmem:[%s350 + $0x168] sm:$0xff]
        %v685 = vld [vmem:[%s350 + $0x170] sm:$0xff]
        %v686 = vld [vmem:[%s1 + $0x3] sm:$0x1]
        %v687 = vlaneseq
        %v688 = vshrl.u32 %v687, 7
        %v689 = vsub.s32 0, %v688
        %v690 = vrot.slane %v686, %v689
        %v691 = vmul.f32 %v654, %v690
        %v692 = vmul.f32 %v655, %v690
        %v693 = vmul.f32 %v656, %v690
        %v694 = vmul.f32 %v657, %v690
        %v695 = vmul.f32 %v658, %v690
        %v696 = vmul.f32 %v659, %v690
        %v697 = vmul.f32 %v660, %v690
        %v698 = vmul.f32 %v661, %v690
        %v699 = vmul.f32 %v662, %v690
        %v700 = vmul.f32 %v663, %v690
        %v701 = vmul.f32 %v664, %v690
        %v702 = vmul.f32 %v665, %v690
        %v703 = vmul.f32 %v666, %v690
        %v704 = vmul.f32 %v667, %v690
        %v705 = vmul.f32 %v668, %v690
        %v706 = vmul.f32 %v669, %v690
        %v707 = vmul.f32 %v670, %v690
        %v708 = vmul.f32 %v671, %v690
        %v709 = vmul.f32 %v672, %v690
        %v710 = vmul.f32 %v673, %v690
        %v711 = vmul.f32 %v674, %v690
        %v712 = vmul.f32 %v675, %v690
        %v713 = vmul.f32 %v676, %v690
        %v714 = vmul.f32 %v677, %v690
        %v715 = vmul.f32 %v678, %v690
        %v716 = vmul.f32 %v679, %v690
        %v717 = vmul.f32 %v680, %v690
        %v718 = vmul.f32 %v681, %v690
        %v719 = vmul.f32 %v682, %v690
        %v720 = vmul.f32 %v683, %v690
        %v721 = vmul.f32 %v684, %v690
        %v722 = vmul.f32 %v685, %v690
        %v723 = vadd.f32 %v622, %v691
        %v724 = vadd.f32 %v623, %v692
        %v725 = vadd.f32 %v624, %v693
        %v726 = vadd.f32 %v625, %v694
        %v727 = vadd.f32 %v626, %v695
        %v728 = vadd.f32 %v627, %v696
        %v729 = vadd.f32 %v628, %v697
        %v730 = vadd.f32 %v629, %v698
        %v731 = vadd.f32 %v630, %v699
        %v732 = vadd.f32 %v631, %v700
        %v733 = vadd.f32 %v632, %v701
        %v734 = vadd.f32 %v633, %v702
        %v735 = vadd.f32 %v634, %v703
        %v736 = vadd.f32 %v635, %v704
        %v737 = vadd.f32 %v636, %v705
        %v738 = vadd.f32 %v637, %v706
        %v739 = vadd.f32 %v638, %v707
        %v740 = vadd.f32 %v639, %v708
        %v741 = vadd.f32 %v640, %v709
        %v742 = vadd.f32 %v641, %v710
        %v743 = vadd.f32 %v642, %v711
        %v744 = vadd.f32 %v643, %v712
        %v745 = vadd.f32 %v644, %v713
        %v746 = vadd.f32 %v645, %v714
        %v747 = vadd.f32 %v646, %v715
        %v748 = vadd.f32 %v647, %v716
        %v749 = vadd.f32 %v648, %v717
        %v750 = vadd.f32 %v649, %v718
        %v751 = vadd.f32 %v650, %v719
        %v752 = vadd.f32 %v651, %v720
        %v753 = vadd.f32 %v652, %v721
        %v754 = vadd.f32 %v653, %v722
        %v755 = vld [vmem:[%s350 + $0x1] sm:$0xff]
        %v756 = vld [vmem:[%s350 + $0x9] sm:$0xff]
        %v757 = vld [vmem:[%s350 + $0x19] sm:$0xff]
        %v758 = vld [vmem:[%s350 + $0x21] sm:$0xff]
        %v759 = vld [vmem:[%s350 + $0x31] sm:$0xff]
        %v760 = vld [vmem:[%s350 + $0x39] sm:$0xff]
        %v761 = vld [vmem:[%s350 + $0x49] sm:$0xff]
        %v762 = vld [vmem:[%s350 + $0x51] sm:$0xff]
        %v763 = vld [vmem:[%s350 + $0x61] sm:$0xff]
        %v764 = vld [vmem:[%s350 + $0x69] sm:$0xff]
        %v765 = vld [vmem:[%s350 + $0x79] sm:$0xff]
        %v766 = vld [vmem:[%s350 + $0x81] sm:$0xff]
        %v767 = vld [vmem:[%s350 + $0x91] sm:$0xff]
        %v768 = vld [vmem:[%s350 + $0x99] sm:$0xff]
        %v769 = vld [vmem:[%s350 + $0xa9] sm:$0xff]
        %v770 = vld [vmem:[%s350 + $0xb1] sm:$0xff]
        %v771 = vld [vmem:[%s350 + $0xc1] sm:$0xff]
        %v772 = vld [vmem:[%s350 + $0xc9] sm:$0xff]
        %v773 = vld [vmem:[%s350 + $0xd9] sm:$0xff]
        %v774 = vld [vmem:[%s350 + $0xe1] sm:$0xff]
        %v775 = vld [vmem:[%s350 + $0xf1] sm:$0xff]
        %v776 = vld [vmem:[%s350 + $0xf9] sm:$0xff]
        %v777 = vld [vmem:[%s350 + $0x109] sm:$0xff]
        %v778 = vld [vmem:[%s350 + $0x111] sm:$0xff]
        %v779 = vld [vmem:[%s350 + $0x121] sm:$0xff]
        %v780 = vld [vmem:[%s350 + $0x129] sm:$0xff]
        %v781 = vld [vmem:[%s350 + $0x139] sm:$0xff]
        %v782 = vld [vmem:[%s350 + $0x141] sm:$0xff]
        %v783 = vld [vmem:[%s350 + $0x151] sm:$0xff]
        %v784 = vld [vmem:[%s350 + $0x159] sm:$0xff]
        %v785 = vld [vmem:[%s350 + $0x169] sm:$0xff]
        %v786 = vld [vmem:[%s350 + $0x171] sm:$0xff]
        %v787 = vld [vmem:[%s1 + $0x4] sm:$0x1]
        %v788 = vlaneseq
        %v789 = vshrl.u32 %v788, 7
        %v790 = vsub.s32 0, %v789
        %v791 = vrot.slane %v787, %v790
        %v792 = vmul.f32 %v755, %v791
        %v793 = vmul.f32 %v756, %v791
        %v794 = vmul.f32 %v757, %v791
        %v795 = vmul.f32 %v758, %v791
        %v796 = vmul.f32 %v759, %v791
        %v797 = vmul.f32 %v760, %v791
        %v798 = vmul.f32 %v761, %v791
        %v799 = vmul.f32 %v762, %v791
        %v800 = vmul.f32 %v763, %v791
        %v801 = vmul.f32 %v764, %v791
        %v802 = vmul.f32 %v765, %v791
        %v803 = vmul.f32 %v766, %v791
        %v804 = vmul.f32 %v767, %v791
        %v805 = vmul.f32 %v768, %v791
        %v806 = vmul.f32 %v769, %v791
        %v807 = vmul.f32 %v770, %v791
        %v808 = vmul.f32 %v771, %v791
        %v809 = vmul.f32 %v772, %v791
        %v810 = vmul.f32 %v773, %v791
        %v811 = vmul.f32 %v774, %v791
        %v812 = vmul.f32 %v775, %v791
        %v813 = vmul.f32 %v776, %v791
        %v814 = vmul.f32 %v777, %v791
        %v815 = vmul.f32 %v778, %v791
        %v816 = vmul.f32 %v779, %v791
        %v817 = vmul.f32 %v780, %v791
        %v818 = vmul.f32 %v781, %v791
        %v819 = vmul.f32 %v782, %v791
        %v820 = vmul.f32 %v783, %v791
        %v821 = vmul.f32 %v784, %v791
        %v822 = vmul.f32 %v785, %v791
        %v823 = vmul.f32 %v786, %v791
        %v824 = vadd.f32 %v723, %v792
        %v825 = vadd.f32 %v724, %v793
        %v826 = vadd.f32 %v725, %v794
        %v827 = vadd.f32 %v726, %v795
        %v828 = vadd.f32 %v727, %v796
        %v829 = vadd.f32 %v728, %v797
        %v830 = vadd.f32 %v729, %v798
        %v831 = vadd.f32 %v730, %v799
        %v832 = vadd.f32 %v731, %v800
        %v833 = vadd.f32 %v732, %v801
        %v834 = vadd.f32 %v733, %v802
        %v835 = vadd.f32 %v734, %v803
        %v836 = vadd.f32 %v735, %v804
        %v837 = vadd.f32 %v736, %v805
        %v838 = vadd.f32 %v737, %v806
        %v839 = vadd.f32 %v738, %v807
        %v840 = vadd.f32 %v739, %v808
        %v841 = vadd.f32 %v740, %v809
        %v842 = vadd.f32 %v741, %v810
        %v843 = vadd.f32 %v742, %v811
        %v844 = vadd.f32 %v743, %v812
        %v845 = vadd.f32 %v744, %v813
        %v846 = vadd.f32 %v745, %v814
        %v847 = vadd.f32 %v746, %v815
        %v848 = vadd.f32 %v747, %v816
        %v849 = vadd.f32 %v748, %v817
        %v850 = vadd.f32 %v749, %v818
        %v851 = vadd.f32 %v750, %v819
        %v852 = vadd.f32 %v751, %v820
        %v853 = vadd.f32 %v752, %v821
        %v854 = vadd.f32 %v753, %v822
        %v855 = vadd.f32 %v754, %v823
        %v856 = vld [vmem:[%s350 + $0x2] sm:$0xff]
        %v857 = vld [vmem:[%s350 + $0xa] sm:$0xff]
        %v858 = vld [vmem:[%s350 + $0x1a] sm:$0xff]
        %v859 = vld [vmem:[%s350 + $0x22] sm:$0xff]
        %v860 = vld [vmem:[%s350 + $0x32] sm:$0xff]
        %v861 = vld [vmem:[%s350 + $0x3a] sm:$0xff]
        %v862 = vld [vmem:[%s350 + $0x4a] sm:$0xff]
        %v863 = vld [vmem:[%s350 + $0x52] sm:$0xff]
        %v864 = vld [vmem:[%s350 + $0x62] sm:$0xff]
        %v865 = vld [vmem:[%s350 + $0x6a] sm:$0xff]
        %v866 = vld [vmem:[%s350 + $0x7a] sm:$0xff]
        %v867 = vld [vmem:[%s350 + $0x82] sm:$0xff]
        %v868 = vld [vmem:[%s350 + $0x92] sm:$0xff]
        %v869 = vld [vmem:[%s350 + $0x9a] sm:$0xff]
        %v870 = vld [vmem:[%s350 + $0xaa] sm:$0xff]
        %v871 = vld [vmem:[%s350 + $0xb2] sm:$0xff]
        %v872 = vld [vmem:[%s350 + $0xc2] sm:$0xff]
        %v873 = vld [vmem:[%s350 + $0xca] sm:$0xff]
        %v874 = vld [vmem:[%s350 + $0xda] sm:$0xff]
        %v875 = vld [vmem:[%s350 + $0xe2] sm:$0xff]
        %v876 = vld [vmem:[%s350 + $0xf2] sm:$0xff]
        %v877 = vld [vmem:[%s350 + $0xfa] sm:$0xff]
        %v878 = vld [vmem:[%s350 + $0x10a] sm:$0xff]
        %v879 = vld [vmem:[%s350 + $0x112] sm:$0xff]
        %v880 = vld [vmem:[%s350 + $0x122] sm:$0xff]
        %v881 = vld [vmem:[%s350 + $0x12a] sm:$0xff]
        %v882 = vld [vmem:[%s350 + $0x13a] sm:$0xff]
        %v883 = vld [vmem:[%s350 + $0x142] sm:$0xff]
        %v884 = vld [vmem:[%s350 + $0x152] sm:$0xff]
        %v885 = vld [vmem:[%s350 + $0x15a] sm:$0xff]
        %v886 = vld [vmem:[%s350 + $0x16a] sm:$0xff]
        %v887 = vld [vmem:[%s350 + $0x172] sm:$0xff]
        %v888 = vld [vmem:[%s1 + $0x5] sm:$0x1]
        %v889 = vlaneseq
        %v890 = vshrl.u32 %v889, 7
        %v891 = vsub.s32 0, %v890
        %v892 = vrot.slane %v888, %v891
        %v893 = vmul.f32 %v856, %v892
        %v894 = vmul.f32 %v857, %v892
        %v895 = vmul.f32 %v858, %v892
        %v896 = vmul.f32 %v859, %v892
        %v897 = vmul.f32 %v860, %v892
        %v898 = vmul.f32 %v861, %v892
        %v899 = vmul.f32 %v862, %v892
        %v900 = vmul.f32 %v863, %v892
        %v901 = vmul.f32 %v864, %v892
        %v902 = vmul.f32 %v865, %v892
        %v903 = vmul.f32 %v866, %v892
        %v904 = vmul.f32 %v867, %v892
        %v905 = vmul.f32 %v868, %v892
        %v906 = vmul.f32 %v869, %v892
        %v907 = vmul.f32 %v870, %v892
        %v908 = vmul.f32 %v871, %v892
        %v909 = vmul.f32 %v872, %v892
        %v910 = vmul.f32 %v873, %v892
        %v911 = vmul.f32 %v874, %v892
        %v912 = vmul.f32 %v875, %v892
        %v913 = vmul.f32 %v876, %v892
        %v914 = vmul.f32 %v877, %v892
        %v915 = vmul.f32 %v878, %v892
        %v916 = vmul.f32 %v879, %v892
        %v917 = vmul.f32 %v880, %v892
        %v918 = vmul.f32 %v881, %v892
        %v919 = vmul.f32 %v882, %v892
        %v920 = vmul.f32 %v883, %v892
        %v921 = vmul.f32 %v884, %v892
        %v922 = vmul.f32 %v885, %v892
        %v923 = vmul.f32 %v886, %v892
        %v924 = vmul.f32 %v887, %v892
        %v925 = vadd.f32 %v824, %v893
        %v926 = vadd.f32 %v825, %v894
        %v927 = vadd.f32 %v826, %v895
        %v928 = vadd.f32 %v827, %v896
        %v929 = vadd.f32 %v828, %v897
        %v930 = vadd.f32 %v829, %v898
        %v931 = vadd.f32 %v830, %v899
        %v932 = vadd.f32 %v831, %v900
        %v933 = vadd.f32 %v832, %v901
        %v934 = vadd.f32 %v833, %v902
        %v935 = vadd.f32 %v834, %v903
        %v936 = vadd.f32 %v835, %v904
        %v937 = vadd.f32 %v836, %v905
        %v938 = vadd.f32 %v837, %v906
        %v939 = vadd.f32 %v838, %v907
        %v940 = vadd.f32 %v839, %v908
        %v941 = vadd.f32 %v840, %v909
        %v942 = vadd.f32 %v841, %v910
        %v943 = vadd.f32 %v842, %v911
        %v944 = vadd.f32 %v843, %v912
        %v945 = vadd.f32 %v844, %v913
        %v946 = vadd.f32 %v845, %v914
        %v947 = vadd.f32 %v846, %v915
        %v948 = vadd.f32 %v847, %v916
        %v949 = vadd.f32 %v848, %v917
        %v950 = vadd.f32 %v849, %v918
        %v951 = vadd.f32 %v850, %v919
        %v952 = vadd.f32 %v851, %v920
        %v953 = vadd.f32 %v852, %v921
        %v954 = vadd.f32 %v853, %v922
        %v955 = vadd.f32 %v854, %v923
        %v956 = vadd.f32 %v855, %v924
        %s957 = scalar_lea.vmem [#allocation2], 48
        %v958 = vld [vmem:[%s957] sm:$0xff]
        %v959 = vld [vmem:[%s957 + $0x8] sm:$0xff]
        %v960 = vld [vmem:[%s957 + $0x18] sm:$0xff]
        %v961 = vld [vmem:[%s957 + $0x20] sm:$0xff]
        %v962 = vld [vmem:[%s957 + $0x30] sm:$0xff]
        %v963 = vld [vmem:[%s957 + $0x38] sm:$0xff]
        %v964 = vld [vmem:[%s957 + $0x48] sm:$0xff]
        %v965 = vld [vmem:[%s957 + $0x50] sm:$0xff]
        %v966 = vld [vmem:[%s957 + $0x60] sm:$0xff]
        %v967 = vld [vmem:[%s957 + $0x68] sm:$0xff]
        %v968 = vld [vmem:[%s957 + $0x78] sm:$0xff]
        %v969 = vld [vmem:[%s957 + $0x80] sm:$0xff]
        %v970 = vld [vmem:[%s957 + $0x90] sm:$0xff]
        %v971 = vld [vmem:[%s957 + $0x98] sm:$0xff]
        %v972 = vld [vmem:[%s957 + $0xa8] sm:$0xff]
        %v973 = vld [vmem:[%s957 + $0xb0] sm:$0xff]
        %v974 = vld [vmem:[%s957 + $0xc0] sm:$0xff]
        %v975 = vld [vmem:[%s957 + $0xc8] sm:$0xff]
        %v976 = vld [vmem:[%s957 + $0xd8] sm:$0xff]
        %v977 = vld [vmem:[%s957 + $0xe0] sm:$0xff]
        %v978 = vld [vmem:[%s957 + $0xf0] sm:$0xff]
        %v979 = vld [vmem:[%s957 + $0xf8] sm:$0xff]
        %v980 = vld [vmem:[%s957 + $0x108] sm:$0xff]
        %v981 = vld [vmem:[%s957 + $0x110] sm:$0xff]
        %v982 = vld [vmem:[%s957 + $0x120] sm:$0xff]
        %v983 = vld [vmem:[%s957 + $0x128] sm:$0xff]
        %v984 = vld [vmem:[%s957 + $0x138] sm:$0xff]
        %v985 = vld [vmem:[%s957 + $0x140] sm:$0xff]
        %v986 = vld [vmem:[%s957 + $0x150] sm:$0xff]
        %v987 = vld [vmem:[%s957 + $0x158] sm:$0xff]
        %v988 = vld [vmem:[%s957 + $0x168] sm:$0xff]
        %v989 = vld [vmem:[%s957 + $0x170] sm:$0xff]
        %v990 = vld [vmem:[%s1 + $0x6] sm:$0x1]
        %v991 = vlaneseq
        %v992 = vshrl.u32 %v991, 7
        %v993 = vsub.s32 0, %v992
        %v994 = vrot.slane %v990, %v993
        %v995 = vmul.f32 %v958, %v994
        %v996 = vmul.f32 %v959, %v994
        %v997 = vmul.f32 %v960, %v994
        %v998 = vmul.f32 %v961, %v994
        %v999 = vmul.f32 %v962, %v994
        %v1000 = vmul.f32 %v963, %v994
        %v1001 = vmul.f32 %v964, %v994
        %v1002 = vmul.f32 %v965, %v994
        %v1003 = vmul.f32 %v966, %v994
        %v1004 = vmul.f32 %v967, %v994
        %v1005 = vmul.f32 %v968, %v994
        %v1006 = vmul.f32 %v969, %v994
        %v1007 = vmul.f32 %v970, %v994
        %v1008 = vmul.f32 %v971, %v994
        %v1009 = vmul.f32 %v972, %v994
        %v1010 = vmul.f32 %v973, %v994
        %v1011 = vmul.f32 %v974, %v994
        %v1012 = vmul.f32 %v975, %v994
        %v1013 = vmul.f32 %v976, %v994
        %v1014 = vmul.f32 %v977, %v994
        %v1015 = vmul.f32 %v978, %v994
        %v1016 = vmul.f32 %v979, %v994
        %v1017 = vmul.f32 %v980, %v994
        %v1018 = vmul.f32 %v981, %v994
        %v1019 = vmul.f32 %v982, %v994
        %v1020 = vmul.f32 %v983, %v994
        %v1021 = vmul.f32 %v984, %v994
        %v1022 = vmul.f32 %v985, %v994
        %v1023 = vmul.f32 %v986, %v994
        %v1024 = vmul.f32 %v987, %v994
        %v1025 = vmul.f32 %v988, %v994
        %v1026 = vmul.f32 %v989, %v994
        %v1027 = vadd.f32 %v925, %v995
        %v1028 = vadd.f32 %v926, %v996
        %v1029 = vadd.f32 %v927, %v997
        %v1030 = vadd.f32 %v928, %v998
        %v1031 = vadd.f32 %v929, %v999
        %v1032 = vadd.f32 %v930, %v1000
        %v1033 = vadd.f32 %v931, %v1001
        %v1034 = vadd.f32 %v932, %v1002
        %v1035 = vadd.f32 %v933, %v1003
        %v1036 = vadd.f32 %v934, %v1004
        %v1037 = vadd.f32 %v935, %v1005
        %v1038 = vadd.f32 %v936, %v1006
        %v1039 = vadd.f32 %v937, %v1007
        %v1040 = vadd.f32 %v938, %v1008
        %v1041 = vadd.f32 %v939, %v1009
        %v1042 = vadd.f32 %v940, %v1010
        %v1043 = vadd.f32 %v941, %v1011
        %v1044 = vadd.f32 %v942, %v1012
        %v1045 = vadd.f32 %v943, %v1013
        %v1046 = vadd.f32 %v944, %v1014
        %v1047 = vadd.f32 %v945, %v1015
        %v1048 = vadd.f32 %v946, %v1016
        %v1049 = vadd.f32 %v947, %v1017
        %v1050 = vadd.f32 %v948, %v1018
        %v1051 = vadd.f32 %v949, %v1019
        %v1052 = vadd.f32 %v950, %v1020
        %v1053 = vadd.f32 %v951, %v1021
        %v1054 = vadd.f32 %v952, %v1022
        %v1055 = vadd.f32 %v953, %v1023
        %v1056 = vadd.f32 %v954, %v1024
        %v1057 = vadd.f32 %v955, %v1025
        %v1058 = vadd.f32 %v956, %v1026
        %v1059 = vld [vmem:[%s957 + $0x1] sm:$0xff]
        %v1060 = vld [vmem:[%s957 + $0x9] sm:$0xff]
        %v1061 = vld [vmem:[%s957 + $0x19] sm:$0xff]
        %v1062 = vld [vmem:[%s957 + $0x21] sm:$0xff]
        %v1063 = vld [vmem:[%s957 + $0x31] sm:$0xff]
        %v1064 = vld [vmem:[%s957 + $0x39] sm:$0xff]
        %v1065 = vld [vmem:[%s957 + $0x49] sm:$0xff]
        %v1066 = vld [vmem:[%s957 + $0x51] sm:$0xff]
        %v1067 = vld [vmem:[%s957 + $0x61] sm:$0xff]
        %v1068 = vld [vmem:[%s957 + $0x69] sm:$0xff]
        %v1069 = vld [vmem:[%s957 + $0x79] sm:$0xff]
        %v1070 = vld [vmem:[%s957 + $0x81] sm:$0xff]
        %v1071 = vld [vmem:[%s957 + $0x91] sm:$0xff]
        %v1072 = vld [vmem:[%s957 + $0x99] sm:$0xff]
        %v1073 = vld [vmem:[%s957 + $0xa9] sm:$0xff]
        %v1074 = vld [vmem:[%s957 + $0xb1] sm:$0xff]
        %v1075 = vld [vmem:[%s957 + $0xc1] sm:$0xff]
        %v1076 = vld [vmem:[%s957 + $0xc9] sm:$0xff]
        %v1077 = vld [vmem:[%s957 + $0xd9] sm:$0xff]
        %v1078 = vld [vmem:[%s957 + $0xe1] sm:$0xff]
        %v1079 = vld [vmem:[%s957 + $0xf1] sm:$0xff]
        %v1080 = vld [vmem:[%s957 + $0xf9] sm:$0xff]
        %v1081 = vld [vmem:[%s957 + $0x109] sm:$0xff]
        %v1082 = vld [vmem:[%s957 + $0x111] sm:$0xff]
        %v1083 = vld [vmem:[%s957 + $0x121] sm:$0xff]
        %v1084 = vld [vmem:[%s957 + $0x129] sm:$0xff]
        %v1085 = vld [vmem:[%s957 + $0x139] sm:$0xff]
        %v1086 = vld [vmem:[%s957 + $0x141] sm:$0xff]
        %v1087 = vld [vmem:[%s957 + $0x151] sm:$0xff]
        %v1088 = vld [vmem:[%s957 + $0x159] sm:$0xff]
        %v1089 = vld [vmem:[%s957 + $0x169] sm:$0xff]
        %v1090 = vld [vmem:[%s957 + $0x171] sm:$0xff]
        %v1091 = vld [vmem:[%s1 + $0x7] sm:$0x1]
        %v1092 = vlaneseq
        %v1093 = vshrl.u32 %v1092, 7
        %v1094 = vsub.s32 0, %v1093
        %v1095 = vrot.slane %v1091, %v1094
        %v1096 = vmul.f32 %v1059, %v1095
        %v1097 = vmul.f32 %v1060, %v1095
        %v1098 = vmul.f32 %v1061, %v1095
        %v1099 = vmul.f32 %v1062, %v1095
        %v1100 = vmul.f32 %v1063, %v1095
        %v1101 = vmul.f32 %v1064, %v1095
        %v1102 = vmul.f32 %v1065, %v1095
        %v1103 = vmul.f32 %v1066, %v1095
        %v1104 = vmul.f32 %v1067, %v1095
        %v1105 = vmul.f32 %v1068, %v1095
        %v1106 = vmul.f32 %v1069, %v1095
        %v1107 = vmul.f32 %v1070, %v1095
        %v1108 = vmul.f32 %v1071, %v1095
        %v1109 = vmul.f32 %v1072, %v1095
        %v1110 = vmul.f32 %v1073, %v1095
        %v1111 = vmul.f32 %v1074, %v1095
        %v1112 = vmul.f32 %v1075, %v1095
        %v1113 = vmul.f32 %v1076, %v1095
        %v1114 = vmul.f32 %v1077, %v1095
        %v1115 = vmul.f32 %v1078, %v1095
        %v1116 = vmul.f32 %v1079, %v1095
        %v1117 = vmul.f32 %v1080, %v1095
        %v1118 = vmul.f32 %v1081, %v1095
        %v1119 = vmul.f32 %v1082, %v1095
        %v1120 = vmul.f32 %v1083, %v1095
        %v1121 = vmul.f32 %v1084, %v1095
        %v1122 = vmul.f32 %v1085, %v1095
        %v1123 = vmul.f32 %v1086, %v1095
        %v1124 = vmul.f32 %v1087, %v1095
        %v1125 = vmul.f32 %v1088, %v1095
        %v1126 = vmul.f32 %v1089, %v1095
        %v1127 = vmul.f32 %v1090, %v1095
        %v1128 = vadd.f32 %v1027, %v1096
        %v1129 = vadd.f32 %v1028, %v1097
        %v1130 = vadd.f32 %v1029, %v1098
        %v1131 = vadd.f32 %v1030, %v1099
        %v1132 = vadd.f32 %v1031, %v1100
        %v1133 = vadd.f32 %v1032, %v1101
        %v1134 = vadd.f32 %v1033, %v1102
        %v1135 = vadd.f32 %v1034, %v1103
        %v1136 = vadd.f32 %v1035, %v1104
        %v1137 = vadd.f32 %v1036, %v1105
        %v1138 = vadd.f32 %v1037, %v1106
        %v1139 = vadd.f32 %v1038, %v1107
        %v1140 = vadd.f32 %v1039, %v1108
        %v1141 = vadd.f32 %v1040, %v1109
        %v1142 = vadd.f32 %v1041, %v1110
        %v1143 = vadd.f32 %v1042, %v1111
        %v1144 = vadd.f32 %v1043, %v1112
        %v1145 = vadd.f32 %v1044, %v1113
        %v1146 = vadd.f32 %v1045, %v1114
        %v1147 = vadd.f32 %v1046, %v1115
        %v1148 = vadd.f32 %v1047, %v1116
        %v1149 = vadd.f32 %v1048, %v1117
        %v1150 = vadd.f32 %v1049, %v1118
        %v1151 = vadd.f32 %v1050, %v1119
        %v1152 = vadd.f32 %v1051, %v1120
        %v1153 = vadd.f32 %v1052, %v1121
        %v1154 = vadd.f32 %v1053, %v1122
        %v1155 = vadd.f32 %v1054, %v1123
        %v1156 = vadd.f32 %v1055, %v1124
        %v1157 = vadd.f32 %v1056, %v1125
        %v1158 = vadd.f32 %v1057, %v1126
        %v1159 = vadd.f32 %v1058, %v1127
        %v1160 = vld [vmem:[%s957 + $0x2] sm:$0xff]
        %v1161 = vld [vmem:[%s957 + $0xa] sm:$0xff]
        %v1162 = vld [vmem:[%s957 + $0x1a] sm:$0xff]
        %v1163 = vld [vmem:[%s957 + $0x22] sm:$0xff]
        %v1164 = vld [vmem:[%s957 + $0x32] sm:$0xff]
        %v1165 = vld [vmem:[%s957 + $0x3a] sm:$0xff]
        %v1166 = vld [vmem:[%s957 + $0x4a] sm:$0xff]
        %v1167 = vld [vmem:[%s957 + $0x52] sm:$0xff]
        %v1168 = vld [vmem:[%s957 + $0x62] sm:$0xff]
        %v1169 = vld [vmem:[%s957 + $0x6a] sm:$0xff]
        %v1170 = vld [vmem:[%s957 + $0x7a] sm:$0xff]
        %v1171 = vld [vmem:[%s957 + $0x82] sm:$0xff]
        %v1172 = vld [vmem:[%s957 + $0x92] sm:$0xff]
        %v1173 = vld [vmem:[%s957 + $0x9a] sm:$0xff]
        %v1174 = vld [vmem:[%s957 + $0xaa] sm:$0xff]
        %v1175 = vld [vmem:[%s957 + $0xb2] sm:$0xff]
        %v1176 = vld [vmem:[%s957 + $0xc2] sm:$0xff]
        %v1177 = vld [vmem:[%s957 + $0xca] sm:$0xff]
        %v1178 = vld [vmem:[%s957 + $0xda] sm:$0xff]
        %v1179 = vld [vmem:[%s957 + $0xe2] sm:$0xff]
        %v1180 = vld [vmem:[%s957 + $0xf2] sm:$0xff]
        %v1181 = vld [vmem:[%s957 + $0xfa] sm:$0xff]
        %v1182 = vld [vmem:[%s957 + $0x10a] sm:$0xff]
        %v1183 = vld [vmem:[%s957 + $0x112] sm:$0xff]
        %v1184 = vld [vmem:[%s957 + $0x122] sm:$0xff]
        %v1185 = vld [vmem:[%s957 + $0x12a] sm:$0xff]
        %v1186 = vld [vmem:[%s957 + $0x13a] sm:$0xff]
        %v1187 = vld [vmem:[%s957 + $0x142] sm:$0xff]
        %v1188 = vld [vmem:[%s957 + $0x152] sm:$0xff]
        %v1189 = vld [vmem:[%s957 + $0x15a] sm:$0xff]
        %v1190 = vld [vmem:[%s957 + $0x16a] sm:$0xff]
        %v1191 = vld [vmem:[%s957 + $0x172] sm:$0xff]
        %v1192 = vld [vmem:[%s1 + $0x8] sm:$0x1]
        %v1193 = vlaneseq
        %v1194 = vshrl.u32 %v1193, 7
        %v1195 = vsub.s32 0, %v1194
        %v1196 = vrot.slane %v1192, %v1195
        %v1197 = vmul.f32 %v1160, %v1196
        %v1198 = vmul.f32 %v1161, %v1196
        %v1199 = vmul.f32 %v1162, %v1196
        %v1200 = vmul.f32 %v1163, %v1196
        %v1201 = vmul.f32 %v1164, %v1196
        %v1202 = vmul.f32 %v1165, %v1196
        %v1203 = vmul.f32 %v1166, %v1196
        %v1204 = vmul.f32 %v1167, %v1196
        %v1205 = vmul.f32 %v1168, %v1196
        %v1206 = vmul.f32 %v1169, %v1196
        %v1207 = vmul.f32 %v1170, %v1196
        %v1208 = vmul.f32 %v1171, %v1196
        %v1209 = vmul.f32 %v1172, %v1196
        %v1210 = vmul.f32 %v1173, %v1196
        %v1211 = vmul.f32 %v1174, %v1196
        %v1212 = vmul.f32 %v1175, %v1196
        %v1213 = vmul.f32 %v1176, %v1196
        %v1214 = vmul.f32 %v1177, %v1196
        %v1215 = vmul.f32 %v1178, %v1196
        %v1216 = vmul.f32 %v1179, %v1196
        %v1217 = vmul.f32 %v1180, %v1196
        %v1218 = vmul.f32 %v1181, %v1196
        %v1219 = vmul.f32 %v1182, %v1196
        %v1220 = vmul.f32 %v1183, %v1196
        %v1221 = vmul.f32 %v1184, %v1196
        %v1222 = vmul.f32 %v1185, %v1196
        %v1223 = vmul.f32 %v1186, %v1196
        %v1224 = vmul.f32 %v1187, %v1196
        %v1225 = vmul.f32 %v1188, %v1196
        %v1226 = vmul.f32 %v1189, %v1196
        %v1227 = vmul.f32 %v1190, %v1196
        %v1228 = vmul.f32 %v1191, %v1196
        %v1229 = vadd.f32 %v1128, %v1197
        %v1230 = vadd.f32 %v1129, %v1198
        %v1231 = vadd.f32 %v1130, %v1199
        %v1232 = vadd.f32 %v1131, %v1200
        %v1233 = vadd.f32 %v1132, %v1201
        %v1234 = vadd.f32 %v1133, %v1202
        %v1235 = vadd.f32 %v1134, %v1203
        %v1236 = vadd.f32 %v1135, %v1204
        %v1237 = vadd.f32 %v1136, %v1205
        %v1238 = vadd.f32 %v1137, %v1206
        %v1239 = vadd.f32 %v1138, %v1207
        %v1240 = vadd.f32 %v1139, %v1208
        %v1241 = vadd.f32 %v1140, %v1209
        %v1242 = vadd.f32 %v1141, %v1210
        %v1243 = vadd.f32 %v1142, %v1211
        %v1244 = vadd.f32 %v1143, %v1212
        %v1245 = vadd.f32 %v1144, %v1213
        %v1246 = vadd.f32 %v1145, %v1214
        %v1247 = vadd.f32 %v1146, %v1215
        %v1248 = vadd.f32 %v1147, %v1216
        %v1249 = vadd.f32 %v1148, %v1217
        %v1250 = vadd.f32 %v1149, %v1218
        %v1251 = vadd.f32 %v1150, %v1219
        %v1252 = vadd.f32 %v1151, %v1220
        %v1253 = vadd.f32 %v1152, %v1221
        %v1254 = vadd.f32 %v1153, %v1222
        %v1255 = vadd.f32 %v1154, %v1223
        %v1256 = vadd.f32 %v1155, %v1224
        %v1257 = vadd.f32 %v1156, %v1225
        %v1258 = vadd.f32 %v1157, %v1226
        %v1259 = vadd.f32 %v1158, %v1227
        %v1260 = vadd.f32 %v1159, %v1228
        %v1261 = vpack.c.bf16 %v1230, %v1229
        %v1262 = vpack.c.bf16 %v1232, %v1231
        %v1263 = vpack.c.bf16 %v1234, %v1233
        %v1264 = vpack.c.bf16 %v1236, %v1235
        %v1265 = vpack.c.bf16 %v1238, %v1237
        %v1266 = vpack.c.bf16 %v1240, %v1239
        %v1267 = vpack.c.bf16 %v1242, %v1241
        %v1268 = vpack.c.bf16 %v1244, %v1243
        %v1269 = vpack.c.bf16 %v1246, %v1245
        %v1270 = vpack.c.bf16 %v1248, %v1247
        %v1271 = vpack.c.bf16 %v1250, %v1249
        %v1272 = vpack.c.bf16 %v1252, %v1251
        %v1273 = vpack.c.bf16 %v1254, %v1253
        %v1274 = vpack.c.bf16 %v1256, %v1255
        %v1275 = vpack.c.bf16 %v1258, %v1257
        %v1276 = vpack.c.bf16 %v1260, %v1259
        %v1277 = vld [vmem:[#allocation6] sm:$0xf]
        %v1278 = vld [vmem:[#allocation6 + $0x4] sm:$0xf]
        %v1279 = vld [vmem:[#allocation6 + $0x8] sm:$0xf]
        %v1280 = vld [vmem:[#allocation6 + $0xc] sm:$0xf]
        %v1281 = vld [vmem:[#allocation6 + $0x10] sm:$0xf]
        %v1282 = vld [vmem:[#allocation6 + $0x14] sm:$0xf]
        %v1283 = vld [vmem:[#allocation6 + $0x18] sm:$0xf]
        %v1284 = vld [vmem:[#allocation6 + $0x1c] sm:$0xf]
        %v1285 = vld [vmem:[#allocation6 + $0x20] sm:$0xf]
        %v1286 = vld [vmem:[#allocation6 + $0x24] sm:$0xf]
        %v1287 = vld [vmem:[#allocation6 + $0x28] sm:$0xf]
        %v1288 = vld [vmem:[#allocation6 + $0x2c] sm:$0xf]
        %v1289 = vld [vmem:[#allocation6 + $0x30] sm:$0xf]
        %v1290 = vld [vmem:[#allocation6 + $0x34] sm:$0xf]
        %v1291 = vld [vmem:[#allocation6 + $0x38] sm:$0xf]
        %v1292 = vld [vmem:[#allocation6 + $0x3c] sm:$0xf]
        %v1309 = vunpack.c.l.b16 %v1277
        %v1310 = vunpack.c.l.b16 %v1278
        %v1311 = vunpack.c.l.b16 %v1279
        %v1312 = vunpack.c.l.b16 %v1280
        %v1313 = vunpack.c.l.b16 %v1281
        %v1314 = vunpack.c.l.b16 %v1282
        %v1315 = vunpack.c.l.b16 %v1283
        %v1316 = vunpack.c.l.b16 %v1284
        %v1317 = vunpack.c.l.b16 %v1285
        %v1318 = vunpack.c.l.b16 %v1286
        %v1319 = vunpack.c.l.b16 %v1287
        %v1320 = vunpack.c.l.b16 %v1288
        %v1321 = vunpack.c.l.b16 %v1289
        %v1322 = vunpack.c.l.b16 %v1290
        %v1323 = vunpack.c.l.b16 %v1291
        %v1324 = vunpack.c.l.b16 %v1292
        %v1325 = vpack.c.b16 %v1310, %v1309
        %v1326 = vpack.c.b16 %v1312, %v1311
        %v1327 = vpack.c.b16 %v1314, %v1313
        %v1328 = vpack.c.b16 %v1316, %v1315
        %v1329 = vpack.c.b16 %v1318, %v1317
        %v1330 = vpack.c.b16 %v1320, %v1319
        %v1331 = vpack.c.b16 %v1322, %v1321
        %v1332 = vpack.c.b16 %v1324, %v1323
        %1341 = vmatprep.subr.bf16.mxu0 0
        %1342 = vmatpush1.bf16.msra.mxu0 %v1332
        %1343 = vmatprep.subr.bf16.mxu0 0
        %1344 = vmatpush1.bf16.msra.mxu0 %v1331
        %1345 = vmatprep.subr.bf16.mxu0 0
        %1346 = vmatpush1.bf16.msra.mxu0 %v1330
        %1347 = vmatprep.subr.bf16.mxu0 0
        %1348 = vmatpush1.bf16.msra.mxu0 %v1329
        %1349 = vmatprep.subr.bf16.mxu0 0
        %1350 = vmatpush1.bf16.msra.mxu0 %v1328
        %1351 = vmatprep.subr.bf16.mxu0 0
        %1352 = vmatpush1.bf16.msra.mxu0 %v1327
        %1353 = vmatprep.subr.bf16.mxu0 0
        %1354 = vmatpush1.bf16.msra.mxu0 %v1326
        %1355 = vmatprep.subr.bf16.mxu0 0
        %1356 = vmatpush1.bf16.msra.mxu0 %v1325
        %1357 = vmatprep.subr.bf16.mxu0 0
        %1358 = vmatpush2.bf16.msra.mxu0 0
        %1359 = vmatprep.subr.bf16.mxu0 0
        %1360 = vmatpush2.bf16.msra.mxu0 0
        %1361 = vmatprep.subr.bf16.mxu0 0
        %1362 = vmatpush2.bf16.msra.mxu0 0
        %1363 = vmatprep.subr.bf16.mxu0 0
        %1364 = vmatpush2.bf16.msra.mxu0 0
        %1365 = vmatprep.subr.bf16.mxu0 0
        %1366 = vmatpush2.bf16.msra.mxu0 0
        %1367 = vmatprep.subr.bf16.mxu0 0
        %1368 = vmatpush2.bf16.msra.mxu0 0
        %1369 = vmatprep.subr.bf16.mxu0 0
        %1370 = vmatpush2.bf16.msra.mxu0 0
        %1371 = vmatprep.subr.bf16.mxu0 0
        %1372 = vmatpush2.bf16.msra.mxu0 0
        %1373 = vmatprep.mubr.bf16.mxu0 0
        %1374 = vmatmul.mubr.bf16.gmra.mxu0 %v1261
        %v1375 = vpop.f32.mrf.mxu0
        %v1376 = vadd.f32 0.0, %v1375
        %v1377 = vpop.f32.mrf.mxu0
        %v1378 = vpop.f32.mrf.mxu0
        %v1379 = vadd.f32 0.0, %v1378
        %v1380 = vpop.f32.mrf.mxu0
        %1381 = vmatprep.mubr.bf16.mxu0 0
        %1382 = vmatmul.mubr.bf16.gmra.mxu0 %v1262
        %v1383 = vpop.f32.mrf.mxu0
        %v1384 = vadd.f32 0.0, %v1383
        %v1385 = vpop.f32.mrf.mxu0
        %v1386 = vpop.f32.mrf.mxu0
        %v1387 = vadd.f32 0.0, %v1386
        %v1388 = vpop.f32.mrf.mxu0
        %1389 = vmatprep.mubr.bf16.mxu0 0
        %1390 = vmatmul.mubr.bf16.gmra.mxu0 %v1263
        %v1391 = vpop.f32.mrf.mxu0
        %v1392 = vadd.f32 0.0, %v1391
        %v1393 = vpop.f32.mrf.mxu0
        %v1394 = vpop.f32.mrf.mxu0
        %v1395 = vadd.f32 0.0, %v1394
        %v1396 = vpop.f32.mrf.mxu0
        %1397 = vmatprep.mubr.bf16.mxu0 0
        %1398 = vmatmul.mubr.bf16.gmra.mxu0 %v1264
        %v1399 = vpop.f32.mrf.mxu0
        %v1400 = vadd.f32 0.0, %v1399
        %v1401 = vpop.f32.mrf.mxu0
        %v1402 = vpop.f32.mrf.mxu0
        %v1403 = vadd.f32 0.0, %v1402
        %v1404 = vpop.f32.mrf.mxu0
        %1405 = vmatprep.mubr.bf16.mxu0 0
        %1406 = vmatmul.mubr.bf16.gmra.mxu0 %v1265
        %v1407 = vpop.f32.mrf.mxu0
        %v1408 = vadd.f32 0.0, %v1407
        %v1409 = vpop.f32.mrf.mxu0
        %v1410 = vpop.f32.mrf.mxu0
        %v1411 = vadd.f32 0.0, %v1410
        %v1412 = vpop.f32.mrf.mxu0
        %1413 = vmatprep.mubr.bf16.mxu0 0
        %1414 = vmatmul.mubr.bf16.gmra.mxu0 %v1266
        %v1415 = vpop.f32.mrf.mxu0
        %v1416 = vadd.f32 0.0, %v1415
        %v1417 = vpop.f32.mrf.mxu0
        %v1418 = vpop.f32.mrf.mxu0
        %v1419 = vadd.f32 0.0, %v1418
        %v1420 = vpop.f32.mrf.mxu0
        %1421 = vmatprep.mubr.bf16.mxu0 0
        %1422 = vmatmul.mubr.bf16.gmra.mxu0 %v1267
        %v1423 = vpop.f32.mrf.mxu0
        %v1424 = vadd.f32 0.0, %v1423
        %v1425 = vpop.f32.mrf.mxu0
        %v1426 = vpop.f32.mrf.mxu0
        %v1427 = vadd.f32 0.0, %v1426
        %v1428 = vpop.f32.mrf.mxu0
        %1429 = vmatprep.mubr.bf16.mxu0 0
        %1430 = vmatmul.mubr.bf16.gmra.mxu0 %v1268
        %v1431 = vpop.f32.mrf.mxu0
        %v1432 = vadd.f32 0.0, %v1431
        %v1433 = vpop.f32.mrf.mxu0
        %v1434 = vpop.f32.mrf.mxu0
        %v1435 = vadd.f32 0.0, %v1434
        %v1436 = vpop.f32.mrf.mxu0
        %1437 = vmatprep.mubr.bf16.mxu0 0
        %1438 = vmatmul.mubr.bf16.gmra.mxu0 %v1269
        %v1439 = vpop.f32.mrf.mxu0
        %v1440 = vadd.f32 0.0, %v1439
        %v1441 = vpop.f32.mrf.mxu0
        %v1442 = vpop.f32.mrf.mxu0
        %v1443 = vadd.f32 0.0, %v1442
        %v1444 = vpop.f32.mrf.mxu0
        %1445 = vmatprep.mubr.bf16.mxu0 0
        %1446 = vmatmul.mubr.bf16.gmra.mxu0 %v1270
        %v1447 = vpop.f32.mrf.mxu0
        %v1448 = vadd.f32 0.0, %v1447
        %v1449 = vpop.f32.mrf.mxu0
        %v1450 = vpop.f32.mrf.mxu0
        %v1451 = vadd.f32 0.0, %v1450
        %v1452 = vpop.f32.mrf.mxu0
        %1453 = vmatprep.mubr.bf16.mxu0 0
        %1454 = vmatmul.mubr.bf16.gmra.mxu0 %v1271
        %v1455 = vpop.f32.mrf.mxu0
        %v1456 = vadd.f32 0.0, %v1455
        %v1457 = vpop.f32.mrf.mxu0
        %v1458 = vpop.f32.mrf.mxu0
        %v1459 = vadd.f32 0.0, %v1458
        %v1460 = vpop.f32.mrf.mxu0
        %1461 = vmatprep.mubr.bf16.mxu0 0
        %1462 = vmatmul.mubr.bf16.gmra.mxu0 %v1272
        %v1463 = vpop.f32.mrf.mxu0
        %v1464 = vadd.f32 0.0, %v1463
        %v1465 = vpop.f32.mrf.mxu0
        %v1466 = vpop.f32.mrf.mxu0
        %v1467 = vadd.f32 0.0, %v1466
        %v1468 = vpop.f32.mrf.mxu0
        %1469 = vmatprep.mubr.bf16.mxu0 0
        %1470 = vmatmul.mubr.bf16.gmra.mxu0 %v1273
        %v1471 = vpop.f32.mrf.mxu0
        %v1472 = vadd.f32 0.0, %v1471
        %v1473 = vpop.f32.mrf.mxu0
        %v1474 = vpop.f32.mrf.mxu0
        %v1475 = vadd.f32 0.0, %v1474
        %v1476 = vpop.f32.mrf.mxu0
        %1477 = vmatprep.mubr.bf16.mxu0 0
        %1478 = vmatmul.mubr.bf16.gmra.mxu0 %v1274
        %v1479 = vpop.f32.mrf.mxu0
        %v1480 = vadd.f32 0.0, %v1479
        %v1481 = vpop.f32.mrf.mxu0
        %v1482 = vpop.f32.mrf.mxu0
        %v1483 = vadd.f32 0.0, %v1482
        %v1484 = vpop.f32.mrf.mxu0
        %1485 = vmatprep.mubr.bf16.mxu0 0
        %1486 = vmatmul.mubr.bf16.gmra.mxu0 %v1275
        %v1487 = vpop.f32.mrf.mxu0
        %v1488 = vadd.f32 0.0, %v1487
        %v1489 = vpop.f32.mrf.mxu0
        %v1490 = vpop.f32.mrf.mxu0
        %v1491 = vadd.f32 0.0, %v1490
        %v1492 = vpop.f32.mrf.mxu0
        %1493 = vmatprep.mubr.bf16.mxu0 0
        %1494 = vmatmul.mubr.bf16.gmra.mxu0 %v1276
        %v1495 = vpop.f32.mrf.mxu0
        %v1496 = vadd.f32 0.0, %v1495
        %v1497 = vpop.f32.mrf.mxu0
        %v1498 = vpop.f32.mrf.mxu0
        %v1499 = vadd.f32 0.0, %v1498
        %v1500 = vpop.f32.mrf.mxu0
        %1501 = vdwg.mxu0
        %v1502 = vld [vmem:[%s3] sm:$0x1]
        %v1504 = vlaneseq
        %v1505 = vshrl.u32 %v1504, 7
        %v1506 = vsub.s32 0, %v1505
        %v1507 = vrot.slane %v1502, %v1506
        %v1509 = vadd.f32 %v1376, %v1507
        %v1510 = vadd.f32 %v1379, %v1507
        %v1511 = vadd.f32 %v1384, %v1507
        %v1512 = vadd.f32 %v1387, %v1507
        %v1513 = vadd.f32 %v1392, %v1507
        %v1514 = vadd.f32 %v1395, %v1507
        %v1515 = vadd.f32 %v1400, %v1507
        %v1516 = vadd.f32 %v1403, %v1507
        %v1517 = vadd.f32 %v1408, %v1507
        %v1518 = vadd.f32 %v1411, %v1507
        %v1519 = vadd.f32 %v1416, %v1507
        %v1520 = vadd.f32 %v1419, %v1507
        %v1521 = vadd.f32 %v1424, %v1507
        %v1522 = vadd.f32 %v1427, %v1507
        %v1523 = vadd.f32 %v1432, %v1507
        %v1524 = vadd.f32 %v1435, %v1507
        %v1525 = vadd.f32 %v1440, %v1507
        %v1526 = vadd.f32 %v1443, %v1507
        %v1527 = vadd.f32 %v1448, %v1507
        %v1528 = vadd.f32 %v1451, %v1507
        %v1529 = vadd.f32 %v1456, %v1507
        %v1530 = vadd.f32 %v1459, %v1507
        %v1531 = vadd.f32 %v1464, %v1507
        %v1532 = vadd.f32 %v1467, %v1507
        %v1533 = vadd.f32 %v1472, %v1507
        %v1534 = vadd.f32 %v1475, %v1507
        %v1535 = vadd.f32 %v1480, %v1507
        %v1536 = vadd.f32 %v1483, %v1507
        %v1537 = vadd.f32 %v1488, %v1507
        %v1538 = vadd.f32 %v1491, %v1507
        %v1539 = vadd.f32 %v1496, %v1507
        %v1540 = vadd.f32 %v1499, %v1507
        %v1541 = vmax.f32 %v1509, 0.0
        %v1542 = vmax.f32 %v1510, 0.0
        %v1543 = vmax.f32 %v1511, 0.0
        %v1544 = vmax.f32 %v1512, 0.0
        %v1545 = vmax.f32 %v1513, 0.0
        %v1546 = vmax.f32 %v1514, 0.0
        %v1547 = vmax.f32 %v1515, 0.0
        %v1548 = vmax.f32 %v1516, 0.0
        %v1549 = vmax.f32 %v1517, 0.0
        %v1550 = vmax.f32 %v1518, 0.0
        %v1551 = vmax.f32 %v1519, 0.0
        %v1552 = vmax.f32 %v1520, 0.0
        %v1553 = vmax.f32 %v1521, 0.0
        %v1554 = vmax.f32 %v1522, 0.0
        %v1555 = vmax.f32 %v1523, 0.0
        %v1556 = vmax.f32 %v1524, 0.0
        %v1557 = vmax.f32 %v1525, 0.0
        %v1558 = vmax.f32 %v1526, 0.0
        %v1559 = vmax.f32 %v1527, 0.0
        %v1560 = vmax.f32 %v1528, 0.0
        %v1561 = vmax.f32 %v1529, 0.0
        %v1562 = vmax.f32 %v1530, 0.0
        %v1563 = vmax.f32 %v1531, 0.0
        %v1564 = vmax.f32 %v1532, 0.0
        %v1565 = vmax.f32 %v1533, 0.0
        %v1566 = vmax.f32 %v1534, 0.0
        %v1567 = vmax.f32 %v1535, 0.0
        %v1568 = vmax.f32 %v1536, 0.0
        %v1569 = vmax.f32 %v1537, 0.0
        %v1570 = vmax.f32 %v1538, 0.0
        %v1571 = vmax.f32 %v1539, 0.0
        %v1572 = vmax.f32 %v1540, 0.0
        %1573 = vst [vmem:[%s350 + $0x1] sm:$0xff] %v1541
        %1574 = vst [vmem:[%s350 + $0x9] sm:$0xff] %v1542
        %1575 = vst [vmem:[%s350 + $0x19] sm:$0xff] %v1543
        %1576 = vst [vmem:[%s350 + $0x21] sm:$0xff] %v1544
        %1577 = vst [vmem:[%s350 + $0x31] sm:$0xff] %v1545
        %1578 = vst [vmem:[%s350 + $0x39] sm:$0xff] %v1546
        %1579 = vst [vmem:[%s350 + $0x49] sm:$0xff] %v1547
        %1580 = vst [vmem:[%s350 + $0x51] sm:$0xff] %v1548
        %1581 = vst [vmem:[%s350 + $0x61] sm:$0xff] %v1549
        %1582 = vst [vmem:[%s350 + $0x69] sm:$0xff] %v1550
        %1583 = vst [vmem:[%s350 + $0x79] sm:$0xff] %v1551
        %1584 = vst [vmem:[%s350 + $0x81] sm:$0xff] %v1552
        %1585 = vst [vmem:[%s350 + $0x91] sm:$0xff] %v1553
        %1586 = vst [vmem:[%s350 + $0x99] sm:$0xff] %v1554
        %1587 = vst [vmem:[%s350 + $0xa9] sm:$0xff] %v1555
        %1588 = vst [vmem:[%s350 + $0xb1] sm:$0xff] %v1556
        %1589 = vst [vmem:[%s350 + $0xc1] sm:$0xff] %v1557
        %1590 = vst [vmem:[%s350 + $0xc9] sm:$0xff] %v1558
        %1591 = vst [vmem:[%s350 + $0xd9] sm:$0xff] %v1559
        %1592 = vst [vmem:[%s350 + $0xe1] sm:$0xff] %v1560
        %1593 = vst [vmem:[%s350 + $0xf1] sm:$0xff] %v1561
        %1594 = vst [vmem:[%s350 + $0xf9] sm:$0xff] %v1562
        %1595 = vst [vmem:[%s350 + $0x109] sm:$0xff] %v1563
        %1596 = vst [vmem:[%s350 + $0x111] sm:$0xff] %v1564
        %1597 = vst [vmem:[%s350 + $0x121] sm:$0xff] %v1565
        %1598 = vst [vmem:[%s350 + $0x129] sm:$0xff] %v1566
        %1599 = vst [vmem:[%s350 + $0x139] sm:$0xff] %v1567
        %1600 = vst [vmem:[%s350 + $0x141] sm:$0xff] %v1568
        %1601 = vst [vmem:[%s350 + $0x151] sm:$0xff] %v1569
        %1602 = vst [vmem:[%s350 + $0x159] sm:$0xff] %v1570
        %1603 = vst [vmem:[%s350 + $0x169] sm:$0xff] %v1571
        %1604 = vst [vmem:[%s350 + $0x171] sm:$0xff] %v1572
        %v1605 = vld [vmem:[#allocation2] sm:$0xff]
        %v1606 = vld [vmem:[#allocation2 + $0x8] sm:$0xff]
        %v1607 = vld [vmem:[#allocation2 + $0x18] sm:$0xff]
        %v1608 = vld [vmem:[#allocation2 + $0x20] sm:$0xff]
        %v1609 = vld [vmem:[#allocation2 + $0x30] sm:$0xff]
        %v1610 = vld [vmem:[#allocation2 + $0x38] sm:$0xff]
        %v1611 = vld [vmem:[#allocation2 + $0x48] sm:$0xff]
        %v1612 = vld [vmem:[#allocation2 + $0x50] sm:$0xff]
        %v1613 = vld [vmem:[#allocation2 + $0x60] sm:$0xff]
        %v1614 = vld [vmem:[#allocation2 + $0x68] sm:$0xff]
        %v1615 = vld [vmem:[#allocation2 + $0x78] sm:$0xff]
        %v1616 = vld [vmem:[#allocation2 + $0x80] sm:$0xff]
        %v1617 = vld [vmem:[#allocation2 + $0x90] sm:$0xff]
        %v1618 = vld [vmem:[#allocation2 + $0x98] sm:$0xff]
        %v1619 = vld [vmem:[#allocation2 + $0xa8] sm:$0xff]
        %v1620 = vld [vmem:[#allocation2 + $0xb0] sm:$0xff]
        %v1621 = vld [vmem:[#allocation2 + $0xc0] sm:$0xff]
        %v1622 = vld [vmem:[#allocation2 + $0xc8] sm:$0xff]
        %v1623 = vld [vmem:[#allocation2 + $0xd8] sm:$0xff]
        %v1624 = vld [vmem:[#allocation2 + $0xe0] sm:$0xff]
        %v1625 = vld [vmem:[#allocation2 + $0xf0] sm:$0xff]
        %v1626 = vld [vmem:[#allocation2 + $0xf8] sm:$0xff]
        %v1627 = vld [vmem:[#allocation2 + $0x108] sm:$0xff]
        %v1628 = vld [vmem:[#allocation2 + $0x110] sm:$0xff]
        %v1629 = vld [vmem:[#allocation2 + $0x120] sm:$0xff]
        %v1630 = vld [vmem:[#allocation2 + $0x128] sm:$0xff]
        %v1631 = vld [vmem:[#allocation2 + $0x138] sm:$0xff]
        %v1632 = vld [vmem:[#allocation2 + $0x140] sm:$0xff]
        %v1633 = vld [vmem:[#allocation2 + $0x150] sm:$0xff]
        %v1634 = vld [vmem:[#allocation2 + $0x158] sm:$0xff]
        %v1635 = vld [vmem:[#allocation2 + $0x168] sm:$0xff]
        %v1636 = vld [vmem:[#allocation2 + $0x170] sm:$0xff]
        %s1637 = scalar_lea.vmem %s1, 16
        %v1638 = vld [vmem:[%s1637] sm:$0x1]
        %v1639 = vlaneseq
        %v1640 = vshrl.u32 %v1639, 7
        %v1641 = vsub.s32 0, %v1640
        %v1642 = vrot.slane %v1638, %v1641
        %v1643 = vmul.f32 %v1605, %v1642
        %v1644 = vmul.f32 %v1606, %v1642
        %v1645 = vmul.f32 %v1607, %v1642
        %v1646 = vmul.f32 %v1608, %v1642
        %v1647 = vmul.f32 %v1609, %v1642
        %v1648 = vmul.f32 %v1610, %v1642
        %v1649 = vmul.f32 %v1611, %v1642
        %v1650 = vmul.f32 %v1612, %v1642
        %v1651 = vmul.f32 %v1613, %v1642
        %v1652 = vmul.f32 %v1614, %v1642
        %v1653 = vmul.f32 %v1615, %v1642
        %v1654 = vmul.f32 %v1616, %v1642
        %v1655 = vmul.f32 %v1617, %v1642
        %v1656 = vmul.f32 %v1618, %v1642
        %v1657 = vmul.f32 %v1619, %v1642
        %v1658 = vmul.f32 %v1620, %v1642
        %v1659 = vmul.f32 %v1621, %v1642
        %v1660 = vmul.f32 %v1622, %v1642
        %v1661 = vmul.f32 %v1623, %v1642
        %v1662 = vmul.f32 %v1624, %v1642
        %v1663 = vmul.f32 %v1625, %v1642
        %v1664 = vmul.f32 %v1626, %v1642
        %v1665 = vmul.f32 %v1627, %v1642
        %v1666 = vmul.f32 %v1628, %v1642
        %v1667 = vmul.f32 %v1629, %v1642
        %v1668 = vmul.f32 %v1630, %v1642
        %v1669 = vmul.f32 %v1631, %v1642
        %v1670 = vmul.f32 %v1632, %v1642
        %v1671 = vmul.f32 %v1633, %v1642
        %v1672 = vmul.f32 %v1634, %v1642
        %v1673 = vmul.f32 %v1635, %v1642
        %v1674 = vmul.f32 %v1636, %v1642
        %v1675 = vld [vmem:[#allocation2 + $0x1] sm:$0xff]
        %v1676 = vld [vmem:[#allocation2 + $0x9] sm:$0xff]
        %v1677 = vld [vmem:[#allocation2 + $0x19] sm:$0xff]
        %v1678 = vld [vmem:[#allocation2 + $0x21] sm:$0xff]
        %v1679 = vld [vmem:[#allocation2 + $0x31] sm:$0xff]
        %v1680 = vld [vmem:[#allocation2 + $0x39] sm:$0xff]
        %v1681 = vld [vmem:[#allocation2 + $0x49] sm:$0xff]
        %v1682 = vld [vmem:[#allocation2 + $0x51] sm:$0xff]
        %v1683 = vld [vmem:[#allocation2 + $0x61] sm:$0xff]
        %v1684 = vld [vmem:[#allocation2 + $0x69] sm:$0xff]
        %v1685 = vld [vmem:[#allocation2 + $0x79] sm:$0xff]
        %v1686 = vld [vmem:[#allocation2 + $0x81] sm:$0xff]
        %v1687 = vld [vmem:[#allocation2 + $0x91] sm:$0xff]
        %v1688 = vld [vmem:[#allocation2 + $0x99] sm:$0xff]
        %v1689 = vld [vmem:[#allocation2 + $0xa9] sm:$0xff]
        %v1690 = vld [vmem:[#allocation2 + $0xb1] sm:$0xff]
        %v1691 = vld [vmem:[#allocation2 + $0xc1] sm:$0xff]
        %v1692 = vld [vmem:[#allocation2 + $0xc9] sm:$0xff]
        %v1693 = vld [vmem:[#allocation2 + $0xd9] sm:$0xff]
        %v1694 = vld [vmem:[#allocation2 + $0xe1] sm:$0xff]
        %v1695 = vld [vmem:[#allocation2 + $0xf1] sm:$0xff]
        %v1696 = vld [vmem:[#allocation2 + $0xf9] sm:$0xff]
        %v1697 = vld [vmem:[#allocation2 + $0x109] sm:$0xff]
        %v1698 = vld [vmem:[#allocation2 + $0x111] sm:$0xff]
        %v1699 = vld [vmem:[#allocation2 + $0x121] sm:$0xff]
        %v1700 = vld [vmem:[#allocation2 + $0x129] sm:$0xff]
        %v1701 = vld [vmem:[#allocation2 + $0x139] sm:$0xff]
        %v1702 = vld [vmem:[#allocation2 + $0x141] sm:$0xff]
        %v1703 = vld [vmem:[#allocation2 + $0x151] sm:$0xff]
        %v1704 = vld [vmem:[#allocation2 + $0x159] sm:$0xff]
        %v1705 = vld [vmem:[#allocation2 + $0x169] sm:$0xff]
        %v1706 = vld [vmem:[#allocation2 + $0x171] sm:$0xff]
        %v1707 = vld [vmem:[%s1637 + $0x1] sm:$0x1]
        %v1708 = vlaneseq
        %v1709 = vshrl.u32 %v1708, 7
        %v1710 = vsub.s32 0, %v1709
        %v1711 = vrot.slane %v1707, %v1710
        %v1712 = vmul.f32 %v1675, %v1711
        %v1713 = vmul.f32 %v1676, %v1711
        %v1714 = vmul.f32 %v1677, %v1711
        %v1715 = vmul.f32 %v1678, %v1711
        %v1716 = vmul.f32 %v1679, %v1711
        %v1717 = vmul.f32 %v1680, %v1711
        %v1718 = vmul.f32 %v1681, %v1711
        %v1719 = vmul.f32 %v1682, %v1711
        %v1720 = vmul.f32 %v1683, %v1711
        %v1721 = vmul.f32 %v1684, %v1711
        %v1722 = vmul.f32 %v1685, %v1711
        %v1723 = vmul.f32 %v1686, %v1711
        %v1724 = vmul.f32 %v1687, %v1711
        %v1725 = vmul.f32 %v1688, %v1711
        %v1726 = vmul.f32 %v1689, %v1711
        %v1727 = vmul.f32 %v1690, %v1711
        %v1728 = vmul.f32 %v1691, %v1711
        %v1729 = vmul.f32 %v1692, %v1711
        %v1730 = vmul.f32 %v1693, %v1711
        %v1731 = vmul.f32 %v1694, %v1711
        %v1732 = vmul.f32 %v1695, %v1711
        %v1733 = vmul.f32 %v1696, %v1711
        %v1734 = vmul.f32 %v1697, %v1711
        %v1735 = vmul.f32 %v1698, %v1711
        %v1736 = vmul.f32 %v1699, %v1711
        %v1737 = vmul.f32 %v1700, %v1711
        %v1738 = vmul.f32 %v1701, %v1711
        %v1739 = vmul.f32 %v1702, %v1711
        %v1740 = vmul.f32 %v1703, %v1711
        %v1741 = vmul.f32 %v1704, %v1711
        %v1742 = vmul.f32 %v1705, %v1711
        %v1743 = vmul.f32 %v1706, %v1711
        %v1744 = vadd.f32 %v1643, %v1712
        %v1745 = vadd.f32 %v1644, %v1713
        %v1746 = vadd.f32 %v1645, %v1714
        %v1747 = vadd.f32 %v1646, %v1715
        %v1748 = vadd.f32 %v1647, %v1716
        %v1749 = vadd.f32 %v1648, %v1717
        %v1750 = vadd.f32 %v1649, %v1718
        %v1751 = vadd.f32 %v1650, %v1719
        %v1752 = vadd.f32 %v1651, %v1720
        %v1753 = vadd.f32 %v1652, %v1721
        %v1754 = vadd.f32 %v1653, %v1722
        %v1755 = vadd.f32 %v1654, %v1723
        %v1756 = vadd.f32 %v1655, %v1724
        %v1757 = vadd.f32 %v1656, %v1725
        %v1758 = vadd.f32 %v1657, %v1726
        %v1759 = vadd.f32 %v1658, %v1727
        %v1760 = vadd.f32 %v1659, %v1728
        %v1761 = vadd.f32 %v1660, %v1729
        %v1762 = vadd.f32 %v1661, %v1730
        %v1763 = vadd.f32 %v1662, %v1731
        %v1764 = vadd.f32 %v1663, %v1732
        %v1765 = vadd.f32 %v1664, %v1733
        %v1766 = vadd.f32 %v1665, %v1734
        %v1767 = vadd.f32 %v1666, %v1735
        %v1768 = vadd.f32 %v1667, %v1736
        %v1769 = vadd.f32 %v1668, %v1737
        %v1770 = vadd.f32 %v1669, %v1738
        %v1771 = vadd.f32 %v1670, %v1739
        %v1772 = vadd.f32 %v1671, %v1740
        %v1773 = vadd.f32 %v1672, %v1741
        %v1774 = vadd.f32 %v1673, %v1742
        %v1775 = vadd.f32 %v1674, %v1743
        %v1776 = vld [vmem:[#allocation2 + $0x2] sm:$0xff]
        %v1777 = vld [vmem:[#allocation2 + $0xa] sm:$0xff]
        %v1778 = vld [vmem:[#allocation2 + $0x1a] sm:$0xff]
        %v1779 = vld [vmem:[#allocation2 + $0x22] sm:$0xff]
        %v1780 = vld [vmem:[#allocation2 + $0x32] sm:$0xff]
        %v1781 = vld [vmem:[#allocation2 + $0x3a] sm:$0xff]
        %v1782 = vld [vmem:[#allocation2 + $0x4a] sm:$0xff]
        %v1783 = vld [vmem:[#allocation2 + $0x52] sm:$0xff]
        %v1784 = vld [vmem:[#allocation2 + $0x62] sm:$0xff]
        %v1785 = vld [vmem:[#allocation2 + $0x6a] sm:$0xff]
        %v1786 = vld [vmem:[#allocation2 + $0x7a] sm:$0xff]
        %v1787 = vld [vmem:[#allocation2 + $0x82] sm:$0xff]
        %v1788 = vld [vmem:[#allocation2 + $0x92] sm:$0xff]
        %v1789 = vld [vmem:[#allocation2 + $0x9a] sm:$0xff]
        %v1790 = vld [vmem:[#allocation2 + $0xaa] sm:$0xff]
        %v1791 = vld [vmem:[#allocation2 + $0xb2] sm:$0xff]
        %v1792 = vld [vmem:[#allocation2 + $0xc2] sm:$0xff]
        %v1793 = vld [vmem:[#allocation2 + $0xca] sm:$0xff]
        %v1794 = vld [vmem:[#allocation2 + $0xda] sm:$0xff]
        %v1795 = vld [vmem:[#allocation2 + $0xe2] sm:$0xff]
        %v1796 = vld [vmem:[#allocation2 + $0xf2] sm:$0xff]
        %v1797 = vld [vmem:[#allocation2 + $0xfa] sm:$0xff]
        %v1798 = vld [vmem:[#allocation2 + $0x10a] sm:$0xff]
        %v1799 = vld [vmem:[#allocation2 + $0x112] sm:$0xff]
        %v1800 = vld [vmem:[#allocation2 + $0x122] sm:$0xff]
        %v1801 = vld [vmem:[#allocation2 + $0x12a] sm:$0xff]
        %v1802 = vld [vmem:[#allocation2 + $0x13a] sm:$0xff]
        %v1803 = vld [vmem:[#allocation2 + $0x142] sm:$0xff]
        %v1804 = vld [vmem:[#allocation2 + $0x152] sm:$0xff]
        %v1805 = vld [vmem:[#allocation2 + $0x15a] sm:$0xff]
        %v1806 = vld [vmem:[#allocation2 + $0x16a] sm:$0xff]
        %v1807 = vld [vmem:[#allocation2 + $0x172] sm:$0xff]
        %v1808 = vld [vmem:[%s1637 + $0x2] sm:$0x1]
        %v1809 = vlaneseq
        %v1810 = vshrl.u32 %v1809, 7
        %v1811 = vsub.s32 0, %v1810
        %v1812 = vrot.slane %v1808, %v1811
        %v1813 = vmul.f32 %v1776, %v1812
        %v1814 = vmul.f32 %v1777, %v1812
        %v1815 = vmul.f32 %v1778, %v1812
        %v1816 = vmul.f32 %v1779, %v1812
        %v1817 = vmul.f32 %v1780, %v1812
        %v1818 = vmul.f32 %v1781, %v1812
        %v1819 = vmul.f32 %v1782, %v1812
        %v1820 = vmul.f32 %v1783, %v1812
        %v1821 = vmul.f32 %v1784, %v1812
        %v1822 = vmul.f32 %v1785, %v1812
        %v1823 = vmul.f32 %v1786, %v1812
        %v1824 = vmul.f32 %v1787, %v1812
        %v1825 = vmul.f32 %v1788, %v1812
        %v1826 = vmul.f32 %v1789, %v1812
        %v1827 = vmul.f32 %v1790, %v1812
        %v1828 = vmul.f32 %v1791, %v1812
        %v1829 = vmul.f32 %v1792, %v1812
        %v1830 = vmul.f32 %v1793, %v1812
        %v1831 = vmul.f32 %v1794, %v1812
        %v1832 = vmul.f32 %v1795, %v1812
        %v1833 = vmul.f32 %v1796, %v1812
        %v1834 = vmul.f32 %v1797, %v1812
        %v1835 = vmul.f32 %v1798, %v1812
        %v1836 = vmul.f32 %v1799, %v1812
        %v1837 = vmul.f32 %v1800, %v1812
        %v1838 = vmul.f32 %v1801, %v1812
        %v1839 = vmul.f32 %v1802, %v1812
        %v1840 = vmul.f32 %v1803, %v1812
        %v1841 = vmul.f32 %v1804, %v1812
        %v1842 = vmul.f32 %v1805, %v1812
        %v1843 = vmul.f32 %v1806, %v1812
        %v1844 = vmul.f32 %v1807, %v1812
        %v1845 = vadd.f32 %v1744, %v1813
        %v1846 = vadd.f32 %v1745, %v1814
        %v1847 = vadd.f32 %v1746, %v1815
        %v1848 = vadd.f32 %v1747, %v1816
        %v1849 = vadd.f32 %v1748, %v1817
        %v1850 = vadd.f32 %v1749, %v1818
        %v1851 = vadd.f32 %v1750, %v1819
        %v1852 = vadd.f32 %v1751, %v1820
        %v1853 = vadd.f32 %v1752, %v1821
        %v1854 = vadd.f32 %v1753, %v1822
        %v1855 = vadd.f32 %v1754, %v1823
        %v1856 = vadd.f32 %v1755, %v1824
        %v1857 = vadd.f32 %v1756, %v1825
        %v1858 = vadd.f32 %v1757, %v1826
        %v1859 = vadd.f32 %v1758, %v1827
        %v1860 = vadd.f32 %v1759, %v1828
        %v1861 = vadd.f32 %v1760, %v1829
        %v1862 = vadd.f32 %v1761, %v1830
        %v1863 = vadd.f32 %v1762, %v1831
        %v1864 = vadd.f32 %v1763, %v1832
        %v1865 = vadd.f32 %v1764, %v1833
        %v1866 = vadd.f32 %v1765, %v1834
        %v1867 = vadd.f32 %v1766, %v1835
        %v1868 = vadd.f32 %v1767, %v1836
        %v1869 = vadd.f32 %v1768, %v1837
        %v1870 = vadd.f32 %v1769, %v1838
        %v1871 = vadd.f32 %v1770, %v1839
        %v1872 = vadd.f32 %v1771, %v1840
        %v1873 = vadd.f32 %v1772, %v1841
        %v1874 = vadd.f32 %v1773, %v1842
        %v1875 = vadd.f32 %v1774, %v1843
        %v1876 = vadd.f32 %v1775, %v1844
        %v1877 = vld [vmem:[%s350] sm:$0xff]
        %v1878 = vld [vmem:[%s350 + $0x8] sm:$0xff]
        %v1879 = vld [vmem:[%s350 + $0x18] sm:$0xff]
        %v1880 = vld [vmem:[%s350 + $0x20] sm:$0xff]
        %v1881 = vld [vmem:[%s350 + $0x30] sm:$0xff]
        %v1882 = vld [vmem:[%s350 + $0x38] sm:$0xff]
        %v1883 = vld [vmem:[%s350 + $0x48] sm:$0xff]
        %v1884 = vld [vmem:[%s350 + $0x50] sm:$0xff]
        %v1885 = vld [vmem:[%s350 + $0x60] sm:$0xff]
        %v1886 = vld [vmem:[%s350 + $0x68] sm:$0xff]
        %v1887 = vld [vmem:[%s350 + $0x78] sm:$0xff]
        %v1888 = vld [vmem:[%s350 + $0x80] sm:$0xff]
        %v1889 = vld [vmem:[%s350 + $0x90] sm:$0xff]
        %v1890 = vld [vmem:[%s350 + $0x98] sm:$0xff]
        %v1891 = vld [vmem:[%s350 + $0xa8] sm:$0xff]
        %v1892 = vld [vmem:[%s350 + $0xb0] sm:$0xff]
        %v1893 = vld [vmem:[%s350 + $0xc0] sm:$0xff]
        %v1894 = vld [vmem:[%s350 + $0xc8] sm:$0xff]
        %v1895 = vld [vmem:[%s350 + $0xd8] sm:$0xff]
        %v1896 = vld [vmem:[%s350 + $0xe0] sm:$0xff]
        %v1897 = vld [vmem:[%s350 + $0xf0] sm:$0xff]
        %v1898 = vld [vmem:[%s350 + $0xf8] sm:$0xff]
        %v1899 = vld [vmem:[%s350 + $0x108] sm:$0xff]
        %v1900 = vld [vmem:[%s350 + $0x110] sm:$0xff]
        %v1901 = vld [vmem:[%s350 + $0x120] sm:$0xff]
        %v1902 = vld [vmem:[%s350 + $0x128] sm:$0xff]
        %v1903 = vld [vmem:[%s350 + $0x138] sm:$0xff]
        %v1904 = vld [vmem:[%s350 + $0x140] sm:$0xff]
        %v1905 = vld [vmem:[%s350 + $0x150] sm:$0xff]
        %v1906 = vld [vmem:[%s350 + $0x158] sm:$0xff]
        %v1907 = vld [vmem:[%s350 + $0x168] sm:$0xff]
        %v1908 = vld [vmem:[%s350 + $0x170] sm:$0xff]
        %v1909 = vld [vmem:[%s1637 + $0x3] sm:$0x1]
        %v1910 = vlaneseq
        %v1911 = vshrl.u32 %v1910, 7
        %v1912 = vsub.s32 0, %v1911
        %v1913 = vrot.slane %v1909, %v1912
        %v1914 = vmul.f32 %v1877, %v1913
        %v1915 = vmul.f32 %v1878, %v1913
        %v1916 = vmul.f32 %v1879, %v1913
        %v1917 = vmul.f32 %v1880, %v1913
        %v1918 = vmul.f32 %v1881, %v1913
        %v1919 = vmul.f32 %v1882, %v1913
        %v1920 = vmul.f32 %v1883, %v1913
        %v1921 = vmul.f32 %v1884, %v1913
        %v1922 = vmul.f32 %v1885, %v1913
        %v1923 = vmul.f32 %v1886, %v1913
        %v1924 = vmul.f32 %v1887, %v1913
        %v1925 = vmul.f32 %v1888, %v1913
        %v1926 = vmul.f32 %v1889, %v1913
        %v1927 = vmul.f32 %v1890, %v1913
        %v1928 = vmul.f32 %v1891, %v1913
        %v1929 = vmul.f32 %v1892, %v1913
        %v1930 = vmul.f32 %v1893, %v1913
        %v1931 = vmul.f32 %v1894, %v1913
        %v1932 = vmul.f32 %v1895, %v1913
        %v1933 = vmul.f32 %v1896, %v1913
        %v1934 = vmul.f32 %v1897, %v1913
        %v1935 = vmul.f32 %v1898, %v1913
        %v1936 = vmul.f32 %v1899, %v1913
        %v1937 = vmul.f32 %v1900, %v1913
        %v1938 = vmul.f32 %v1901, %v1913
        %v1939 = vmul.f32 %v1902, %v1913
        %v1940 = vmul.f32 %v1903, %v1913
        %v1941 = vmul.f32 %v1904, %v1913
        %v1942 = vmul.f32 %v1905, %v1913
        %v1943 = vmul.f32 %v1906, %v1913
        %v1944 = vmul.f32 %v1907, %v1913
        %v1945 = vmul.f32 %v1908, %v1913
        %v1946 = vadd.f32 %v1845, %v1914
        %v1947 = vadd.f32 %v1846, %v1915
        %v1948 = vadd.f32 %v1847, %v1916
        %v1949 = vadd.f32 %v1848, %v1917
        %v1950 = vadd.f32 %v1849, %v1918
        %v1951 = vadd.f32 %v1850, %v1919
        %v1952 = vadd.f32 %v1851, %v1920
        %v1953 = vadd.f32 %v1852, %v1921
        %v1954 = vadd.f32 %v1853, %v1922
        %v1955 = vadd.f32 %v1854, %v1923
        %v1956 = vadd.f32 %v1855, %v1924
        %v1957 = vadd.f32 %v1856, %v1925
        %v1958 = vadd.f32 %v1857, %v1926
        %v1959 = vadd.f32 %v1858, %v1927
        %v1960 = vadd.f32 %v1859, %v1928
        %v1961 = vadd.f32 %v1860, %v1929
        %v1962 = vadd.f32 %v1861, %v1930
        %v1963 = vadd.f32 %v1862, %v1931
        %v1964 = vadd.f32 %v1863, %v1932
        %v1965 = vadd.f32 %v1864, %v1933
        %v1966 = vadd.f32 %v1865, %v1934
        %v1967 = vadd.f32 %v1866, %v1935
        %v1968 = vadd.f32 %v1867, %v1936
        %v1969 = vadd.f32 %v1868, %v1937
        %v1970 = vadd.f32 %v1869, %v1938
        %v1971 = vadd.f32 %v1870, %v1939
        %v1972 = vadd.f32 %v1871, %v1940
        %v1973 = vadd.f32 %v1872, %v1941
        %v1974 = vadd.f32 %v1873, %v1942
        %v1975 = vadd.f32 %v1874, %v1943
        %v1976 = vadd.f32 %v1875, %v1944
        %v1977 = vadd.f32 %v1876, %v1945
        %v1978 = vld [vmem:[%s350 + $0x1] sm:$0xff]
        %v1979 = vld [vmem:[%s350 + $0x9] sm:$0xff]
        %v1980 = vld [vmem:[%s350 + $0x19] sm:$0xff]
        %v1981 = vld [vmem:[%s350 + $0x21] sm:$0xff]
        %v1982 = vld [vmem:[%s350 + $0x31] sm:$0xff]
        %v1983 = vld [vmem:[%s350 + $0x39] sm:$0xff]
        %v1984 = vld [vmem:[%s350 + $0x49] sm:$0xff]
        %v1985 = vld [vmem:[%s350 + $0x51] sm:$0xff]
        %v1986 = vld [vmem:[%s350 + $0x61] sm:$0xff]
        %v1987 = vld [vmem:[%s350 + $0x69] sm:$0xff]
        %v1988 = vld [vmem:[%s350 + $0x79] sm:$0xff]
        %v1989 = vld [vmem:[%s350 + $0x81] sm:$0xff]
        %v1990 = vld [vmem:[%s350 + $0x91] sm:$0xff]
        %v1991 = vld [vmem:[%s350 + $0x99] sm:$0xff]
        %v1992 = vld [vmem:[%s350 + $0xa9] sm:$0xff]
        %v1993 = vld [vmem:[%s350 + $0xb1] sm:$0xff]
        %v1994 = vld [vmem:[%s350 + $0xc1] sm:$0xff]
        %v1995 = vld [vmem:[%s350 + $0xc9] sm:$0xff]
        %v1996 = vld [vmem:[%s350 + $0xd9] sm:$0xff]
        %v1997 = vld [vmem:[%s350 + $0xe1] sm:$0xff]
        %v1998 = vld [vmem:[%s350 + $0xf1] sm:$0xff]
        %v1999 = vld [vmem:[%s350 + $0xf9] sm:$0xff]
        %v2000 = vld [vmem:[%s350 + $0x109] sm:$0xff]
        %v2001 = vld [vmem:[%s350 + $0x111] sm:$0xff]
        %v2002 = vld [vmem:[%s350 + $0x121] sm:$0xff]
        %v2003 = vld [vmem:[%s350 + $0x129] sm:$0xff]
        %v2004 = vld [vmem:[%s350 + $0x139] sm:$0xff]
        %v2005 = vld [vmem:[%s350 + $0x141] sm:$0xff]
        %v2006 = vld [vmem:[%s350 + $0x151] sm:$0xff]
        %v2007 = vld [vmem:[%s350 + $0x159] sm:$0xff]
        %v2008 = vld [vmem:[%s350 + $0x169] sm:$0xff]
        %v2009 = vld [vmem:[%s350 + $0x171] sm:$0xff]
        %v2010 = vld [vmem:[%s1637 + $0x4] sm:$0x1]
        %v2011 = vlaneseq
        %v2012 = vshrl.u32 %v2011, 7
        %v2013 = vsub.s32 0, %v2012
        %v2014 = vrot.slane %v2010, %v2013
        %v2015 = vmul.f32 %v1978, %v2014
        %v2016 = vmul.f32 %v1979, %v2014
        %v2017 = vmul.f32 %v1980, %v2014
        %v2018 = vmul.f32 %v1981, %v2014
        %v2019 = vmul.f32 %v1982, %v2014
        %v2020 = vmul.f32 %v1983, %v2014
        %v2021 = vmul.f32 %v1984, %v2014
        %v2022 = vmul.f32 %v1985, %v2014
        %v2023 = vmul.f32 %v1986, %v2014
        %v2024 = vmul.f32 %v1987, %v2014
        %v2025 = vmul.f32 %v1988, %v2014
        %v2026 = vmul.f32 %v1989, %v2014
        %v2027 = vmul.f32 %v1990, %v2014
        %v2028 = vmul.f32 %v1991, %v2014
        %v2029 = vmul.f32 %v1992, %v2014
        %v2030 = vmul.f32 %v1993, %v2014
        %v2031 = vmul.f32 %v1994, %v2014
        %v2032 = vmul.f32 %v1995, %v2014
        %v2033 = vmul.f32 %v1996, %v2014
        %v2034 = vmul.f32 %v1997, %v2014
        %v2035 = vmul.f32 %v1998, %v2014
        %v2036 = vmul.f32 %v1999, %v2014
        %v2037 = vmul.f32 %v2000, %v2014
        %v2038 = vmul.f32 %v2001, %v2014
        %v2039 = vmul.f32 %v2002, %v2014
        %v2040 = vmul.f32 %v2003, %v2014
        %v2041 = vmul.f32 %v2004, %v2014
        %v2042 = vmul.f32 %v2005, %v2014
        %v2043 = vmul.f32 %v2006, %v2014
        %v2044 = vmul.f32 %v2007, %v2014
        %v2045 = vmul.f32 %v2008, %v2014
        %v2046 = vmul.f32 %v2009, %v2014
        %v2047 = vadd.f32 %v1946, %v2015
        %v2048 = vadd.f32 %v1947, %v2016
        %v2049 = vadd.f32 %v1948, %v2017
        %v2050 = vadd.f32 %v1949, %v2018
        %v2051 = vadd.f32 %v1950, %v2019
        %v2052 = vadd.f32 %v1951, %v2020
        %v2053 = vadd.f32 %v1952, %v2021
        %v2054 = vadd.f32 %v1953, %v2022
        %v2055 = vadd.f32 %v1954, %v2023
        %v2056 = vadd.f32 %v1955, %v2024
        %v2057 = vadd.f32 %v1956, %v2025
        %v2058 = vadd.f32 %v1957, %v2026
        %v2059 = vadd.f32 %v1958, %v2027
        %v2060 = vadd.f32 %v1959, %v2028
        %v2061 = vadd.f32 %v1960, %v2029
        %v2062 = vadd.f32 %v1961, %v2030
        %v2063 = vadd.f32 %v1962, %v2031
        %v2064 = vadd.f32 %v1963, %v2032
        %v2065 = vadd.f32 %v1964, %v2033
        %v2066 = vadd.f32 %v1965, %v2034
        %v2067 = vadd.f32 %v1966, %v2035
        %v2068 = vadd.f32 %v1967, %v2036
        %v2069 = vadd.f32 %v1968, %v2037
        %v2070 = vadd.f32 %v1969, %v2038
        %v2071 = vadd.f32 %v1970, %v2039
        %v2072 = vadd.f32 %v1971, %v2040
        %v2073 = vadd.f32 %v1972, %v2041
        %v2074 = vadd.f32 %v1973, %v2042
        %v2075 = vadd.f32 %v1974, %v2043
        %v2076 = vadd.f32 %v1975, %v2044
        %v2077 = vadd.f32 %v1976, %v2045
        %v2078 = vadd.f32 %v1977, %v2046
        %v2079 = vld [vmem:[%s350 + $0x2] sm:$0xff]
        %v2080 = vld [vmem:[%s350 + $0xa] sm:$0xff]
        %v2081 = vld [vmem:[%s350 + $0x1a] sm:$0xff]
        %v2082 = vld [vmem:[%s350 + $0x22] sm:$0xff]
        %v2083 = vld [vmem:[%s350 + $0x32] sm:$0xff]
        %v2084 = vld [vmem:[%s350 + $0x3a] sm:$0xff]
        %v2085 = vld [vmem:[%s350 + $0x4a] sm:$0xff]
        %v2086 = vld [vmem:[%s350 + $0x52] sm:$0xff]
        %v2087 = vld [vmem:[%s350 + $0x62] sm:$0xff]
        %v2088 = vld [vmem:[%s350 + $0x6a] sm:$0xff]
        %v2089 = vld [vmem:[%s350 + $0x7a] sm:$0xff]
        %v2090 = vld [vmem:[%s350 + $0x82] sm:$0xff]
        %v2091 = vld [vmem:[%s350 + $0x92] sm:$0xff]
        %v2092 = vld [vmem:[%s350 + $0x9a] sm:$0xff]
        %v2093 = vld [vmem:[%s350 + $0xaa] sm:$0xff]
        %v2094 = vld [vmem:[%s350 + $0xb2] sm:$0xff]
        %v2095 = vld [vmem:[%s350 + $0xc2] sm:$0xff]
        %v2096 = vld [vmem:[%s350 + $0xca] sm:$0xff]
        %v2097 = vld [vmem:[%s350 + $0xda] sm:$0xff]
        %v2098 = vld [vmem:[%s350 + $0xe2] sm:$0xff]
        %v2099 = vld [vmem:[%s350 + $0xf2] sm:$0xff]
        %v2100 = vld [vmem:[%s350 + $0xfa] sm:$0xff]
        %v2101 = vld [vmem:[%s350 + $0x10a] sm:$0xff]
        %v2102 = vld [vmem:[%s350 + $0x112] sm:$0xff]
        %v2103 = vld [vmem:[%s350 + $0x122] sm:$0xff]
        %v2104 = vld [vmem:[%s350 + $0x12a] sm:$0xff]
        %v2105 = vld [vmem:[%s350 + $0x13a] sm:$0xff]
        %v2106 = vld [vmem:[%s350 + $0x142] sm:$0xff]
        %v2107 = vld [vmem:[%s350 + $0x152] sm:$0xff]
        %v2108 = vld [vmem:[%s350 + $0x15a] sm:$0xff]
        %v2109 = vld [vmem:[%s350 + $0x16a] sm:$0xff]
        %v2110 = vld [vmem:[%s350 + $0x172] sm:$0xff]
        %v2111 = vld [vmem:[%s1637 + $0x5] sm:$0x1]
        %v2112 = vlaneseq
        %v2113 = vshrl.u32 %v2112, 7
        %v2114 = vsub.s32 0, %v2113
        %v2115 = vrot.slane %v2111, %v2114
        %v2116 = vmul.f32 %v2079, %v2115
        %v2117 = vmul.f32 %v2080, %v2115
        %v2118 = vmul.f32 %v2081, %v2115
        %v2119 = vmul.f32 %v2082, %v2115
        %v2120 = vmul.f32 %v2083, %v2115
        %v2121 = vmul.f32 %v2084, %v2115
        %v2122 = vmul.f32 %v2085, %v2115
        %v2123 = vmul.f32 %v2086, %v2115
        %v2124 = vmul.f32 %v2087, %v2115
        %v2125 = vmul.f32 %v2088, %v2115
        %v2126 = vmul.f32 %v2089, %v2115
        %v2127 = vmul.f32 %v2090, %v2115
        %v2128 = vmul.f32 %v2091, %v2115
        %v2129 = vmul.f32 %v2092, %v2115
        %v2130 = vmul.f32 %v2093, %v2115
        %v2131 = vmul.f32 %v2094, %v2115
        %v2132 = vmul.f32 %v2095, %v2115
        %v2133 = vmul.f32 %v2096, %v2115
        %v2134 = vmul.f32 %v2097, %v2115
        %v2135 = vmul.f32 %v2098, %v2115
        %v2136 = vmul.f32 %v2099, %v2115
        %v2137 = vmul.f32 %v2100, %v2115
        %v2138 = vmul.f32 %v2101, %v2115
        %v2139 = vmul.f32 %v2102, %v2115
        %v2140 = vmul.f32 %v2103, %v2115
        %v2141 = vmul.f32 %v2104, %v2115
        %v2142 = vmul.f32 %v2105, %v2115
        %v2143 = vmul.f32 %v2106, %v2115
        %v2144 = vmul.f32 %v2107, %v2115
        %v2145 = vmul.f32 %v2108, %v2115
        %v2146 = vmul.f32 %v2109, %v2115
        %v2147 = vmul.f32 %v2110, %v2115
        %v2148 = vadd.f32 %v2047, %v2116
        %v2149 = vadd.f32 %v2048, %v2117
        %v2150 = vadd.f32 %v2049, %v2118
        %v2151 = vadd.f32 %v2050, %v2119
        %v2152 = vadd.f32 %v2051, %v2120
        %v2153 = vadd.f32 %v2052, %v2121
        %v2154 = vadd.f32 %v2053, %v2122
        %v2155 = vadd.f32 %v2054, %v2123
        %v2156 = vadd.f32 %v2055, %v2124
        %v2157 = vadd.f32 %v2056, %v2125
        %v2158 = vadd.f32 %v2057, %v2126
        %v2159 = vadd.f32 %v2058, %v2127
        %v2160 = vadd.f32 %v2059, %v2128
        %v2161 = vadd.f32 %v2060, %v2129
        %v2162 = vadd.f32 %v2061, %v2130
        %v2163 = vadd.f32 %v2062, %v2131
        %v2164 = vadd.f32 %v2063, %v2132
        %v2165 = vadd.f32 %v2064, %v2133
        %v2166 = vadd.f32 %v2065, %v2134
        %v2167 = vadd.f32 %v2066, %v2135
        %v2168 = vadd.f32 %v2067, %v2136
        %v2169 = vadd.f32 %v2068, %v2137
        %v2170 = vadd.f32 %v2069, %v2138
        %v2171 = vadd.f32 %v2070, %v2139
        %v2172 = vadd.f32 %v2071, %v2140
        %v2173 = vadd.f32 %v2072, %v2141
        %v2174 = vadd.f32 %v2073, %v2142
        %v2175 = vadd.f32 %v2074, %v2143
        %v2176 = vadd.f32 %v2075, %v2144
        %v2177 = vadd.f32 %v2076, %v2145
        %v2178 = vadd.f32 %v2077, %v2146
        %v2179 = vadd.f32 %v2078, %v2147
        %v2180 = vld [vmem:[%s957] sm:$0xff]
        %v2181 = vld [vmem:[%s957 + $0x8] sm:$0xff]
        %v2182 = vld [vmem:[%s957 + $0x18] sm:$0xff]
        %v2183 = vld [vmem:[%s957 + $0x20] sm:$0xff]
        %v2184 = vld [vmem:[%s957 + $0x30] sm:$0xff]
        %v2185 = vld [vmem:[%s957 + $0x38] sm:$0xff]
        %v2186 = vld [vmem:[%s957 + $0x48] sm:$0xff]
        %v2187 = vld [vmem:[%s957 + $0x50] sm:$0xff]
        %v2188 = vld [vmem:[%s957 + $0x60] sm:$0xff]
        %v2189 = vld [vmem:[%s957 + $0x68] sm:$0xff]
        %v2190 = vld [vmem:[%s957 + $0x78] sm:$0xff]
        %v2191 = vld [vmem:[%s957 + $0x80] sm:$0xff]
        %v2192 = vld [vmem:[%s957 + $0x90] sm:$0xff]
        %v2193 = vld [vmem:[%s957 + $0x98] sm:$0xff]
        %v2194 = vld [vmem:[%s957 + $0xa8] sm:$0xff]
        %v2195 = vld [vmem:[%s957 + $0xb0] sm:$0xff]
        %v2196 = vld [vmem:[%s957 + $0xc0] sm:$0xff]
        %v2197 = vld [vmem:[%s957 + $0xc8] sm:$0xff]
        %v2198 = vld [vmem:[%s957 + $0xd8] sm:$0xff]
        %v2199 = vld [vmem:[%s957 + $0xe0] sm:$0xff]
        %v2200 = vld [vmem:[%s957 + $0xf0] sm:$0xff]
        %v2201 = vld [vmem:[%s957 + $0xf8] sm:$0xff]
        %v2202 = vld [vmem:[%s957 + $0x108] sm:$0xff]
        %v2203 = vld [vmem:[%s957 + $0x110] sm:$0xff]
        %v2204 = vld [vmem:[%s957 + $0x120] sm:$0xff]
        %v2205 = vld [vmem:[%s957 + $0x128] sm:$0xff]
        %v2206 = vld [vmem:[%s957 + $0x138] sm:$0xff]
        %v2207 = vld [vmem:[%s957 + $0x140] sm:$0xff]
        %v2208 = vld [vmem:[%s957 + $0x150] sm:$0xff]
        %v2209 = vld [vmem:[%s957 + $0x158] sm:$0xff]
        %v2210 = vld [vmem:[%s957 + $0x168] sm:$0xff]
        %v2211 = vld [vmem:[%s957 + $0x170] sm:$0xff]
        %v2212 = vld [vmem:[%s1637 + $0x6] sm:$0x1]
        %v2213 = vlaneseq
        %v2214 = vshrl.u32 %v2213, 7
        %v2215 = vsub.s32 0, %v2214
        %v2216 = vrot.slane %v2212, %v2215
        %v2217 = vmul.f32 %v2180, %v2216
        %v2218 = vmul.f32 %v2181, %v2216
        %v2219 = vmul.f32 %v2182, %v2216
        %v2220 = vmul.f32 %v2183, %v2216
        %v2221 = vmul.f32 %v2184, %v2216
        %v2222 = vmul.f32 %v2185, %v2216
        %v2223 = vmul.f32 %v2186, %v2216
        %v2224 = vmul.f32 %v2187, %v2216
        %v2225 = vmul.f32 %v2188, %v2216
        %v2226 = vmul.f32 %v2189, %v2216
        %v2227 = vmul.f32 %v2190, %v2216
        %v2228 = vmul.f32 %v2191, %v2216
        %v2229 = vmul.f32 %v2192, %v2216
        %v2230 = vmul.f32 %v2193, %v2216
        %v2231 = vmul.f32 %v2194, %v2216
        %v2232 = vmul.f32 %v2195, %v2216
        %v2233 = vmul.f32 %v2196, %v2216
        %v2234 = vmul.f32 %v2197, %v2216
        %v2235 = vmul.f32 %v2198, %v2216
        %v2236 = vmul.f32 %v2199, %v2216
        %v2237 = vmul.f32 %v2200, %v2216
        %v2238 = vmul.f32 %v2201, %v2216
        %v2239 = vmul.f32 %v2202, %v2216
        %v2240 = vmul.f32 %v2203, %v2216
        %v2241 = vmul.f32 %v2204, %v2216
        %v2242 = vmul.f32 %v2205, %v2216
        %v2243 = vmul.f32 %v2206, %v2216
        %v2244 = vmul.f32 %v2207, %v2216
        %v2245 = vmul.f32 %v2208, %v2216
        %v2246 = vmul.f32 %v2209, %v2216
        %v2247 = vmul.f32 %v2210, %v2216
        %v2248 = vmul.f32 %v2211, %v2216
        %v2249 = vadd.f32 %v2148, %v2217
        %v2250 = vadd.f32 %v2149, %v2218
        %v2251 = vadd.f32 %v2150, %v2219
        %v2252 = vadd.f32 %v2151, %v2220
        %v2253 = vadd.f32 %v2152, %v2221
        %v2254 = vadd.f32 %v2153, %v2222
        %v2255 = vadd.f32 %v2154, %v2223
        %v2256 = vadd.f32 %v2155, %v2224
        %v2257 = vadd.f32 %v2156, %v2225
        %v2258 = vadd.f32 %v2157, %v2226
        %v2259 = vadd.f32 %v2158, %v2227
        %v2260 = vadd.f32 %v2159, %v2228
        %v2261 = vadd.f32 %v2160, %v2229
        %v2262 = vadd.f32 %v2161, %v2230
        %v2263 = vadd.f32 %v2162, %v2231
        %v2264 = vadd.f32 %v2163, %v2232
        %v2265 = vadd.f32 %v2164, %v2233
        %v2266 = vadd.f32 %v2165, %v2234
        %v2267 = vadd.f32 %v2166, %v2235
        %v2268 = vadd.f32 %v2167, %v2236
        %v2269 = vadd.f32 %v2168, %v2237
        %v2270 = vadd.f32 %v2169, %v2238
        %v2271 = vadd.f32 %v2170, %v2239
        %v2272 = vadd.f32 %v2171, %v2240
        %v2273 = vadd.f32 %v2172, %v2241
        %v2274 = vadd.f32 %v2173, %v2242
        %v2275 = vadd.f32 %v2174, %v2243
        %v2276 = vadd.f32 %v2175, %v2244
        %v2277 = vadd.f32 %v2176, %v2245
        %v2278 = vadd.f32 %v2177, %v2246
        %v2279 = vadd.f32 %v2178, %v2247
        %v2280 = vadd.f32 %v2179, %v2248
        %v2281 = vld [vmem:[%s957 + $0x1] sm:$0xff]
        %v2282 = vld [vmem:[%s957 + $0x9] sm:$0xff]
        %v2283 = vld [vmem:[%s957 + $0x19] sm:$0xff]
        %v2284 = vld [vmem:[%s957 + $0x21] sm:$0xff]
        %v2285 = vld [vmem:[%s957 + $0x31] sm:$0xff]
        %v2286 = vld [vmem:[%s957 + $0x39] sm:$0xff]
        %v2287 = vld [vmem:[%s957 + $0x49] sm:$0xff]
        %v2288 = vld [vmem:[%s957 + $0x51] sm:$0xff]
        %v2289 = vld [vmem:[%s957 + $0x61] sm:$0xff]
        %v2290 = vld [vmem:[%s957 + $0x69] sm:$0xff]
        %v2291 = vld [vmem:[%s957 + $0x79] sm:$0xff]
        %v2292 = vld [vmem:[%s957 + $0x81] sm:$0xff]
        %v2293 = vld [vmem:[%s957 + $0x91] sm:$0xff]
        %v2294 = vld [vmem:[%s957 + $0x99] sm:$0xff]
        %v2295 = vld [vmem:[%s957 + $0xa9] sm:$0xff]
        %v2296 = vld [vmem:[%s957 + $0xb1] sm:$0xff]
        %v2297 = vld [vmem:[%s957 + $0xc1] sm:$0xff]
        %v2298 = vld [vmem:[%s957 + $0xc9] sm:$0xff]
        %v2299 = vld [vmem:[%s957 + $0xd9] sm:$0xff]
        %v2300 = vld [vmem:[%s957 + $0xe1] sm:$0xff]
        %v2301 = vld [vmem:[%s957 + $0xf1] sm:$0xff]
        %v2302 = vld [vmem:[%s957 + $0xf9] sm:$0xff]
        %v2303 = vld [vmem:[%s957 + $0x109] sm:$0xff]
        %v2304 = vld [vmem:[%s957 + $0x111] sm:$0xff]
        %v2305 = vld [vmem:[%s957 + $0x121] sm:$0xff]
        %v2306 = vld [vmem:[%s957 + $0x129] sm:$0xff]
        %v2307 = vld [vmem:[%s957 + $0x139] sm:$0xff]
        %v2308 = vld [vmem:[%s957 + $0x141] sm:$0xff]
        %v2309 = vld [vmem:[%s957 + $0x151] sm:$0xff]
        %v2310 = vld [vmem:[%s957 + $0x159] sm:$0xff]
        %v2311 = vld [vmem:[%s957 + $0x169] sm:$0xff]
        %v2312 = vld [vmem:[%s957 + $0x171] sm:$0xff]
        %v2313 = vld [vmem:[%s1637 + $0x7] sm:$0x1]
        %v2314 = vlaneseq
        %v2315 = vshrl.u32 %v2314, 7
        %v2316 = vsub.s32 0, %v2315
        %v2317 = vrot.slane %v2313, %v2316
        %v2318 = vmul.f32 %v2281, %v2317
        %v2319 = vmul.f32 %v2282, %v2317
        %v2320 = vmul.f32 %v2283, %v2317
        %v2321 = vmul.f32 %v2284, %v2317
        %v2322 = vmul.f32 %v2285, %v2317
        %v2323 = vmul.f32 %v2286, %v2317
        %v2324 = vmul.f32 %v2287, %v2317
        %v2325 = vmul.f32 %v2288, %v2317
        %v2326 = vmul.f32 %v2289, %v2317
        %v2327 = vmul.f32 %v2290, %v2317
        %v2328 = vmul.f32 %v2291, %v2317
        %v2329 = vmul.f32 %v2292, %v2317
        %v2330 = vmul.f32 %v2293, %v2317
        %v2331 = vmul.f32 %v2294, %v2317
        %v2332 = vmul.f32 %v2295, %v2317
        %v2333 = vmul.f32 %v2296, %v2317
        %v2334 = vmul.f32 %v2297, %v2317
        %v2335 = vmul.f32 %v2298, %v2317
        %v2336 = vmul.f32 %v2299, %v2317
        %v2337 = vmul.f32 %v2300, %v2317
        %v2338 = vmul.f32 %v2301, %v2317
        %v2339 = vmul.f32 %v2302, %v2317
        %v2340 = vmul.f32 %v2303, %v2317
        %v2341 = vmul.f32 %v2304, %v2317
        %v2342 = vmul.f32 %v2305, %v2317
        %v2343 = vmul.f32 %v2306, %v2317
        %v2344 = vmul.f32 %v2307, %v2317
        %v2345 = vmul.f32 %v2308, %v2317
        %v2346 = vmul.f32 %v2309, %v2317
        %v2347 = vmul.f32 %v2310, %v2317
        %v2348 = vmul.f32 %v2311, %v2317
        %v2349 = vmul.f32 %v2312, %v2317
        %v2350 = vadd.f32 %v2249, %v2318
        %v2351 = vadd.f32 %v2250, %v2319
        %v2352 = vadd.f32 %v2251, %v2320
        %v2353 = vadd.f32 %v2252, %v2321
        %v2354 = vadd.f32 %v2253, %v2322
        %v2355 = vadd.f32 %v2254, %v2323
        %v2356 = vadd.f32 %v2255, %v2324
        %v2357 = vadd.f32 %v2256, %v2325
        %v2358 = vadd.f32 %v2257, %v2326
        %v2359 = vadd.f32 %v2258, %v2327
        %v2360 = vadd.f32 %v2259, %v2328
        %v2361 = vadd.f32 %v2260, %v2329
        %v2362 = vadd.f32 %v2261, %v2330
        %v2363 = vadd.f32 %v2262, %v2331
        %v2364 = vadd.f32 %v2263, %v2332
        %v2365 = vadd.f32 %v2264, %v2333
        %v2366 = vadd.f32 %v2265, %v2334
        %v2367 = vadd.f32 %v2266, %v2335
        %v2368 = vadd.f32 %v2267, %v2336
        %v2369 = vadd.f32 %v2268, %v2337
        %v2370 = vadd.f32 %v2269, %v2338
        %v2371 = vadd.f32 %v2270, %v2339
        %v2372 = vadd.f32 %v2271, %v2340
        %v2373 = vadd.f32 %v2272, %v2341
        %v2374 = vadd.f32 %v2273, %v2342
        %v2375 = vadd.f32 %v2274, %v2343
        %v2376 = vadd.f32 %v2275, %v2344
        %v2377 = vadd.f32 %v2276, %v2345
        %v2378 = vadd.f32 %v2277, %v2346
        %v2379 = vadd.f32 %v2278, %v2347
        %v2380 = vadd.f32 %v2279, %v2348
        %v2381 = vadd.f32 %v2280, %v2349
        %v2382 = vld [vmem:[%s957 + $0x2] sm:$0xff]
        %v2383 = vld [vmem:[%s957 + $0xa] sm:$0xff]
        %v2384 = vld [vmem:[%s957 + $0x1a] sm:$0xff]
        %v2385 = vld [vmem:[%s957 + $0x22] sm:$0xff]
        %v2386 = vld [vmem:[%s957 + $0x32] sm:$0xff]
        %v2387 = vld [vmem:[%s957 + $0x3a] sm:$0xff]
        %v2388 = vld [vmem:[%s957 + $0x4a] sm:$0xff]
        %v2389 = vld [vmem:[%s957 + $0x52] sm:$0xff]
        %v2390 = vld [vmem:[%s957 + $0x62] sm:$0xff]
        %v2391 = vld [vmem:[%s957 + $0x6a] sm:$0xff]
        %v2392 = vld [vmem:[%s957 + $0x7a] sm:$0xff]
        %v2393 = vld [vmem:[%s957 + $0x82] sm:$0xff]
        %v2394 = vld [vmem:[%s957 + $0x92] sm:$0xff]
        %v2395 = vld [vmem:[%s957 + $0x9a] sm:$0xff]
        %v2396 = vld [vmem:[%s957 + $0xaa] sm:$0xff]
        %v2397 = vld [vmem:[%s957 + $0xb2] sm:$0xff]
        %v2398 = vld [vmem:[%s957 + $0xc2] sm:$0xff]
        %v2399 = vld [vmem:[%s957 + $0xca] sm:$0xff]
        %v2400 = vld [vmem:[%s957 + $0xda] sm:$0xff]
        %v2401 = vld [vmem:[%s957 + $0xe2] sm:$0xff]
        %v2402 = vld [vmem:[%s957 + $0xf2] sm:$0xff]
        %v2403 = vld [vmem:[%s957 + $0xfa] sm:$0xff]
        %v2404 = vld [vmem:[%s957 + $0x10a] sm:$0xff]
        %v2405 = vld [vmem:[%s957 + $0x112] sm:$0xff]
        %v2406 = vld [vmem:[%s957 + $0x122] sm:$0xff]
        %v2407 = vld [vmem:[%s957 + $0x12a] sm:$0xff]
        %v2408 = vld [vmem:[%s957 + $0x13a] sm:$0xff]
        %v2409 = vld [vmem:[%s957 + $0x142] sm:$0xff]
        %v2410 = vld [vmem:[%s957 + $0x152] sm:$0xff]
        %v2411 = vld [vmem:[%s957 + $0x15a] sm:$0xff]
        %v2412 = vld [vmem:[%s957 + $0x16a] sm:$0xff]
        %v2413 = vld [vmem:[%s957 + $0x172] sm:$0xff]
        %v2414 = vld [vmem:[%s1637 + $0x8] sm:$0x1]
        %v2415 = vlaneseq
        %v2416 = vshrl.u32 %v2415, 7
        %v2417 = vsub.s32 0, %v2416
        %v2418 = vrot.slane %v2414, %v2417
        %v2419 = vmul.f32 %v2382, %v2418
        %v2420 = vmul.f32 %v2383, %v2418
        %v2421 = vmul.f32 %v2384, %v2418
        %v2422 = vmul.f32 %v2385, %v2418
        %v2423 = vmul.f32 %v2386, %v2418
        %v2424 = vmul.f32 %v2387, %v2418
        %v2425 = vmul.f32 %v2388, %v2418
        %v2426 = vmul.f32 %v2389, %v2418
        %v2427 = vmul.f32 %v2390, %v2418
        %v2428 = vmul.f32 %v2391, %v2418
        %v2429 = vmul.f32 %v2392, %v2418
        %v2430 = vmul.f32 %v2393, %v2418
        %v2431 = vmul.f32 %v2394, %v2418
        %v2432 = vmul.f32 %v2395, %v2418
        %v2433 = vmul.f32 %v2396, %v2418
        %v2434 = vmul.f32 %v2397, %v2418
        %v2435 = vmul.f32 %v2398, %v2418
        %v2436 = vmul.f32 %v2399, %v2418
        %v2437 = vmul.f32 %v2400, %v2418
        %v2438 = vmul.f32 %v2401, %v2418
        %v2439 = vmul.f32 %v2402, %v2418
        %v2440 = vmul.f32 %v2403, %v2418
        %v2441 = vmul.f32 %v2404, %v2418
        %v2442 = vmul.f32 %v2405, %v2418
        %v2443 = vmul.f32 %v2406, %v2418
        %v2444 = vmul.f32 %v2407, %v2418
        %v2445 = vmul.f32 %v2408, %v2418
        %v2446 = vmul.f32 %v2409, %v2418
        %v2447 = vmul.f32 %v2410, %v2418
        %v2448 = vmul.f32 %v2411, %v2418
        %v2449 = vmul.f32 %v2412, %v2418
        %v2450 = vmul.f32 %v2413, %v2418
        %v2451 = vadd.f32 %v2350, %v2419
        %v2452 = vadd.f32 %v2351, %v2420
        %v2453 = vadd.f32 %v2352, %v2421
        %v2454 = vadd.f32 %v2353, %v2422
        %v2455 = vadd.f32 %v2354, %v2423
        %v2456 = vadd.f32 %v2355, %v2424
        %v2457 = vadd.f32 %v2356, %v2425
        %v2458 = vadd.f32 %v2357, %v2426
        %v2459 = vadd.f32 %v2358, %v2427
        %v2460 = vadd.f32 %v2359, %v2428
        %v2461 = vadd.f32 %v2360, %v2429
        %v2462 = vadd.f32 %v2361, %v2430
        %v2463 = vadd.f32 %v2362, %v2431
        %v2464 = vadd.f32 %v2363, %v2432
        %v2465 = vadd.f32 %v2364, %v2433
        %v2466 = vadd.f32 %v2365, %v2434
        %v2467 = vadd.f32 %v2366, %v2435
        %v2468 = vadd.f32 %v2367, %v2436
        %v2469 = vadd.f32 %v2368, %v2437
        %v2470 = vadd.f32 %v2369, %v2438
        %v2471 = vadd.f32 %v2370, %v2439
        %v2472 = vadd.f32 %v2371, %v2440
        %v2473 = vadd.f32 %v2372, %v2441
        %v2474 = vadd.f32 %v2373, %v2442
        %v2475 = vadd.f32 %v2374, %v2443
        %v2476 = vadd.f32 %v2375, %v2444
        %v2477 = vadd.f32 %v2376, %v2445
        %v2478 = vadd.f32 %v2377, %v2446
        %v2479 = vadd.f32 %v2378, %v2447
        %v2480 = vadd.f32 %v2379, %v2448
        %v2481 = vadd.f32 %v2380, %v2449
        %v2482 = vadd.f32 %v2381, %v2450
        %v2483 = vpack.c.bf16 %v2452, %v2451
        %v2484 = vpack.c.bf16 %v2454, %v2453
        %v2485 = vpack.c.bf16 %v2456, %v2455
        %v2486 = vpack.c.bf16 %v2458, %v2457
        %v2487 = vpack.c.bf16 %v2460, %v2459
        %v2488 = vpack.c.bf16 %v2462, %v2461
        %v2489 = vpack.c.bf16 %v2464, %v2463
        %v2490 = vpack.c.bf16 %v2466, %v2465
        %v2491 = vpack.c.bf16 %v2468, %v2467
        %v2492 = vpack.c.bf16 %v2470, %v2469
        %v2493 = vpack.c.bf16 %v2472, %v2471
        %v2494 = vpack.c.bf16 %v2474, %v2473
        %v2495 = vpack.c.bf16 %v2476, %v2475
        %v2496 = vpack.c.bf16 %v2478, %v2477
        %v2497 = vpack.c.bf16 %v2480, %v2479
        %v2498 = vpack.c.bf16 %v2482, %v2481
        %s2499 = scalar_lea.vmem [#allocation6], 64
        %v2500 = vld [vmem:[%s2499] sm:$0xf]
        %v2501 = vld [vmem:[%s2499 + $0x4] sm:$0xf]
        %v2502 = vld [vmem:[%s2499 + $0x8] sm:$0xf]
        %v2503 = vld [vmem:[%s2499 + $0xc] sm:$0xf]
        %v2504 = vld [vmem:[%s2499 + $0x10] sm:$0xf]
        %v2505 = vld [vmem:[%s2499 + $0x14] sm:$0xf]
        %v2506 = vld [vmem:[%s2499 + $0x18] sm:$0xf]
        %v2507 = vld [vmem:[%s2499 + $0x1c] sm:$0xf]
        %v2508 = vld [vmem:[%s2499 + $0x20] sm:$0xf]
        %v2509 = vld [vmem:[%s2499 + $0x24] sm:$0xf]
        %v2510 = vld [vmem:[%s2499 + $0x28] sm:$0xf]
        %v2511 = vld [vmem:[%s2499 + $0x2c] sm:$0xf]
        %v2512 = vld [vmem:[%s2499 + $0x30] sm:$0xf]
        %v2513 = vld [vmem:[%s2499 + $0x34] sm:$0xf]
        %v2514 = vld [vmem:[%s2499 + $0x38] sm:$0xf]
        %v2515 = vld [vmem:[%s2499 + $0x3c] sm:$0xf]
        %v2532 = vunpack.c.l.b16 %v2500
        %v2533 = vunpack.c.l.b16 %v2501
        %v2534 = vunpack.c.l.b16 %v2502
        %v2535 = vunpack.c.l.b16 %v2503
        %v2536 = vunpack.c.l.b16 %v2504
        %v2537 = vunpack.c.l.b16 %v2505
        %v2538 = vunpack.c.l.b16 %v2506
        %v2539 = vunpack.c.l.b16 %v2507
        %v2540 = vunpack.c.l.b16 %v2508
        %v2541 = vunpack.c.l.b16 %v2509
        %v2542 = vunpack.c.l.b16 %v2510
        %v2543 = vunpack.c.l.b16 %v2511
        %v2544 = vunpack.c.l.b16 %v2512
        %v2545 = vunpack.c.l.b16 %v2513
        %v2546 = vunpack.c.l.b16 %v2514
        %v2547 = vunpack.c.l.b16 %v2515
        %v2548 = vpack.c.b16 %v2533, %v2532
        %v2549 = vpack.c.b16 %v2535, %v2534
        %v2550 = vpack.c.b16 %v2537, %v2536
        %v2551 = vpack.c.b16 %v2539, %v2538
        %v2552 = vpack.c.b16 %v2541, %v2540
        %v2553 = vpack.c.b16 %v2543, %v2542
        %v2554 = vpack.c.b16 %v2545, %v2544
        %v2555 = vpack.c.b16 %v2547, %v2546
        %2564 = vmatprep.subr.bf16.mxu0 0
        %2565 = vmatpush1.bf16.msra.mxu0 %v2555
        %2566 = vmatprep.subr.bf16.mxu0 0
        %2567 = vmatpush1.bf16.msra.mxu0 %v2554
        %2568 = vmatprep.subr.bf16.mxu0 0
        %2569 = vmatpush1.bf16.msra.mxu0 %v2553
        %2570 = vmatprep.subr.bf16.mxu0 0
        %2571 = vmatpush1.bf16.msra.mxu0 %v2552
        %2572 = vmatprep.subr.bf16.mxu0 0
        %2573 = vmatpush1.bf16.msra.mxu0 %v2551
        %2574 = vmatprep.subr.bf16.mxu0 0
        %2575 = vmatpush1.bf16.msra.mxu0 %v2550
        %2576 = vmatprep.subr.bf16.mxu0 0
        %2577 = vmatpush1.bf16.msra.mxu0 %v2549
        %2578 = vmatprep.subr.bf16.mxu0 0
        %2579 = vmatpush1.bf16.msra.mxu0 %v2548
        %2580 = vmatprep.subr.bf16.mxu0 0
        %2581 = vmatpush2.bf16.msra.mxu0 0
        %2582 = vmatprep.subr.bf16.mxu0 0
        %2583 = vmatpush2.bf16.msra.mxu0 0
        %2584 = vmatprep.subr.bf16.mxu0 0
        %2585 = vmatpush2.bf16.msra.mxu0 0
        %2586 = vmatprep.subr.bf16.mxu0 0
        %2587 = vmatpush2.bf16.msra.mxu0 0
        %2588 = vmatprep.subr.bf16.mxu0 0
        %2589 = vmatpush2.bf16.msra.mxu0 0
        %2590 = vmatprep.subr.bf16.mxu0 0
        %2591 = vmatpush2.bf16.msra.mxu0 0
        %2592 = vmatprep.subr.bf16.mxu0 0
        %2593 = vmatpush2.bf16.msra.mxu0 0
        %2594 = vmatprep.subr.bf16.mxu0 0
        %2595 = vmatpush2.bf16.msra.mxu0 0
        %2596 = vmatprep.mubr.bf16.mxu0 0
        %2597 = vmatmul.mubr.bf16.gmra.mxu0 %v2483
        %v2598 = vpop.f32.mrf.mxu0
        %v2599 = vadd.f32 0.0, %v2598
        %v2600 = vpop.f32.mrf.mxu0
        %v2601 = vpop.f32.mrf.mxu0
        %v2602 = vadd.f32 0.0, %v2601
        %v2603 = vpop.f32.mrf.mxu0
        %2604 = vmatprep.mubr.bf16.mxu0 0
        %2605 = vmatmul.mubr.bf16.gmra.mxu0 %v2484
        %v2606 = vpop.f32.mrf.mxu0
        %v2607 = vadd.f32 0.0, %v2606
        %v2608 = vpop.f32.mrf.mxu0
        %v2609 = vpop.f32.mrf.mxu0
        %v2610 = vadd.f32 0.0, %v2609
        %v2611 = vpop.f32.mrf.mxu0
        %2612 = vmatprep.mubr.bf16.mxu0 0
        %2613 = vmatmul.mubr.bf16.gmra.mxu0 %v2485
        %v2614 = vpop.f32.mrf.mxu0
        %v2615 = vadd.f32 0.0, %v2614
        %v2616 = vpop.f32.mrf.mxu0
        %v2617 = vpop.f32.mrf.mxu0
        %v2618 = vadd.f32 0.0, %v2617
        %v2619 = vpop.f32.mrf.mxu0
        %2620 = vmatprep.mubr.bf16.mxu0 0
        %2621 = vmatmul.mubr.bf16.gmra.mxu0 %v2486
        %v2622 = vpop.f32.mrf.mxu0
        %v2623 = vadd.f32 0.0, %v2622
        %v2624 = vpop.f32.mrf.mxu0
        %v2625 = vpop.f32.mrf.mxu0
        %v2626 = vadd.f32 0.0, %v2625
        %v2627 = vpop.f32.mrf.mxu0
        %2628 = vmatprep.mubr.bf16.mxu0 0
        %2629 = vmatmul.mubr.bf16.gmra.mxu0 %v2487
        %v2630 = vpop.f32.mrf.mxu0
        %v2631 = vadd.f32 0.0, %v2630
        %v2632 = vpop.f32.mrf.mxu0
        %v2633 = vpop.f32.mrf.mxu0
        %v2634 = vadd.f32 0.0, %v2633
        %v2635 = vpop.f32.mrf.mxu0
        %2636 = vmatprep.mubr.bf16.mxu0 0
        %2637 = vmatmul.mubr.bf16.gmra.mxu0 %v2488
        %v2638 = vpop.f32.mrf.mxu0
        %v2639 = vadd.f32 0.0, %v2638
        %v2640 = vpop.f32.mrf.mxu0
        %v2641 = vpop.f32.mrf.mxu0
        %v2642 = vadd.f32 0.0, %v2641
        %v2643 = vpop.f32.mrf.mxu0
        %2644 = vmatprep.mubr.bf16.mxu0 0
        %2645 = vmatmul.mubr.bf16.gmra.mxu0 %v2489
        %v2646 = vpop.f32.mrf.mxu0
        %v2647 = vadd.f32 0.0, %v2646
        %v2648 = vpop.f32.mrf.mxu0
        %v2649 = vpop.f32.mrf.mxu0
        %v2650 = vadd.f32 0.0, %v2649
        %v2651 = vpop.f32.mrf.mxu0
        %2652 = vmatprep.mubr.bf16.mxu0 0
        %2653 = vmatmul.mubr.bf16.gmra.mxu0 %v2490
        %v2654 = vpop.f32.mrf.mxu0
        %v2655 = vadd.f32 0.0, %v2654
        %v2656 = vpop.f32.mrf.mxu0
        %v2657 = vpop.f32.mrf.mxu0
        %v2658 = vadd.f32 0.0, %v2657
        %v2659 = vpop.f32.mrf.mxu0
        %2660 = vmatprep.mubr.bf16.mxu0 0
        %2661 = vmatmul.mubr.bf16.gmra.mxu0 %v2491
        %v2662 = vpop.f32.mrf.mxu0
        %v2663 = vadd.f32 0.0, %v2662
        %v2664 = vpop.f32.mrf.mxu0
        %v2665 = vpop.f32.mrf.mxu0
        %v2666 = vadd.f32 0.0, %v2665
        %v2667 = vpop.f32.mrf.mxu0
        %2668 = vmatprep.mubr.bf16.mxu0 0
        %2669 = vmatmul.mubr.bf16.gmra.mxu0 %v2492
        %v2670 = vpop.f32.mrf.mxu0
        %v2671 = vadd.f32 0.0, %v2670
        %v2672 = vpop.f32.mrf.mxu0
        %v2673 = vpop.f32.mrf.mxu0
        %v2674 = vadd.f32 0.0, %v2673
        %v2675 = vpop.f32.mrf.mxu0
        %2676 = vmatprep.mubr.bf16.mxu0 0
        %2677 = vmatmul.mubr.bf16.gmra.mxu0 %v2493
        %v2678 = vpop.f32.mrf.mxu0
        %v2679 = vadd.f32 0.0, %v2678
        %v2680 = vpop.f32.mrf.mxu0
        %v2681 = vpop.f32.mrf.mxu0
        %v2682 = vadd.f32 0.0, %v2681
        %v2683 = vpop.f32.mrf.mxu0
        %2684 = vmatprep.mubr.bf16.mxu0 0
        %2685 = vmatmul.mubr.bf16.gmra.mxu0 %v2494
        %v2686 = vpop.f32.mrf.mxu0
        %v2687 = vadd.f32 0.0, %v2686
        %v2688 = vpop.f32.mrf.mxu0
        %v2689 = vpop.f32.mrf.mxu0
        %v2690 = vadd.f32 0.0, %v2689
        %v2691 = vpop.f32.mrf.mxu0
        %2692 = vmatprep.mubr.bf16.mxu0 0
        %2693 = vmatmul.mubr.bf16.gmra.mxu0 %v2495
        %v2694 = vpop.f32.mrf.mxu0
        %v2695 = vadd.f32 0.0, %v2694
        %v2696 = vpop.f32.mrf.mxu0
        %v2697 = vpop.f32.mrf.mxu0
        %v2698 = vadd.f32 0.0, %v2697
        %v2699 = vpop.f32.mrf.mxu0
        %2700 = vmatprep.mubr.bf16.mxu0 0
        %2701 = vmatmul.mubr.bf16.gmra.mxu0 %v2496
        %v2702 = vpop.f32.mrf.mxu0
        %v2703 = vadd.f32 0.0, %v2702
        %v2704 = vpop.f32.mrf.mxu0
        %v2705 = vpop.f32.mrf.mxu0
        %v2706 = vadd.f32 0.0, %v2705
        %v2707 = vpop.f32.mrf.mxu0
        %2708 = vmatprep.mubr.bf16.mxu0 0
        %2709 = vmatmul.mubr.bf16.gmra.mxu0 %v2497
        %v2710 = vpop.f32.mrf.mxu0
        %v2711 = vadd.f32 0.0, %v2710
        %v2712 = vpop.f32.mrf.mxu0
        %v2713 = vpop.f32.mrf.mxu0
        %v2714 = vadd.f32 0.0, %v2713
        %v2715 = vpop.f32.mrf.mxu0
        %2716 = vmatprep.mubr.bf16.mxu0 0
        %2717 = vmatmul.mubr.bf16.gmra.mxu0 %v2498
        %v2718 = vpop.f32.mrf.mxu0
        %v2719 = vadd.f32 0.0, %v2718
        %v2720 = vpop.f32.mrf.mxu0
        %v2721 = vpop.f32.mrf.mxu0
        %v2722 = vadd.f32 0.0, %v2721
        %v2723 = vpop.f32.mrf.mxu0
        %2724 = vdwg.mxu0
        %s2725 = scalar_lea.vmem %s3, 1
        %v2726 = vld [vmem:[%s2725] sm:$0x1]
        %v2728 = vlaneseq
        %v2729 = vshrl.u32 %v2728, 7
        %v2730 = vsub.s32 0, %v2729
        %v2731 = vrot.slane %v2726, %v2730
        %v2733 = vadd.f32 %v2599, %v2731
        %v2734 = vadd.f32 %v2602, %v2731
        %v2735 = vadd.f32 %v2607, %v2731
        %v2736 = vadd.f32 %v2610, %v2731
        %v2737 = vadd.f32 %v2615, %v2731
        %v2738 = vadd.f32 %v2618, %v2731
        %v2739 = vadd.f32 %v2623, %v2731
        %v2740 = vadd.f32 %v2626, %v2731
        %v2741 = vadd.f32 %v2631, %v2731
        %v2742 = vadd.f32 %v2634, %v2731
        %v2743 = vadd.f32 %v2639, %v2731
        %v2744 = vadd.f32 %v2642, %v2731
        %v2745 = vadd.f32 %v2647, %v2731
        %v2746 = vadd.f32 %v2650, %v2731
        %v2747 = vadd.f32 %v2655, %v2731
        %v2748 = vadd.f32 %v2658, %v2731
        %v2749 = vadd.f32 %v2663, %v2731
        %v2750 = vadd.f32 %v2666, %v2731
        %v2751 = vadd.f32 %v2671, %v2731
        %v2752 = vadd.f32 %v2674, %v2731
        %v2753 = vadd.f32 %v2679, %v2731
        %v2754 = vadd.f32 %v2682, %v2731
        %v2755 = vadd.f32 %v2687, %v2731
        %v2756 = vadd.f32 %v2690, %v2731
        %v2757 = vadd.f32 %v2695, %v2731
        %v2758 = vadd.f32 %v2698, %v2731
        %v2759 = vadd.f32 %v2703, %v2731
        %v2760 = vadd.f32 %v2706, %v2731
        %v2761 = vadd.f32 %v2711, %v2731
        %v2762 = vadd.f32 %v2714, %v2731
        %v2763 = vadd.f32 %v2719, %v2731
        %v2764 = vadd.f32 %v2722, %v2731
        %v2765 = vmax.f32 %v2733, 0.0
        %v2766 = vmax.f32 %v2734, 0.0
        %v2767 = vmax.f32 %v2735, 0.0
        %v2768 = vmax.f32 %v2736, 0.0
        %v2769 = vmax.f32 %v2737, 0.0
        %v2770 = vmax.f32 %v2738, 0.0
        %v2771 = vmax.f32 %v2739, 0.0
        %v2772 = vmax.f32 %v2740, 0.0
        %v2773 = vmax.f32 %v2741, 0.0
        %v2774 = vmax.f32 %v2742, 0.0
        %v2775 = vmax.f32 %v2743, 0.0
        %v2776 = vmax.f32 %v2744, 0.0
        %v2777 = vmax.f32 %v2745, 0.0
        %v2778 = vmax.f32 %v2746, 0.0
        %v2779 = vmax.f32 %v2747, 0.0
        %v2780 = vmax.f32 %v2748, 0.0
        %v2781 = vmax.f32 %v2749, 0.0
        %v2782 = vmax.f32 %v2750, 0.0
        %v2783 = vmax.f32 %v2751, 0.0
        %v2784 = vmax.f32 %v2752, 0.0
        %v2785 = vmax.f32 %v2753, 0.0
        %v2786 = vmax.f32 %v2754, 0.0
        %v2787 = vmax.f32 %v2755, 0.0
        %v2788 = vmax.f32 %v2756, 0.0
        %v2789 = vmax.f32 %v2757, 0.0
        %v2790 = vmax.f32 %v2758, 0.0
        %v2791 = vmax.f32 %v2759, 0.0
        %v2792 = vmax.f32 %v2760, 0.0
        %v2793 = vmax.f32 %v2761, 0.0
        %v2794 = vmax.f32 %v2762, 0.0
        %v2795 = vmax.f32 %v2763, 0.0
        %v2796 = vmax.f32 %v2764, 0.0
        %2797 = vst [vmem:[%s350 + $0x1] sm:$0xff] %v2765
        %2798 = vst [vmem:[%s350 + $0x9] sm:$0xff] %v2766
        %2799 = vst [vmem:[%s350 + $0x19] sm:$0xff] %v2767
        %2800 = vst [vmem:[%s350 + $0x21] sm:$0xff] %v2768
        %2801 = vst [vmem:[%s350 + $0x31] sm:$0xff] %v2769
        %2802 = vst [vmem:[%s350 + $0x39] sm:$0xff] %v2770
        %2803 = vst [vmem:[%s350 + $0x49] sm:$0xff] %v2771
        %2804 = vst [vmem:[%s350 + $0x51] sm:$0xff] %v2772
        %2805 = vst [vmem:[%s350 + $0x61] sm:$0xff] %v2773
        %2806 = vst [vmem:[%s350 + $0x69] sm:$0xff] %v2774
        %2807 = vst [vmem:[%s350 + $0x79] sm:$0xff] %v2775
        %2808 = vst [vmem:[%s350 + $0x81] sm:$0xff] %v2776
        %2809 = vst [vmem:[%s350 + $0x91] sm:$0xff] %v2777
        %2810 = vst [vmem:[%s350 + $0x99] sm:$0xff] %v2778
        %2811 = vst [vmem:[%s350 + $0xa9] sm:$0xff] %v2779
        %2812 = vst [vmem:[%s350 + $0xb1] sm:$0xff] %v2780
        %2813 = vst [vmem:[%s350 + $0xc1] sm:$0xff] %v2781
        %2814 = vst [vmem:[%s350 + $0xc9] sm:$0xff] %v2782
        %2815 = vst [vmem:[%s350 + $0xd9] sm:$0xff] %v2783
        %2816 = vst [vmem:[%s350 + $0xe1] sm:$0xff] %v2784
        %2817 = vst [vmem:[%s350 + $0xf1] sm:$0xff] %v2785
        %2818 = vst [vmem:[%s350 + $0xf9] sm:$0xff] %v2786
        %2819 = vst [vmem:[%s350 + $0x109] sm:$0xff] %v2787
        %2820 = vst [vmem:[%s350 + $0x111] sm:$0xff] %v2788
        %2821 = vst [vmem:[%s350 + $0x121] sm:$0xff] %v2789
        %2822 = vst [vmem:[%s350 + $0x129] sm:$0xff] %v2790
        %2823 = vst [vmem:[%s350 + $0x139] sm:$0xff] %v2791
        %2824 = vst [vmem:[%s350 + $0x141] sm:$0xff] %v2792
        %2825 = vst [vmem:[%s350 + $0x151] sm:$0xff] %v2793
        %2826 = vst [vmem:[%s350 + $0x159] sm:$0xff] %v2794
        %2827 = vst [vmem:[%s350 + $0x169] sm:$0xff] %v2795
        %2828 = vst [vmem:[%s350 + $0x171] sm:$0xff] %v2796
        %v2829 = vld [vmem:[#allocation2] sm:$0xff]
        %v2830 = vld [vmem:[#allocation2 + $0x8] sm:$0xff]
        %v2831 = vld [vmem:[#allocation2 + $0x18] sm:$0xff]
        %v2832 = vld [vmem:[#allocation2 + $0x20] sm:$0xff]
        %v2833 = vld [vmem:[#allocation2 + $0x30] sm:$0xff]
        %v2834 = vld [vmem:[#allocation2 + $0x38] sm:$0xff]
        %v2835 = vld [vmem:[#allocation2 + $0x48] sm:$0xff]
        %v2836 = vld [vmem:[#allocation2 + $0x50] sm:$0xff]
        %v2837 = vld [vmem:[#allocation2 + $0x60] sm:$0xff]
        %v2838 = vld [vmem:[#allocation2 + $0x68] sm:$0xff]
        %v2839 = vld [vmem:[#allocation2 + $0x78] sm:$0xff]
        %v2840 = vld [vmem:[#allocation2 + $0x80] sm:$0xff]
        %v2841 = vld [vmem:[#allocation2 + $0x90] sm:$0xff]
        %v2842 = vld [vmem:[#allocation2 + $0x98] sm:$0xff]
        %v2843 = vld [vmem:[#allocation2 + $0xa8] sm:$0xff]
        %v2844 = vld [vmem:[#allocation2 + $0xb0] sm:$0xff]
        %v2845 = vld [vmem:[#allocation2 + $0xc0] sm:$0xff]
        %v2846 = vld [vmem:[#allocation2 + $0xc8] sm:$0xff]
        %v2847 = vld [vmem:[#allocation2 + $0xd8] sm:$0xff]
        %v2848 = vld [vmem:[#allocation2 + $0xe0] sm:$0xff]
        %v2849 = vld [vmem:[#allocation2 + $0xf0] sm:$0xff]
        %v2850 = vld [vmem:[#allocation2 + $0xf8] sm:$0xff]
        %v2851 = vld [vmem:[#allocation2 + $0x108] sm:$0xff]
        %v2852 = vld [vmem:[#allocation2 + $0x110] sm:$0xff]
        %v2853 = vld [vmem:[#allocation2 + $0x120] sm:$0xff]
        %v2854 = vld [vmem:[#allocation2 + $0x128] sm:$0xff]
        %v2855 = vld [vmem:[#allocation2 + $0x138] sm:$0xff]
        %v2856 = vld [vmem:[#allocation2 + $0x140] sm:$0xff]
        %v2857 = vld [vmem:[#allocation2 + $0x150] sm:$0xff]
        %v2858 = vld [vmem:[#allocation2 + $0x158] sm:$0xff]
        %v2859 = vld [vmem:[#allocation2 + $0x168] sm:$0xff]
        %v2860 = vld [vmem:[#allocation2 + $0x170] sm:$0xff]
        %s2861 = scalar_lea.vmem %s1, 32
        %v2862 = vld [vmem:[%s2861] sm:$0x1]
        %v2863 = vlaneseq
        %v2864 = vshrl.u32 %v2863, 7
        %v2865 = vsub.s32 0, %v2864
        %v2866 = vrot.slane %v2862, %v2865
        %v2867 = vmul.f32 %v2829, %v2866
        %v2868 = vmul.f32 %v2830, %v2866
        %v2869 = vmul.f32 %v2831, %v2866
        %v2870 = vmul.f32 %v2832, %v2866
        %v2871 = vmul.f32 %v2833, %v2866
        %v2872 = vmul.f32 %v2834, %v2866
        %v2873 = vmul.f32 %v2835, %v2866
        %v2874 = vmul.f32 %v2836, %v2866
        %v2875 = vmul.f32 %v2837, %v2866
        %v2876 = vmul.f32 %v2838, %v2866
        %v2877 = vmul.f32 %v2839, %v2866
        %v2878 = vmul.f32 %v2840, %v2866
        %v2879 = vmul.f32 %v2841, %v2866
        %v2880 = vmul.f32 %v2842, %v2866
        %v2881 = vmul.f32 %v2843, %v2866
        %v2882 = vmul.f32 %v2844, %v2866
        %v2883 = vmul.f32 %v2845, %v2866
        %v2884 = vmul.f32 %v2846, %v2866
        %v2885 = vmul.f32 %v2847, %v2866
        %v2886 = vmul.f32 %v2848, %v2866
        %v2887 = vmul.f32 %v2849, %v2866
        %v2888 = vmul.f32 %v2850, %v2866
        %v2889 = vmul.f32 %v2851, %v2866
        %v2890 = vmul.f32 %v2852, %v2866
        %v2891 = vmul.f32 %v2853, %v2866
        %v2892 = vmul.f32 %v2854, %v2866
        %v2893 = vmul.f32 %v2855, %v2866
        %v2894 = vmul.f32 %v2856, %v2866
        %v2895 = vmul.f32 %v2857, %v2866
        %v2896 = vmul.f32 %v2858, %v2866
        %v2897 = vmul.f32 %v2859, %v2866
        %v2898 = vmul.f32 %v2860, %v2866
        %v2899 = vld [vmem:[#allocation2 + $0x1] sm:$0xff]
        %v2900 = vld [vmem:[#allocation2 + $0x9] sm:$0xff]
        %v2901 = vld [vmem:[#allocation2 + $0x19] sm:$0xff]
        %v2902 = vld [vmem:[#allocation2 + $0x21] sm:$0xff]
        %v2903 = vld [vmem:[#allocation2 + $0x31] sm:$0xff]
        %v2904 = vld [vmem:[#allocation2 + $0x39] sm:$0xff]
        %v2905 = vld [vmem:[#allocation2 + $0x49] sm:$0xff]
        %v2906 = vld [vmem:[#allocation2 + $0x51] sm:$0xff]
        %v2907 = vld [vmem:[#allocation2 + $0x61] sm:$0xff]
        %v2908 = vld [vmem:[#allocation2 + $0x69] sm:$0xff]
        %v2909 = vld [vmem:[#allocation2 + $0x79] sm:$0xff]
        %v2910 = vld [vmem:[#allocation2 + $0x81] sm:$0xff]
        %v2911 = vld [vmem:[#allocation2 + $0x91] sm:$0xff]
        %v2912 = vld [vmem:[#allocation2 + $0x99] sm:$0xff]
        %v2913 = vld [vmem:[#allocation2 + $0xa9] sm:$0xff]
        %v2914 = vld [vmem:[#allocation2 + $0xb1] sm:$0xff]
        %v2915 = vld [vmem:[#allocation2 + $0xc1] sm:$0xff]
        %v2916 = vld [vmem:[#allocation2 + $0xc9] sm:$0xff]
        %v2917 = vld [vmem:[#allocation2 + $0xd9] sm:$0xff]
        %v2918 = vld [vmem:[#allocation2 + $0xe1] sm:$0xff]
        %v2919 = vld [vmem:[#allocation2 + $0xf1] sm:$0xff]
        %v2920 = vld [vmem:[#allocation2 + $0xf9] sm:$0xff]
        %v2921 = vld [vmem:[#allocation2 + $0x109] sm:$0xff]
        %v2922 = vld [vmem:[#allocation2 + $0x111] sm:$0xff]
        %v2923 = vld [vmem:[#allocation2 + $0x121] sm:$0xff]
        %v2924 = vld [vmem:[#allocation2 + $0x129] sm:$0xff]
        %v2925 = vld [vmem:[#allocation2 + $0x139] sm:$0xff]
        %v2926 = vld [vmem:[#allocation2 + $0x141] sm:$0xff]
        %v2927 = vld [vmem:[#allocation2 + $0x151] sm:$0xff]
        %v2928 = vld [vmem:[#allocation2 + $0x159] sm:$0xff]
        %v2929 = vld [vmem:[#allocation2 + $0x169] sm:$0xff]
        %v2930 = vld [vmem:[#allocation2 + $0x171] sm:$0xff]
        %v2931 = vld [vmem:[%s2861 + $0x1] sm:$0x1]
        %v2932 = vlaneseq
        %v2933 = vshrl.u32 %v2932, 7
        %v2934 = vsub.s32 0, %v2933
        %v2935 = vrot.slane %v2931, %v2934
        %v2936 = vmul.f32 %v2899, %v2935
        %v2937 = vmul.f32 %v2900, %v2935
        %v2938 = vmul.f32 %v2901, %v2935
        %v2939 = vmul.f32 %v2902, %v2935
        %v2940 = vmul.f32 %v2903, %v2935
        %v2941 = vmul.f32 %v2904, %v2935
        %v2942 = vmul.f32 %v2905, %v2935
        %v2943 = vmul.f32 %v2906, %v2935
        %v2944 = vmul.f32 %v2907, %v2935
        %v2945 = vmul.f32 %v2908, %v2935
        %v2946 = vmul.f32 %v2909, %v2935
        %v2947 = vmul.f32 %v2910, %v2935
        %v2948 = vmul.f32 %v2911, %v2935
        %v2949 = vmul.f32 %v2912, %v2935
        %v2950 = vmul.f32 %v2913, %v2935
        %v2951 = vmul.f32 %v2914, %v2935
        %v2952 = vmul.f32 %v2915, %v2935
        %v2953 = vmul.f32 %v2916, %v2935
        %v2954 = vmul.f32 %v2917, %v2935
        %v2955 = vmul.f32 %v2918, %v2935
        %v2956 = vmul.f32 %v2919, %v2935
        %v2957 = vmul.f32 %v2920, %v2935
        %v2958 = vmul.f32 %v2921, %v2935
        %v2959 = vmul.f32 %v2922, %v2935
        %v2960 = vmul.f32 %v2923, %v2935
        %v2961 = vmul.f32 %v2924, %v2935
        %v2962 = vmul.f32 %v2925, %v2935
        %v2963 = vmul.f32 %v2926, %v2935
        %v2964 = vmul.f32 %v2927, %v2935
        %v2965 = vmul.f32 %v2928, %v2935
        %v2966 = vmul.f32 %v2929, %v2935
        %v2967 = vmul.f32 %v2930, %v2935
        %v2968 = vadd.f32 %v2867, %v2936
        %v2969 = vadd.f32 %v2868, %v2937
        %v2970 = vadd.f32 %v2869, %v2938
        %v2971 = vadd.f32 %v2870, %v2939
        %v2972 = vadd.f32 %v2871, %v2940
        %v2973 = vadd.f32 %v2872, %v2941
        %v2974 = vadd.f32 %v2873, %v2942
        %v2975 = vadd.f32 %v2874, %v2943
        %v2976 = vadd.f32 %v2875, %v2944
        %v2977 = vadd.f32 %v2876, %v2945
        %v2978 = vadd.f32 %v2877, %v2946
        %v2979 = vadd.f32 %v2878, %v2947
        %v2980 = vadd.f32 %v2879, %v2948
        %v2981 = vadd.f32 %v2880, %v2949
        %v2982 = vadd.f32 %v2881, %v2950
        %v2983 = vadd.f32 %v2882, %v2951
        %v2984 = vadd.f32 %v2883, %v2952
        %v2985 = vadd.f32 %v2884, %v2953
        %v2986 = vadd.f32 %v2885, %v2954
        %v2987 = vadd.f32 %v2886, %v2955
        %v2988 = vadd.f32 %v2887, %v2956
        %v2989 = vadd.f32 %v2888, %v2957
        %v2990 = vadd.f32 %v2889, %v2958
        %v2991 = vadd.f32 %v2890, %v2959
        %v2992 = vadd.f32 %v2891, %v2960
        %v2993 = vadd.f32 %v2892, %v2961
        %v2994 = vadd.f32 %v2893, %v2962
        %v2995 = vadd.f32 %v2894, %v2963
        %v2996 = vadd.f32 %v2895, %v2964
        %v2997 = vadd.f32 %v2896, %v2965
        %v2998 = vadd.f32 %v2897, %v2966
        %v2999 = vadd.f32 %v2898, %v2967
        %v3000 = vld [vmem:[#allocation2 + $0x2] sm:$0xff]
        %v3001 = vld [vmem:[#allocation2 + $0xa] sm:$0xff]
        %v3002 = vld [vmem:[#allocation2 + $0x1a] sm:$0xff]
        %v3003 = vld [vmem:[#allocation2 + $0x22] sm:$0xff]
        %v3004 = vld [vmem:[#allocation2 + $0x32] sm:$0xff]
        %v3005 = vld [vmem:[#allocation2 + $0x3a] sm:$0xff]
        %v3006 = vld [vmem:[#allocation2 + $0x4a] sm:$0xff]
        %v3007 = vld [vmem:[#allocation2 + $0x52] sm:$0xff]
        %v3008 = vld [vmem:[#allocation2 + $0x62] sm:$0xff]
        %v3009 = vld [vmem:[#allocation2 + $0x6a] sm:$0xff]
        %v3010 = vld [vmem:[#allocation2 + $0x7a] sm:$0xff]
        %v3011 = vld [vmem:[#allocation2 + $0x82] sm:$0xff]
        %v3012 = vld [vmem:[#allocation2 + $0x92] sm:$0xff]
        %v3013 = vld [vmem:[#allocation2 + $0x9a] sm:$0xff]
        %v3014 = vld [vmem:[#allocation2 + $0xaa] sm:$0xff]
        %v3015 = vld [vmem:[#allocation2 + $0xb2] sm:$0xff]
        %v3016 = vld [vmem:[#allocation2 + $0xc2] sm:$0xff]
        %v3017 = vld [vmem:[#allocation2 + $0xca] sm:$0xff]
        %v3018 = vld [vmem:[#allocation2 + $0xda] sm:$0xff]
        %v3019 = vld [vmem:[#allocation2 + $0xe2] sm:$0xff]
        %v3020 = vld [vmem:[#allocation2 + $0xf2] sm:$0xff]
        %v3021 = vld [vmem:[#allocation2 + $0xfa] sm:$0xff]
        %v3022 = vld [vmem:[#allocation2 + $0x10a] sm:$0xff]
        %v3023 = vld [vmem:[#allocation2 + $0x112] sm:$0xff]
        %v3024 = vld [vmem:[#allocation2 + $0x122] sm:$0xff]
        %v3025 = vld [vmem:[#allocation2 + $0x12a] sm:$0xff]
        %v3026 = vld [vmem:[#allocation2 + $0x13a] sm:$0xff]
        %v3027 = vld [vmem:[#allocation2 + $0x142] sm:$0xff]
        %v3028 = vld [vmem:[#allocation2 + $0x152] sm:$0xff]
        %v3029 = vld [vmem:[#allocation2 + $0x15a] sm:$0xff]
        %v3030 = vld [vmem:[#allocation2 + $0x16a] sm:$0xff]
        %v3031 = vld [vmem:[#allocation2 + $0x172] sm:$0xff]
        %v3032 = vld [vmem:[%s2861 + $0x2] sm:$0x1]
        %v3033 = vlaneseq
        %v3034 = vshrl.u32 %v3033, 7
        %v3035 = vsub.s32 0, %v3034
        %v3036 = vrot.slane %v3032, %v3035
        %v3037 = vmul.f32 %v3000, %v3036
        %v3038 = vmul.f32 %v3001, %v3036
        %v3039 = vmul.f32 %v3002, %v3036
        %v3040 = vmul.f32 %v3003, %v3036
        %v3041 = vmul.f32 %v3004, %v3036
        %v3042 = vmul.f32 %v3005, %v3036
        %v3043 = vmul.f32 %v3006, %v3036
        %v3044 = vmul.f32 %v3007, %v3036
        %v3045 = vmul.f32 %v3008, %v3036
        %v3046 = vmul.f32 %v3009, %v3036
        %v3047 = vmul.f32 %v3010, %v3036
        %v3048 = vmul.f32 %v3011, %v3036
        %v3049 = vmul.f32 %v3012, %v3036
        %v3050 = vmul.f32 %v3013, %v3036
        %v3051 = vmul.f32 %v3014, %v3036
        %v3052 = vmul.f32 %v3015, %v3036
        %v3053 = vmul.f32 %v3016, %v3036
        %v3054 = vmul.f32 %v3017, %v3036
        %v3055 = vmul.f32 %v3018, %v3036
        %v3056 = vmul.f32 %v3019, %v3036
        %v3057 = vmul.f32 %v3020, %v3036
        %v3058 = vmul.f32 %v3021, %v3036
        %v3059 = vmul.f32 %v3022, %v3036
        %v3060 = vmul.f32 %v3023, %v3036
        %v3061 = vmul.f32 %v3024, %v3036
        %v3062 = vmul.f32 %v3025, %v3036
        %v3063 = vmul.f32 %v3026, %v3036
        %v3064 = vmul.f32 %v3027, %v3036
        %v3065 = vmul.f32 %v3028, %v3036
        %v3066 = vmul.f32 %v3029, %v3036
        %v3067 = vmul.f32 %v3030, %v3036
        %v3068 = vmul.f32 %v3031, %v3036
        %v3069 = vadd.f32 %v2968, %v3037
        %v3070 = vadd.f32 %v2969, %v3038
        %v3071 = vadd.f32 %v2970, %v3039
        %v3072 = vadd.f32 %v2971, %v3040
        %v3073 = vadd.f32 %v2972, %v3041
        %v3074 = vadd.f32 %v2973, %v3042
        %v3075 = vadd.f32 %v2974, %v3043
        %v3076 = vadd.f32 %v2975, %v3044
        %v3077 = vadd.f32 %v2976, %v3045
        %v3078 = vadd.f32 %v2977, %v3046
        %v3079 = vadd.f32 %v2978, %v3047
        %v3080 = vadd.f32 %v2979, %v3048
        %v3081 = vadd.f32 %v2980, %v3049
        %v3082 = vadd.f32 %v2981, %v3050
        %v3083 = vadd.f32 %v2982, %v3051
        %v3084 = vadd.f32 %v2983, %v3052
        %v3085 = vadd.f32 %v2984, %v3053
        %v3086 = vadd.f32 %v2985, %v3054
        %v3087 = vadd.f32 %v2986, %v3055
        %v3088 = vadd.f32 %v2987, %v3056
        %v3089 = vadd.f32 %v2988, %v3057
        %v3090 = vadd.f32 %v2989, %v3058
        %v3091 = vadd.f32 %v2990, %v3059
        %v3092 = vadd.f32 %v2991, %v3060
        %v3093 = vadd.f32 %v2992, %v3061
        %v3094 = vadd.f32 %v2993, %v3062
        %v3095 = vadd.f32 %v2994, %v3063
        %v3096 = vadd.f32 %v2995, %v3064
        %v3097 = vadd.f32 %v2996, %v3065
        %v3098 = vadd.f32 %v2997, %v3066
        %v3099 = vadd.f32 %v2998, %v3067
        %v3100 = vadd.f32 %v2999, %v3068
        %v3101 = vld [vmem:[%s350] sm:$0xff]
        %v3102 = vld [vmem:[%s350 + $0x8] sm:$0xff]
        %v3103 = vld [vmem:[%s350 + $0x18] sm:$0xff]
        %v3104 = vld [vmem:[%s350 + $0x20] sm:$0xff]
        %v3105 = vld [vmem:[%s350 + $0x30] sm:$0xff]
        %v3106 = vld [vmem:[%s350 + $0x38] sm:$0xff]
        %v3107 = vld [vmem:[%s350 + $0x48] sm:$0xff]
        %v3108 = vld [vmem:[%s350 + $0x50] sm:$0xff]
        %v3109 = vld [vmem:[%s350 + $0x60] sm:$0xff]
        %v3110 = vld [vmem:[%s350 + $0x68] sm:$0xff]
        %v3111 = vld [vmem:[%s350 + $0x78] sm:$0xff]
        %v3112 = vld [vmem:[%s350 + $0x80] sm:$0xff]
        %v3113 = vld [vmem:[%s350 + $0x90] sm:$0xff]
        %v3114 = vld [vmem:[%s350 + $0x98] sm:$0xff]
        %v3115 = vld [vmem:[%s350 + $0xa8] sm:$0xff]
        %v3116 = vld [vmem:[%s350 + $0xb0] sm:$0xff]
        %v3117 = vld [vmem:[%s350 + $0xc0] sm:$0xff]
        %v3118 = vld [vmem:[%s350 + $0xc8] sm:$0xff]
        %v3119 = vld [vmem:[%s350 + $0xd8] sm:$0xff]
        %v3120 = vld [vmem:[%s350 + $0xe0] sm:$0xff]
        %v3121 = vld [vmem:[%s350 + $0xf0] sm:$0xff]
        %v3122 = vld [vmem:[%s350 + $0xf8] sm:$0xff]
        %v3123 = vld [vmem:[%s350 + $0x108] sm:$0xff]
        %v3124 = vld [vmem:[%s350 + $0x110] sm:$0xff]
        %v3125 = vld [vmem:[%s350 + $0x120] sm:$0xff]
        %v3126 = vld [vmem:[%s350 + $0x128] sm:$0xff]
        %v3127 = vld [vmem:[%s350 + $0x138] sm:$0xff]
        %v3128 = vld [vmem:[%s350 + $0x140] sm:$0xff]
        %v3129 = vld [vmem:[%s350 + $0x150] sm:$0xff]
        %v3130 = vld [vmem:[%s350 + $0x158] sm:$0xff]
        %v3131 = vld [vmem:[%s350 + $0x168] sm:$0xff]
        %v3132 = vld [vmem:[%s350 + $0x170] sm:$0xff]
        %v3133 = vld [vmem:[%s2861 + $0x3] sm:$0x1]
        %v3134 = vlaneseq
        %v3135 = vshrl.u32 %v3134, 7
        %v3136 = vsub.s32 0, %v3135
        %v3137 = vrot.slane %v3133, %v3136
        %v3138 = vmul.f32 %v3101, %v3137
        %v3139 = vmul.f32 %v3102, %v3137
        %v3140 = vmul.f32 %v3103, %v3137
        %v3141 = vmul.f32 %v3104, %v3137
        %v3142 = vmul.f32 %v3105, %v3137
        %v3143 = vmul.f32 %v3106, %v3137
        %v3144 = vmul.f32 %v3107, %v3137
        %v3145 = vmul.f32 %v3108, %v3137
        %v3146 = vmul.f32 %v3109, %v3137
        %v3147 = vmul.f32 %v3110, %v3137
        %v3148 = vmul.f32 %v3111, %v3137
        %v3149 = vmul.f32 %v3112, %v3137
        %v3150 = vmul.f32 %v3113, %v3137
        %v3151 = vmul.f32 %v3114, %v3137
        %v3152 = vmul.f32 %v3115, %v3137
        %v3153 = vmul.f32 %v3116, %v3137
        %v3154 = vmul.f32 %v3117, %v3137
        %v3155 = vmul.f32 %v3118, %v3137
        %v3156 = vmul.f32 %v3119, %v3137
        %v3157 = vmul.f32 %v3120, %v3137
        %v3158 = vmul.f32 %v3121, %v3137
        %v3159 = vmul.f32 %v3122, %v3137
        %v3160 = vmul.f32 %v3123, %v3137
        %v3161 = vmul.f32 %v3124, %v3137
        %v3162 = vmul.f32 %v3125, %v3137
        %v3163 = vmul.f32 %v3126, %v3137
        %v3164 = vmul.f32 %v3127, %v3137
        %v3165 = vmul.f32 %v3128, %v3137
        %v3166 = vmul.f32 %v3129, %v3137
        %v3167 = vmul.f32 %v3130, %v3137
        %v3168 = vmul.f32 %v3131, %v3137
        %v3169 = vmul.f32 %v3132, %v3137
        %v3170 = vadd.f32 %v3069, %v3138
        %v3171 = vadd.f32 %v3070, %v3139
        %v3172 = vadd.f32 %v3071, %v3140
        %v3173 = vadd.f32 %v3072, %v3141
        %v3174 = vadd.f32 %v3073, %v3142
        %v3175 = vadd.f32 %v3074, %v3143
        %v3176 = vadd.f32 %v3075, %v3144
        %v3177 = vadd.f32 %v3076, %v3145
        %v3178 = vadd.f32 %v3077, %v3146
        %v3179 = vadd.f32 %v3078, %v3147
        %v3180 = vadd.f32 %v3079, %v3148
        %v3181 = vadd.f32 %v3080, %v3149
        %v3182 = vadd.f32 %v3081, %v3150
        %v3183 = vadd.f32 %v3082, %v3151
        %v3184 = vadd.f32 %v3083, %v3152
        %v3185 = vadd.f32 %v3084, %v3153
        %v3186 = vadd.f32 %v3085, %v3154
        %v3187 = vadd.f32 %v3086, %v3155
        %v3188 = vadd.f32 %v3087, %v3156
        %v3189 = vadd.f32 %v3088, %v3157
        %v3190 = vadd.f32 %v3089, %v3158
        %v3191 = vadd.f32 %v3090, %v3159
        %v3192 = vadd.f32 %v3091, %v3160
        %v3193 = vadd.f32 %v3092, %v3161
        %v3194 = vadd.f32 %v3093, %v3162
        %v3195 = vadd.f32 %v3094, %v3163
        %v3196 = vadd.f32 %v3095, %v3164
        %v3197 = vadd.f32 %v3096, %v3165
        %v3198 = vadd.f32 %v3097, %v3166
        %v3199 = vadd.f32 %v3098, %v3167
        %v3200 = vadd.f32 %v3099, %v3168
        %v3201 = vadd.f32 %v3100, %v3169
        %v3202 = vld [vmem:[%s350 + $0x1] sm:$0xff]
        %v3203 = vld [vmem:[%s350 + $0x9] sm:$0xff]
        %v3204 = vld [vmem:[%s350 + $0x19] sm:$0xff]
        %v3205 = vld [vmem:[%s350 + $0x21] sm:$0xff]
        %v3206 = vld [vmem:[%s350 + $0x31] sm:$0xff]
        %v3207 = vld [vmem:[%s350 + $0x39] sm:$0xff]
        %v3208 = vld [vmem:[%s350 + $0x49] sm:$0xff]
        %v3209 = vld [vmem:[%s350 + $0x51] sm:$0xff]
        %v3210 = vld [vmem:[%s350 + $0x61] sm:$0xff]
        %v3211 = vld [vmem:[%s350 + $0x69] sm:$0xff]
        %v3212 = vld [vmem:[%s350 + $0x79] sm:$0xff]
        %v3213 = vld [vmem:[%s350 + $0x81] sm:$0xff]
        %v3214 = vld [vmem:[%s350 + $0x91] sm:$0xff]
        %v3215 = vld [vmem:[%s350 + $0x99] sm:$0xff]
        %v3216 = vld [vmem:[%s350 + $0xa9] sm:$0xff]
        %v3217 = vld [vmem:[%s350 + $0xb1] sm:$0xff]
        %v3218 = vld [vmem:[%s350 + $0xc1] sm:$0xff]
        %v3219 = vld [vmem:[%s350 + $0xc9] sm:$0xff]
        %v3220 = vld [vmem:[%s350 + $0xd9] sm:$0xff]
        %v3221 = vld [vmem:[%s350 + $0xe1] sm:$0xff]
        %v3222 = vld [vmem:[%s350 + $0xf1] sm:$0xff]
        %v3223 = vld [vmem:[%s350 + $0xf9] sm:$0xff]
        %v3224 = vld [vmem:[%s350 + $0x109] sm:$0xff]
        %v3225 = vld [vmem:[%s350 + $0x111] sm:$0xff]
        %v3226 = vld [vmem:[%s350 + $0x121] sm:$0xff]
        %v3227 = vld [vmem:[%s350 + $0x129] sm:$0xff]
        %v3228 = vld [vmem:[%s350 + $0x139] sm:$0xff]
        %v3229 = vld [vmem:[%s350 + $0x141] sm:$0xff]
        %v3230 = vld [vmem:[%s350 + $0x151] sm:$0xff]
        %v3231 = vld [vmem:[%s350 + $0x159] sm:$0xff]
        %v3232 = vld [vmem:[%s350 + $0x169] sm:$0xff]
        %v3233 = vld [vmem:[%s350 + $0x171] sm:$0xff]
        %v3234 = vld [vmem:[%s2861 + $0x4] sm:$0x1]
        %v3235 = vlaneseq
        %v3236 = vshrl.u32 %v3235, 7
        %v3237 = vsub.s32 0, %v3236
        %v3238 = vrot.slane %v3234, %v3237
        %v3239 = vmul.f32 %v3202, %v3238
        %v3240 = vmul.f32 %v3203, %v3238
        %v3241 = vmul.f32 %v3204, %v3238
        %v3242 = vmul.f32 %v3205, %v3238
        %v3243 = vmul.f32 %v3206, %v3238
        %v3244 = vmul.f32 %v3207, %v3238
        %v3245 = vmul.f32 %v3208, %v3238
        %v3246 = vmul.f32 %v3209, %v3238
        %v3247 = vmul.f32 %v3210, %v3238
        %v3248 = vmul.f32 %v3211, %v3238
        %v3249 = vmul.f32 %v3212, %v3238
        %v3250 = vmul.f32 %v3213, %v3238
        %v3251 = vmul.f32 %v3214, %v3238
        %v3252 = vmul.f32 %v3215, %v3238
        %v3253 = vmul.f32 %v3216, %v3238
        %v3254 = vmul.f32 %v3217, %v3238
        %v3255 = vmul.f32 %v3218, %v3238
        %v3256 = vmul.f32 %v3219, %v3238
        %v3257 = vmul.f32 %v3220, %v3238
        %v3258 = vmul.f32 %v3221, %v3238
        %v3259 = vmul.f32 %v3222, %v3238
        %v3260 = vmul.f32 %v3223, %v3238
        %v3261 = vmul.f32 %v3224, %v3238
        %v3262 = vmul.f32 %v3225, %v3238
        %v3263 = vmul.f32 %v3226, %v3238
        %v3264 = vmul.f32 %v3227, %v3238
        %v3265 = vmul.f32 %v3228, %v3238
        %v3266 = vmul.f32 %v3229, %v3238
        %v3267 = vmul.f32 %v3230, %v3238
        %v3268 = vmul.f32 %v3231, %v3238
        %v3269 = vmul.f32 %v3232, %v3238
        %v3270 = vmul.f32 %v3233, %v3238
        %v3271 = vadd.f32 %v3170, %v3239
        %v3272 = vadd.f32 %v3171, %v3240
        %v3273 = vadd.f32 %v3172, %v3241
        %v3274 = vadd.f32 %v3173, %v3242
        %v3275 = vadd.f32 %v3174, %v3243
        %v3276 = vadd.f32 %v3175, %v3244
        %v3277 = vadd.f32 %v3176, %v3245
        %v3278 = vadd.f32 %v3177, %v3246
        %v3279 = vadd.f32 %v3178, %v3247
        %v3280 = vadd.f32 %v3179, %v3248
        %v3281 = vadd.f32 %v3180, %v3249
        %v3282 = vadd.f32 %v3181, %v3250
        %v3283 = vadd.f32 %v3182, %v3251
        %v3284 = vadd.f32 %v3183, %v3252
        %v3285 = vadd.f32 %v3184, %v3253
        %v3286 = vadd.f32 %v3185, %v3254
        %v3287 = vadd.f32 %v3186, %v3255
        %v3288 = vadd.f32 %v3187, %v3256
        %v3289 = vadd.f32 %v3188, %v3257
        %v3290 = vadd.f32 %v3189, %v3258
        %v3291 = vadd.f32 %v3190, %v3259
        %v3292 = vadd.f32 %v3191, %v3260
        %v3293 = vadd.f32 %v3192, %v3261
        %v3294 = vadd.f32 %v3193, %v3262
        %v3295 = vadd.f32 %v3194, %v3263
        %v3296 = vadd.f32 %v3195, %v3264
        %v3297 = vadd.f32 %v3196, %v3265
        %v3298 = vadd.f32 %v3197, %v3266
        %v3299 = vadd.f32 %v3198, %v3267
        %v3300 = vadd.f32 %v3199, %v3268
        %v3301 = vadd.f32 %v3200, %v3269
        %v3302 = vadd.f32 %v3201, %v3270
        %v3303 = vld [vmem:[%s350 + $0x2] sm:$0xff]
        %v3304 = vld [vmem:[%s350 + $0xa] sm:$0xff]
        %v3305 = vld [vmem:[%s350 + $0x1a] sm:$0xff]
        %v3306 = vld [vmem:[%s350 + $0x22] sm:$0xff]
        %v3307 = vld [vmem:[%s350 + $0x32] sm:$0xff]
        %v3308 = vld [vmem:[%s350 + $0x3a] sm:$0xff]
        %v3309 = vld [vmem:[%s350 + $0x4a] sm:$0xff]
        %v3310 = vld [vmem:[%s350 + $0x52] sm:$0xff]
        %v3311 = vld [vmem:[%s350 + $0x62] sm:$0xff]
        %v3312 = vld [vmem:[%s350 + $0x6a] sm:$0xff]
        %v3313 = vld [vmem:[%s350 + $0x7a] sm:$0xff]
        %v3314 = vld [vmem:[%s350 + $0x82] sm:$0xff]
        %v3315 = vld [vmem:[%s350 + $0x92] sm:$0xff]
        %v3316 = vld [vmem:[%s350 + $0x9a] sm:$0xff]
        %v3317 = vld [vmem:[%s350 + $0xaa] sm:$0xff]
        %v3318 = vld [vmem:[%s350 + $0xb2] sm:$0xff]
        %v3319 = vld [vmem:[%s350 + $0xc2] sm:$0xff]
        %v3320 = vld [vmem:[%s350 + $0xca] sm:$0xff]
        %v3321 = vld [vmem:[%s350 + $0xda] sm:$0xff]
        %v3322 = vld [vmem:[%s350 + $0xe2] sm:$0xff]
        %v3323 = vld [vmem:[%s350 + $0xf2] sm:$0xff]
        %v3324 = vld [vmem:[%s350 + $0xfa] sm:$0xff]
        %v3325 = vld [vmem:[%s350 + $0x10a] sm:$0xff]
        %v3326 = vld [vmem:[%s350 + $0x112] sm:$0xff]
        %v3327 = vld [vmem:[%s350 + $0x122] sm:$0xff]
        %v3328 = vld [vmem:[%s350 + $0x12a] sm:$0xff]
        %v3329 = vld [vmem:[%s350 + $0x13a] sm:$0xff]
        %v3330 = vld [vmem:[%s350 + $0x142] sm:$0xff]
        %v3331 = vld [vmem:[%s350 + $0x152] sm:$0xff]
        %v3332 = vld [vmem:[%s350 + $0x15a] sm:$0xff]
        %v3333 = vld [vmem:[%s350 + $0x16a] sm:$0xff]
        %v3334 = vld [vmem:[%s350 + $0x172] sm:$0xff]
        %v3335 = vld [vmem:[%s2861 + $0x5] sm:$0x1]
        %v3336 = vlaneseq
        %v3337 = vshrl.u32 %v3336, 7
        %v3338 = vsub.s32 0, %v3337
        %v3339 = vrot.slane %v3335, %v3338
        %v3340 = vmul.f32 %v3303, %v3339
        %v3341 = vmul.f32 %v3304, %v3339
        %v3342 = vmul.f32 %v3305, %v3339
        %v3343 = vmul.f32 %v3306, %v3339
        %v3344 = vmul.f32 %v3307, %v3339
        %v3345 = vmul.f32 %v3308, %v3339
        %v3346 = vmul.f32 %v3309, %v3339
        %v3347 = vmul.f32 %v3310, %v3339
        %v3348 = vmul.f32 %v3311, %v3339
        %v3349 = vmul.f32 %v3312, %v3339
        %v3350 = vmul.f32 %v3313, %v3339
        %v3351 = vmul.f32 %v3314, %v3339
        %v3352 = vmul.f32 %v3315, %v3339
        %v3353 = vmul.f32 %v3316, %v3339
        %v3354 = vmul.f32 %v3317, %v3339
        %v3355 = vmul.f32 %v3318, %v3339
        %v3356 = vmul.f32 %v3319, %v3339
        %v3357 = vmul.f32 %v3320, %v3339
        %v3358 = vmul.f32 %v3321, %v3339
        %v3359 = vmul.f32 %v3322, %v3339
        %v3360 = vmul.f32 %v3323, %v3339
        %v3361 = vmul.f32 %v3324, %v3339
        %v3362 = vmul.f32 %v3325, %v3339
        %v3363 = vmul.f32 %v3326, %v3339
        %v3364 = vmul.f32 %v3327, %v3339
        %v3365 = vmul.f32 %v3328, %v3339
        %v3366 = vmul.f32 %v3329, %v3339
        %v3367 = vmul.f32 %v3330, %v3339
        %v3368 = vmul.f32 %v3331, %v3339
        %v3369 = vmul.f32 %v3332, %v3339
        %v3370 = vmul.f32 %v3333, %v3339
        %v3371 = vmul.f32 %v3334, %v3339
        %v3372 = vadd.f32 %v3271, %v3340
        %v3373 = vadd.f32 %v3272, %v3341
        %v3374 = vadd.f32 %v3273, %v3342
        %v3375 = vadd.f32 %v3274, %v3343
        %v3376 = vadd.f32 %v3275, %v3344
        %v3377 = vadd.f32 %v3276, %v3345
        %v3378 = vadd.f32 %v3277, %v3346
        %v3379 = vadd.f32 %v3278, %v3347
        %v3380 = vadd.f32 %v3279, %v3348
        %v3381 = vadd.f32 %v3280, %v3349
        %v3382 = vadd.f32 %v3281, %v3350
        %v3383 = vadd.f32 %v3282, %v3351
        %v3384 = vadd.f32 %v3283, %v3352
        %v3385 = vadd.f32 %v3284, %v3353
        %v3386 = vadd.f32 %v3285, %v3354
        %v3387 = vadd.f32 %v3286, %v3355
        %v3388 = vadd.f32 %v3287, %v3356
        %v3389 = vadd.f32 %v3288, %v3357
        %v3390 = vadd.f32 %v3289, %v3358
        %v3391 = vadd.f32 %v3290, %v3359
        %v3392 = vadd.f32 %v3291, %v3360
        %v3393 = vadd.f32 %v3292, %v3361
        %v3394 = vadd.f32 %v3293, %v3362
        %v3395 = vadd.f32 %v3294, %v3363
        %v3396 = vadd.f32 %v3295, %v3364
        %v3397 = vadd.f32 %v3296, %v3365
        %v3398 = vadd.f32 %v3297, %v3366
        %v3399 = vadd.f32 %v3298, %v3367
        %v3400 = vadd.f32 %v3299, %v3368
        %v3401 = vadd.f32 %v3300, %v3369
        %v3402 = vadd.f32 %v3301, %v3370
        %v3403 = vadd.f32 %v3302, %v3371
        %v3404 = vld [vmem:[%s957] sm:$0xff]
        %v3405 = vld [vmem:[%s957 + $0x8] sm:$0xff]
        %v3406 = vld [vmem:[%s957 + $0x18] sm:$0xff]
        %v3407 = vld [vmem:[%s957 + $0x20] sm:$0xff]
        %v3408 = vld [vmem:[%s957 + $0x30] sm:$0xff]
        %v3409 = vld [vmem:[%s957 + $0x38] sm:$0xff]
        %v3410 = vld [vmem:[%s957 + $0x48] sm:$0xff]
        %v3411 = vld [vmem:[%s957 + $0x50] sm:$0xff]
        %v3412 = vld [vmem:[%s957 + $0x60] sm:$0xff]
        %v3413 = vld [vmem:[%s957 + $0x68] sm:$0xff]
        %v3414 = vld [vmem:[%s957 + $0x78] sm:$0xff]
        %v3415 = vld [vmem:[%s957 + $0x80] sm:$0xff]
        %v3416 = vld [vmem:[%s957 + $0x90] sm:$0xff]
        %v3417 = vld [vmem:[%s957 + $0x98] sm:$0xff]
        %v3418 = vld [vmem:[%s957 + $0xa8] sm:$0xff]
        %v3419 = vld [vmem:[%s957 + $0xb0] sm:$0xff]
        %v3420 = vld [vmem:[%s957 + $0xc0] sm:$0xff]
        %v3421 = vld [vmem:[%s957 + $0xc8] sm:$0xff]
        %v3422 = vld [vmem:[%s957 + $0xd8] sm:$0xff]
        %v3423 = vld [vmem:[%s957 + $0xe0] sm:$0xff]
        %v3424 = vld [vmem:[%s957 + $0xf0] sm:$0xff]
        %v3425 = vld [vmem:[%s957 + $0xf8] sm:$0xff]
        %v3426 = vld [vmem:[%s957 + $0x108] sm:$0xff]
        %v3427 = vld [vmem:[%s957 + $0x110] sm:$0xff]
        %v3428 = vld [vmem:[%s957 + $0x120] sm:$0xff]
        %v3429 = vld [vmem:[%s957 + $0x128] sm:$0xff]
        %v3430 = vld [vmem:[%s957 + $0x138] sm:$0xff]
        %v3431 = vld [vmem:[%s957 + $0x140] sm:$0xff]
        %v3432 = vld [vmem:[%s957 + $0x150] sm:$0xff]
        %v3433 = vld [vmem:[%s957 + $0x158] sm:$0xff]
        %v3434 = vld [vmem:[%s957 + $0x168] sm:$0xff]
        %v3435 = vld [vmem:[%s957 + $0x170] sm:$0xff]
        %v3436 = vld [vmem:[%s2861 + $0x6] sm:$0x1]
        %v3437 = vlaneseq
        %v3438 = vshrl.u32 %v3437, 7
        %v3439 = vsub.s32 0, %v3438
        %v3440 = vrot.slane %v3436, %v3439
        %v3441 = vmul.f32 %v3404, %v3440
        %v3442 = vmul.f32 %v3405, %v3440
        %v3443 = vmul.f32 %v3406, %v3440
        %v3444 = vmul.f32 %v3407, %v3440
        %v3445 = vmul.f32 %v3408, %v3440
        %v3446 = vmul.f32 %v3409, %v3440
        %v3447 = vmul.f32 %v3410, %v3440
        %v3448 = vmul.f32 %v3411, %v3440
        %v3449 = vmul.f32 %v3412, %v3440
        %v3450 = vmul.f32 %v3413, %v3440
        %v3451 = vmul.f32 %v3414, %v3440
        %v3452 = vmul.f32 %v3415, %v3440
        %v3453 = vmul.f32 %v3416, %v3440
        %v3454 = vmul.f32 %v3417, %v3440
        %v3455 = vmul.f32 %v3418, %v3440
        %v3456 = vmul.f32 %v3419, %v3440
        %v3457 = vmul.f32 %v3420, %v3440
        %v3458 = vmul.f32 %v3421, %v3440
        %v3459 = vmul.f32 %v3422, %v3440
        %v3460 = vmul.f32 %v3423, %v3440
        %v3461 = vmul.f32 %v3424, %v3440
        %v3462 = vmul.f32 %v3425, %v3440
        %v3463 = vmul.f32 %v3426, %v3440
        %v3464 = vmul.f32 %v3427, %v3440
        %v3465 = vmul.f32 %v3428, %v3440
        %v3466 = vmul.f32 %v3429, %v3440
        %v3467 = vmul.f32 %v3430, %v3440
        %v3468 = vmul.f32 %v3431, %v3440
        %v3469 = vmul.f32 %v3432, %v3440
        %v3470 = vmul.f32 %v3433, %v3440
        %v3471 = vmul.f32 %v3434, %v3440
        %v3472 = vmul.f32 %v3435, %v3440
        %v3473 = vadd.f32 %v3372, %v3441
        %v3474 = vadd.f32 %v3373, %v3442
        %v3475 = vadd.f32 %v3374, %v3443
        %v3476 = vadd.f32 %v3375, %v3444
        %v3477 = vadd.f32 %v3376, %v3445
        %v3478 = vadd.f32 %v3377, %v3446
        %v3479 = vadd.f32 %v3378, %v3447
        %v3480 = vadd.f32 %v3379, %v3448
        %v3481 = vadd.f32 %v3380, %v3449
        %v3482 = vadd.f32 %v3381, %v3450
        %v3483 = vadd.f32 %v3382, %v3451
        %v3484 = vadd.f32 %v3383, %v3452
        %v3485 = vadd.f32 %v3384, %v3453
        %v3486 = vadd.f32 %v3385, %v3454
        %v3487 = vadd.f32 %v3386, %v3455
        %v3488 = vadd.f32 %v3387, %v3456
        %v3489 = vadd.f32 %v3388, %v3457
        %v3490 = vadd.f32 %v3389, %v3458
        %v3491 = vadd.f32 %v3390, %v3459
        %v3492 = vadd.f32 %v3391, %v3460
        %v3493 = vadd.f32 %v3392, %v3461
        %v3494 = vadd.f32 %v3393, %v3462
        %v3495 = vadd.f32 %v3394, %v3463
        %v3496 = vadd.f32 %v3395, %v3464
        %v3497 = vadd.f32 %v3396, %v3465
        %v3498 = vadd.f32 %v3397, %v3466
        %v3499 = vadd.f32 %v3398, %v3467
        %v3500 = vadd.f32 %v3399, %v3468
        %v3501 = vadd.f32 %v3400, %v3469
        %v3502 = vadd.f32 %v3401, %v3470
        %v3503 = vadd.f32 %v3402, %v3471
        %v3504 = vadd.f32 %v3403, %v3472
        %v3505 = vld [vmem:[%s957 + $0x1] sm:$0xff]
        %v3506 = vld [vmem:[%s957 + $0x9] sm:$0xff]
        %v3507 = vld [vmem:[%s957 + $0x19] sm:$0xff]
        %v3508 = vld [vmem:[%s957 + $0x21] sm:$0xff]
        %v3509 = vld [vmem:[%s957 + $0x31] sm:$0xff]
        %v3510 = vld [vmem:[%s957 + $0x39] sm:$0xff]
        %v3511 = vld [vmem:[%s957 + $0x49] sm:$0xff]
        %v3512 = vld [vmem:[%s957 + $0x51] sm:$0xff]
        %v3513 = vld [vmem:[%s957 + $0x61] sm:$0xff]
        %v3514 = vld [vmem:[%s957 + $0x69] sm:$0xff]
        %v3515 = vld [vmem:[%s957 + $0x79] sm:$0xff]
        %v3516 = vld [vmem:[%s957 + $0x81] sm:$0xff]
        %v3517 = vld [vmem:[%s957 + $0x91] sm:$0xff]
        %v3518 = vld [vmem:[%s957 + $0x99] sm:$0xff]
        %v3519 = vld [vmem:[%s957 + $0xa9] sm:$0xff]
        %v3520 = vld [vmem:[%s957 + $0xb1] sm:$0xff]
        %v3521 = vld [vmem:[%s957 + $0xc1] sm:$0xff]
        %v3522 = vld [vmem:[%s957 + $0xc9] sm:$0xff]
        %v3523 = vld [vmem:[%s957 + $0xd9] sm:$0xff]
        %v3524 = vld [vmem:[%s957 + $0xe1] sm:$0xff]
        %v3525 = vld [vmem:[%s957 + $0xf1] sm:$0xff]
        %v3526 = vld [vmem:[%s957 + $0xf9] sm:$0xff]
        %v3527 = vld [vmem:[%s957 + $0x109] sm:$0xff]
        %v3528 = vld [vmem:[%s957 + $0x111] sm:$0xff]
        %v3529 = vld [vmem:[%s957 + $0x121] sm:$0xff]
        %v3530 = vld [vmem:[%s957 + $0x129] sm:$0xff]
        %v3531 = vld [vmem:[%s957 + $0x139] sm:$0xff]
        %v3532 = vld [vmem:[%s957 + $0x141] sm:$0xff]
        %v3533 = vld [vmem:[%s957 + $0x151] sm:$0xff]
        %v3534 = vld [vmem:[%s957 + $0x159] sm:$0xff]
        %v3535 = vld [vmem:[%s957 + $0x169] sm:$0xff]
        %v3536 = vld [vmem:[%s957 + $0x171] sm:$0xff]
        %v3537 = vld [vmem:[%s2861 + $0x7] sm:$0x1]
        %v3538 = vlaneseq
        %v3539 = vshrl.u32 %v3538, 7
        %v3540 = vsub.s32 0, %v3539
        %v3541 = vrot.slane %v3537, %v3540
        %v3542 = vmul.f32 %v3505, %v3541
        %v3543 = vmul.f32 %v3506, %v3541
        %v3544 = vmul.f32 %v3507, %v3541
        %v3545 = vmul.f32 %v3508, %v3541
        %v3546 = vmul.f32 %v3509, %v3541
        %v3547 = vmul.f32 %v3510, %v3541
        %v3548 = vmul.f32 %v3511, %v3541
        %v3549 = vmul.f32 %v3512, %v3541
        %v3550 = vmul.f32 %v3513, %v3541
        %v3551 = vmul.f32 %v3514, %v3541
        %v3552 = vmul.f32 %v3515, %v3541
        %v3553 = vmul.f32 %v3516, %v3541
        %v3554 = vmul.f32 %v3517, %v3541
        %v3555 = vmul.f32 %v3518, %v3541
        %v3556 = vmul.f32 %v3519, %v3541
        %v3557 = vmul.f32 %v3520, %v3541
        %v3558 = vmul.f32 %v3521, %v3541
        %v3559 = vmul.f32 %v3522, %v3541
        %v3560 = vmul.f32 %v3523, %v3541
        %v3561 = vmul.f32 %v3524, %v3541
        %v3562 = vmul.f32 %v3525, %v3541
        %v3563 = vmul.f32 %v3526, %v3541
        %v3564 = vmul.f32 %v3527, %v3541
        %v3565 = vmul.f32 %v3528, %v3541
        %v3566 = vmul.f32 %v3529, %v3541
        %v3567 = vmul.f32 %v3530, %v3541
        %v3568 = vmul.f32 %v3531, %v3541
        %v3569 = vmul.f32 %v3532, %v3541
        %v3570 = vmul.f32 %v3533, %v3541
        %v3571 = vmul.f32 %v3534, %v3541
        %v3572 = vmul.f32 %v3535, %v3541
        %v3573 = vmul.f32 %v3536, %v3541
        %v3574 = vadd.f32 %v3473, %v3542
        %v3575 = vadd.f32 %v3474, %v3543
        %v3576 = vadd.f32 %v3475, %v3544
        %v3577 = vadd.f32 %v3476, %v3545
        %v3578 = vadd.f32 %v3477, %v3546
        %v3579 = vadd.f32 %v3478, %v3547
        %v3580 = vadd.f32 %v3479, %v3548
        %v3581 = vadd.f32 %v3480, %v3549
        %v3582 = vadd.f32 %v3481, %v3550
        %v3583 = vadd.f32 %v3482, %v3551
        %v3584 = vadd.f32 %v3483, %v3552
        %v3585 = vadd.f32 %v3484, %v3553
        %v3586 = vadd.f32 %v3485, %v3554
        %v3587 = vadd.f32 %v3486, %v3555
        %v3588 = vadd.f32 %v3487, %v3556
        %v3589 = vadd.f32 %v3488, %v3557
        %v3590 = vadd.f32 %v3489, %v3558
        %v3591 = vadd.f32 %v3490, %v3559
        %v3592 = vadd.f32 %v3491, %v3560
        %v3593 = vadd.f32 %v3492, %v3561
        %v3594 = vadd.f32 %v3493, %v3562
        %v3595 = vadd.f32 %v3494, %v3563
        %v3596 = vadd.f32 %v3495, %v3564
        %v3597 = vadd.f32 %v3496, %v3565
        %v3598 = vadd.f32 %v3497, %v3566
        %v3599 = vadd.f32 %v3498, %v3567
        %v3600 = vadd.f32 %v3499, %v3568
        %v3601 = vadd.f32 %v3500, %v3569
        %v3602 = vadd.f32 %v3501, %v3570
        %v3603 = vadd.f32 %v3502, %v3571
        %v3604 = vadd.f32 %v3503, %v3572
        %v3605 = vadd.f32 %v3504, %v3573
        %v3606 = vld [vmem:[%s957 + $0x2] sm:$0xff]
        %v3607 = vld [vmem:[%s957 + $0xa] sm:$0xff]
        %v3608 = vld [vmem:[%s957 + $0x1a] sm:$0xff]
        %v3609 = vld [vmem:[%s957 + $0x22] sm:$0xff]
        %v3610 = vld [vmem:[%s957 + $0x32] sm:$0xff]
        %v3611 = vld [vmem:[%s957 + $0x3a] sm:$0xff]
        %v3612 = vld [vmem:[%s957 + $0x4a] sm:$0xff]
        %v3613 = vld [vmem:[%s957 + $0x52] sm:$0xff]
        %v3614 = vld [vmem:[%s957 + $0x62] sm:$0xff]
        %v3615 = vld [vmem:[%s957 + $0x6a] sm:$0xff]
        %v3616 = vld [vmem:[%s957 + $0x7a] sm:$0xff]
        %v3617 = vld [vmem:[%s957 + $0x82] sm:$0xff]
        %v3618 = vld [vmem:[%s957 + $0x92] sm:$0xff]
        %v3619 = vld [vmem:[%s957 + $0x9a] sm:$0xff]
        %v3620 = vld [vmem:[%s957 + $0xaa] sm:$0xff]
        %v3621 = vld [vmem:[%s957 + $0xb2] sm:$0xff]
        %v3622 = vld [vmem:[%s957 + $0xc2] sm:$0xff]
        %v3623 = vld [vmem:[%s957 + $0xca] sm:$0xff]
        %v3624 = vld [vmem:[%s957 + $0xda] sm:$0xff]
        %v3625 = vld [vmem:[%s957 + $0xe2] sm:$0xff]
        %v3626 = vld [vmem:[%s957 + $0xf2] sm:$0xff]
        %v3627 = vld [vmem:[%s957 + $0xfa] sm:$0xff]
        %v3628 = vld [vmem:[%s957 + $0x10a] sm:$0xff]
        %v3629 = vld [vmem:[%s957 + $0x112] sm:$0xff]
        %v3630 = vld [vmem:[%s957 + $0x122] sm:$0xff]
        %v3631 = vld [vmem:[%s957 + $0x12a] sm:$0xff]
        %v3632 = vld [vmem:[%s957 + $0x13a] sm:$0xff]
        %v3633 = vld [vmem:[%s957 + $0x142] sm:$0xff]
        %v3634 = vld [vmem:[%s957 + $0x152] sm:$0xff]
        %v3635 = vld [vmem:[%s957 + $0x15a] sm:$0xff]
        %v3636 = vld [vmem:[%s957 + $0x16a] sm:$0xff]
        %v3637 = vld [vmem:[%s957 + $0x172] sm:$0xff]
        %v3638 = vld [vmem:[%s2861 + $0x8] sm:$0x1]
        %v3639 = vlaneseq
        %v3640 = vshrl.u32 %v3639, 7
        %v3641 = vsub.s32 0, %v3640
        %v3642 = vrot.slane %v3638, %v3641
        %v3643 = vmul.f32 %v3606, %v3642
        %v3644 = vmul.f32 %v3607, %v3642
        %v3645 = vmul.f32 %v3608, %v3642
        %v3646 = vmul.f32 %v3609, %v3642
        %v3647 = vmul.f32 %v3610, %v3642
        %v3648 = vmul.f32 %v3611, %v3642
        %v3649 = vmul.f32 %v3612, %v3642
        %v3650 = vmul.f32 %v3613, %v3642
        %v3651 = vmul.f32 %v3614, %v3642
        %v3652 = vmul.f32 %v3615, %v3642
        %v3653 = vmul.f32 %v3616, %v3642
        %v3654 = vmul.f32 %v3617, %v3642
        %v3655 = vmul.f32 %v3618, %v3642
        %v3656 = vmul.f32 %v3619, %v3642
        %v3657 = vmul.f32 %v3620, %v3642
        %v3658 = vmul.f32 %v3621, %v3642
        %v3659 = vmul.f32 %v3622, %v3642
        %v3660 = vmul.f32 %v3623, %v3642
        %v3661 = vmul.f32 %v3624, %v3642
        %v3662 = vmul.f32 %v3625, %v3642
        %v3663 = vmul.f32 %v3626, %v3642
        %v3664 = vmul.f32 %v3627, %v3642
        %v3665 = vmul.f32 %v3628, %v3642
        %v3666 = vmul.f32 %v3629, %v3642
        %v3667 = vmul.f32 %v3630, %v3642
        %v3668 = vmul.f32 %v3631, %v3642
        %v3669 = vmul.f32 %v3632, %v3642
        %v3670 = vmul.f32 %v3633, %v3642
        %v3671 = vmul.f32 %v3634, %v3642
        %v3672 = vmul.f32 %v3635, %v3642
        %v3673 = vmul.f32 %v3636, %v3642
        %v3674 = vmul.f32 %v3637, %v3642
        %v3675 = vadd.f32 %v3574, %v3643
        %v3676 = vadd.f32 %v3575, %v3644
        %v3677 = vadd.f32 %v3576, %v3645
        %v3678 = vadd.f32 %v3577, %v3646
        %v3679 = vadd.f32 %v3578, %v3647
        %v3680 = vadd.f32 %v3579, %v3648
        %v3681 = vadd.f32 %v3580, %v3649
        %v3682 = vadd.f32 %v3581, %v3650
        %v3683 = vadd.f32 %v3582, %v3651
        %v3684 = vadd.f32 %v3583, %v3652
        %v3685 = vadd.f32 %v3584, %v3653
        %v3686 = vadd.f32 %v3585, %v3654
        %v3687 = vadd.f32 %v3586, %v3655
        %v3688 = vadd.f32 %v3587, %v3656
        %v3689 = vadd.f32 %v3588, %v3657
        %v3690 = vadd.f32 %v3589, %v3658
        %v3691 = vadd.f32 %v3590, %v3659
        %v3692 = vadd.f32 %v3591, %v3660
        %v3693 = vadd.f32 %v3592, %v3661
        %v3694 = vadd.f32 %v3593, %v3662
        %v3695 = vadd.f32 %v3594, %v3663
        %v3696 = vadd.f32 %v3595, %v3664
        %v3697 = vadd.f32 %v3596, %v3665
        %v3698 = vadd.f32 %v3597, %v3666
        %v3699 = vadd.f32 %v3598, %v3667
        %v3700 = vadd.f32 %v3599, %v3668
        %v3701 = vadd.f32 %v3600, %v3669
        %v3702 = vadd.f32 %v3601, %v3670
        %v3703 = vadd.f32 %v3602, %v3671
        %v3704 = vadd.f32 %v3603, %v3672
        %v3705 = vadd.f32 %v3604, %v3673
        %v3706 = vadd.f32 %v3605, %v3674
        %v3707 = vpack.c.bf16 %v3676, %v3675
        %v3708 = vpack.c.bf16 %v3678, %v3677
        %v3709 = vpack.c.bf16 %v3680, %v3679
        %v3710 = vpack.c.bf16 %v3682, %v3681
        %v3711 = vpack.c.bf16 %v3684, %v3683
        %v3712 = vpack.c.bf16 %v3686, %v3685
        %v3713 = vpack.c.bf16 %v3688, %v3687
        %v3714 = vpack.c.bf16 %v3690, %v3689
        %v3715 = vpack.c.bf16 %v3692, %v3691
        %v3716 = vpack.c.bf16 %v3694, %v3693
        %v3717 = vpack.c.bf16 %v3696, %v3695
        %v3718 = vpack.c.bf16 %v3698, %v3697
        %v3719 = vpack.c.bf16 %v3700, %v3699
        %v3720 = vpack.c.bf16 %v3702, %v3701
        %v3721 = vpack.c.bf16 %v3704, %v3703
        %v3722 = vpack.c.bf16 %v3706, %v3705
        %s3723 = scalar_lea.vmem [#allocation6], 128
        %v3724 = vld [vmem:[%s3723] sm:$0xf]
        %v3725 = vld [vmem:[%s3723 + $0x4] sm:$0xf]
        %v3726 = vld [vmem:[%s3723 + $0x8] sm:$0xf]
        %v3727 = vld [vmem:[%s3723 + $0xc] sm:$0xf]
        %v3728 = vld [vmem:[%s3723 + $0x10] sm:$0xf]
        %v3729 = vld [vmem:[%s3723 + $0x14] sm:$0xf]
        %v3730 = vld [vmem:[%s3723 + $0x18] sm:$0xf]
        %v3731 = vld [vmem:[%s3723 + $0x1c] sm:$0xf]
        %v3732 = vld [vmem:[%s3723 + $0x20] sm:$0xf]
        %v3733 = vld [vmem:[%s3723 + $0x24] sm:$0xf]
        %v3734 = vld [vmem:[%s3723 + $0x28] sm:$0xf]
        %v3735 = vld [vmem:[%s3723 + $0x2c] sm:$0xf]
        %v3736 = vld [vmem:[%s3723 + $0x30] sm:$0xf]
        %v3737 = vld [vmem:[%s3723 + $0x34] sm:$0xf]
        %v3738 = vld [vmem:[%s3723 + $0x38] sm:$0xf]
        %v3739 = vld [vmem:[%s3723 + $0x3c] sm:$0xf]
        %v3756 = vunpack.c.l.b16 %v3724
        %v3757 = vunpack.c.l.b16 %v3725
        %v3758 = vunpack.c.l.b16 %v3726
        %v3759 = vunpack.c.l.b16 %v3727
        %v3760 = vunpack.c.l.b16 %v3728
        %v3761 = vunpack.c.l.b16 %v3729
        %v3762 = vunpack.c.l.b16 %v3730
        %v3763 = vunpack.c.l.b16 %v3731
        %v3764 = vunpack.c.l.b16 %v3732
        %v3765 = vunpack.c.l.b16 %v3733
        %v3766 = vunpack.c.l.b16 %v3734
        %v3767 = vunpack.c.l.b16 %v3735
        %v3768 = vunpack.c.l.b16 %v3736
        %v3769 = vunpack.c.l.b16 %v3737
        %v3770 = vunpack.c.l.b16 %v3738
        %v3771 = vunpack.c.l.b16 %v3739
        %v3772 = vpack.c.b16 %v3757, %v3756
        %v3773 = vpack.c.b16 %v3759, %v3758
        %v3774 = vpack.c.b16 %v3761, %v3760
        %v3775 = vpack.c.b16 %v3763, %v3762
        %v3776 = vpack.c.b16 %v3765, %v3764
        %v3777 = vpack.c.b16 %v3767, %v3766
        %v3778 = vpack.c.b16 %v3769, %v3768
        %v3779 = vpack.c.b16 %v3771, %v3770
        %3788 = vmatprep.subr.bf16.mxu0 0
        %3789 = vmatpush1.bf16.msra.mxu0 %v3779
        %3790 = vmatprep.subr.bf16.mxu0 0
        %3791 = vmatpush1.bf16.msra.mxu0 %v3778
        %3792 = vmatprep.subr.bf16.mxu0 0
        %3793 = vmatpush1.bf16.msra.mxu0 %v3777
        %3794 = vmatprep.subr.bf16.mxu0 0
        %3795 = vmatpush1.bf16.msra.mxu0 %v3776
        %3796 = vmatprep.subr.bf16.mxu0 0
        %3797 = vmatpush1.bf16.msra.mxu0 %v3775
        %3798 = vmatprep.subr.bf16.mxu0 0
        %3799 = vmatpush1.bf16.msra.mxu0 %v3774
        %3800 = vmatprep.subr.bf16.mxu0 0
        %3801 = vmatpush1.bf16.msra.mxu0 %v3773
        %3802 = vmatprep.subr.bf16.mxu0 0
        %3803 = vmatpush1.bf16.msra.mxu0 %v3772
        %3804 = vmatprep.subr.bf16.mxu0 0
        %3805 = vmatpush2.bf16.msra.mxu0 0
        %3806 = vmatprep.subr.bf16.mxu0 0
        %3807 = vmatpush2.bf16.msra.mxu0 0
        %3808 = vmatprep.subr.bf16.mxu0 0
        %3809 = vmatpush2.bf16.msra.mxu0 0
        %3810 = vmatprep.subr.bf16.mxu0 0
        %3811 = vmatpush2.bf16.msra.mxu0 0
        %3812 = vmatprep.subr.bf16.mxu0 0
        %3813 = vmatpush2.bf16.msra.mxu0 0
        %3814 = vmatprep.subr.bf16.mxu0 0
        %3815 = vmatpush2.bf16.msra.mxu0 0
        %3816 = vmatprep.subr.bf16.mxu0 0
        %3817 = vmatpush2.bf16.msra.mxu0 0
        %3818 = vmatprep.subr.bf16.mxu0 0
        %3819 = vmatpush2.bf16.msra.mxu0 0
        %3820 = vmatprep.mubr.bf16.mxu0 0
        %3821 = vmatmul.mubr.bf16.gmra.mxu0 %v3707
        %v3822 = vpop.f32.mrf.mxu0
        %v3823 = vadd.f32 0.0, %v3822
        %v3824 = vpop.f32.mrf.mxu0
        %v3825 = vpop.f32.mrf.mxu0
        %v3826 = vadd.f32 0.0, %v3825
        %v3827 = vpop.f32.mrf.mxu0
        %3828 = vmatprep.mubr.bf16.mxu0 0
        %3829 = vmatmul.mubr.bf16.gmra.mxu0 %v3708
        %v3830 = vpop.f32.mrf.mxu0
        %v3831 = vadd.f32 0.0, %v3830
        %v3832 = vpop.f32.mrf.mxu0
        %v3833 = vpop.f32.mrf.mxu0
        %v3834 = vadd.f32 0.0, %v3833
        %v3835 = vpop.f32.mrf.mxu0
        %3836 = vmatprep.mubr.bf16.mxu0 0
        %3837 = vmatmul.mubr.bf16.gmra.mxu0 %v3709
        %v3838 = vpop.f32.mrf.mxu0
        %v3839 = vadd.f32 0.0, %v3838
        %v3840 = vpop.f32.mrf.mxu0
        %v3841 = vpop.f32.mrf.mxu0
        %v3842 = vadd.f32 0.0, %v3841
        %v3843 = vpop.f32.mrf.mxu0
        %3844 = vmatprep.mubr.bf16.mxu0 0
        %3845 = vmatmul.mubr.bf16.gmra.mxu0 %v3710
        %v3846 = vpop.f32.mrf.mxu0
        %v3847 = vadd.f32 0.0, %v3846
        %v3848 = vpop.f32.mrf.mxu0
        %v3849 = vpop.f32.mrf.mxu0
        %v3850 = vadd.f32 0.0, %v3849
        %v3851 = vpop.f32.mrf.mxu0
        %3852 = vmatprep.mubr.bf16.mxu0 0
        %3853 = vmatmul.mubr.bf16.gmra.mxu0 %v3711
        %v3854 = vpop.f32.mrf.mxu0
        %v3855 = vadd.f32 0.0, %v3854
        %v3856 = vpop.f32.mrf.mxu0
        %v3857 = vpop.f32.mrf.mxu0
        %v3858 = vadd.f32 0.0, %v3857
        %v3859 = vpop.f32.mrf.mxu0
        %3860 = vmatprep.mubr.bf16.mxu0 0
        %3861 = vmatmul.mubr.bf16.gmra.mxu0 %v3712
        %v3862 = vpop.f32.mrf.mxu0
        %v3863 = vadd.f32 0.0, %v3862
        %v3864 = vpop.f32.mrf.mxu0
        %v3865 = vpop.f32.mrf.mxu0
        %v3866 = vadd.f32 0.0, %v3865
        %v3867 = vpop.f32.mrf.mxu0
        %3868 = vmatprep.mubr.bf16.mxu0 0
        %3869 = vmatmul.mubr.bf16.gmra.mxu0 %v3713
        %v3870 = vpop.f32.mrf.mxu0
        %v3871 = vadd.f32 0.0, %v3870
        %v3872 = vpop.f32.mrf.mxu0
        %v3873 = vpop.f32.mrf.mxu0
        %v3874 = vadd.f32 0.0, %v3873
        %v3875 = vpop.f32.mrf.mxu0
        %3876 = vmatprep.mubr.bf16.mxu0 0
        %3877 = vmatmul.mubr.bf16.gmra.mxu0 %v3714
        %v3878 = vpop.f32.mrf.mxu0
        %v3879 = vadd.f32 0.0, %v3878
        %v3880 = vpop.f32.mrf.mxu0
        %v3881 = vpop.f32.mrf.mxu0
        %v3882 = vadd.f32 0.0, %v3881
        %v3883 = vpop.f32.mrf.mxu0
        %3884 = vmatprep.mubr.bf16.mxu0 0
        %3885 = vmatmul.mubr.bf16.gmra.mxu0 %v3715
        %v3886 = vpop.f32.mrf.mxu0
        %v3887 = vadd.f32 0.0, %v3886
        %v3888 = vpop.f32.mrf.mxu0
        %v3889 = vpop.f32.mrf.mxu0
        %v3890 = vadd.f32 0.0, %v3889
        %v3891 = vpop.f32.mrf.mxu0
        %3892 = vmatprep.mubr.bf16.mxu0 0
        %3893 = vmatmul.mubr.bf16.gmra.mxu0 %v3716
        %v3894 = vpop.f32.mrf.mxu0
        %v3895 = vadd.f32 0.0, %v3894
        %v3896 = vpop.f32.mrf.mxu0
        %v3897 = vpop.f32.mrf.mxu0
        %v3898 = vadd.f32 0.0, %v3897
        %v3899 = vpop.f32.mrf.mxu0
        %3900 = vmatprep.mubr.bf16.mxu0 0
        %3901 = vmatmul.mubr.bf16.gmra.mxu0 %v3717
        %v3902 = vpop.f32.mrf.mxu0
        %v3903 = vadd.f32 0.0, %v3902
        %v3904 = vpop.f32.mrf.mxu0
        %v3905 = vpop.f32.mrf.mxu0
        %v3906 = vadd.f32 0.0, %v3905
        %v3907 = vpop.f32.mrf.mxu0
        %3908 = vmatprep.mubr.bf16.mxu0 0
        %3909 = vmatmul.mubr.bf16.gmra.mxu0 %v3718
        %v3910 = vpop.f32.mrf.mxu0
        %v3911 = vadd.f32 0.0, %v3910
        %v3912 = vpop.f32.mrf.mxu0
        %v3913 = vpop.f32.mrf.mxu0
        %v3914 = vadd.f32 0.0, %v3913
        %v3915 = vpop.f32.mrf.mxu0
        %3916 = vmatprep.mubr.bf16.mxu0 0
        %3917 = vmatmul.mubr.bf16.gmra.mxu0 %v3719
        %v3918 = vpop.f32.mrf.mxu0
        %v3919 = vadd.f32 0.0, %v3918
        %v3920 = vpop.f32.mrf.mxu0
        %v3921 = vpop.f32.mrf.mxu0
        %v3922 = vadd.f32 0.0, %v3921
        %v3923 = vpop.f32.mrf.mxu0
        %3924 = vmatprep.mubr.bf16.mxu0 0
        %3925 = vmatmul.mubr.bf16.gmra.mxu0 %v3720
        %v3926 = vpop.f32.mrf.mxu0
        %v3927 = vadd.f32 0.0, %v3926
        %v3928 = vpop.f32.mrf.mxu0
        %v3929 = vpop.f32.mrf.mxu0
        %v3930 = vadd.f32 0.0, %v3929
        %v3931 = vpop.f32.mrf.mxu0
        %3932 = vmatprep.mubr.bf16.mxu0 0
        %3933 = vmatmul.mubr.bf16.gmra.mxu0 %v3721
        %v3934 = vpop.f32.mrf.mxu0
        %v3935 = vadd.f32 0.0, %v3934
        %v3936 = vpop.f32.mrf.mxu0
        %v3937 = vpop.f32.mrf.mxu0
        %v3938 = vadd.f32 0.0, %v3937
        %v3939 = vpop.f32.mrf.mxu0
        %3940 = vmatprep.mubr.bf16.mxu0 0
        %3941 = vmatmul.mubr.bf16.gmra.mxu0 %v3722
        %v3942 = vpop.f32.mrf.mxu0
        %v3943 = vadd.f32 0.0, %v3942
        %v3944 = vpop.f32.mrf.mxu0
        %v3945 = vpop.f32.mrf.mxu0
        %v3946 = vadd.f32 0.0, %v3945
        %v3947 = vpop.f32.mrf.mxu0
        %3948 = vdwg.mxu0
        %s3949 = scalar_lea.vmem %s3, 2
        %v3950 = vld [vmem:[%s3949] sm:$0x1]
        %v3952 = vlaneseq
        %v3953 = vshrl.u32 %v3952, 7
        %v3954 = vsub.s32 0, %v3953
        %v3955 = vrot.slane %v3950, %v3954
        %v3957 = vadd.f32 %v3823, %v3955
        %v3958 = vadd.f32 %v3826, %v3955
        %v3959 = vadd.f32 %v3831, %v3955
        %v3960 = vadd.f32 %v3834, %v3955
        %v3961 = vadd.f32 %v3839, %v3955
        %v3962 = vadd.f32 %v3842, %v3955
        %v3963 = vadd.f32 %v3847, %v3955
        %v3964 = vadd.f32 %v3850, %v3955
        %v3965 = vadd.f32 %v3855, %v3955
        %v3966 = vadd.f32 %v3858, %v3955
        %v3967 = vadd.f32 %v3863, %v3955
        %v3968 = vadd.f32 %v3866, %v3955
        %v3969 = vadd.f32 %v3871, %v3955
        %v3970 = vadd.f32 %v3874, %v3955
        %v3971 = vadd.f32 %v3879, %v3955
        %v3972 = vadd.f32 %v3882, %v3955
        %v3973 = vadd.f32 %v3887, %v3955
        %v3974 = vadd.f32 %v3890, %v3955
        %v3975 = vadd.f32 %v3895, %v3955
        %v3976 = vadd.f32 %v3898, %v3955
        %v3977 = vadd.f32 %v3903, %v3955
        %v3978 = vadd.f32 %v3906, %v3955
        %v3979 = vadd.f32 %v3911, %v3955
        %v3980 = vadd.f32 %v3914, %v3955
        %v3981 = vadd.f32 %v3919, %v3955
        %v3982 = vadd.f32 %v3922, %v3955
        %v3983 = vadd.f32 %v3927, %v3955
        %v3984 = vadd.f32 %v3930, %v3955
        %v3985 = vadd.f32 %v3935, %v3955
        %v3986 = vadd.f32 %v3938, %v3955
        %v3987 = vadd.f32 %v3943, %v3955
        %v3988 = vadd.f32 %v3946, %v3955
        %v3989 = vld [vmem:[%s202] sm:$0xff]
        %v3990 = vld [vmem:[%s202 + $0x8] sm:$0xff]
        %v3991 = vld [vmem:[%s202 + $0x10] sm:$0xff]
        %v3992 = vld [vmem:[%s202 + $0x18] sm:$0xff]
        %v3993 = vld [vmem:[%s202 + $0x20] sm:$0xff]
        %v3994 = vld [vmem:[%s202 + $0x28] sm:$0xff]
        %v3995 = vld [vmem:[%s202 + $0x30] sm:$0xff]
        %v3996 = vld [vmem:[%s202 + $0x38] sm:$0xff]
        %v3997 = vld [vmem:[%s202 + $0x40] sm:$0xff]
        %v3998 = vld [vmem:[%s202 + $0x48] sm:$0xff]
        %v3999 = vld [vmem:[%s202 + $0x50] sm:$0xff]
        %v4000 = vld [vmem:[%s202 + $0x58] sm:$0xff]
        %v4001 = vld [vmem:[%s202 + $0x60] sm:$0xff]
        %v4002 = vld [vmem:[%s202 + $0x68] sm:$0xff]
        %v4003 = vld [vmem:[%s202 + $0x70] sm:$0xff]
        %v4004 = vld [vmem:[%s202 + $0x78] sm:$0xff]
        %v4005 = vld [vmem:[%s202 + $0x80] sm:$0xff]
        %v4006 = vld [vmem:[%s202 + $0x88] sm:$0xff]
        %v4007 = vld [vmem:[%s202 + $0x90] sm:$0xff]
        %v4008 = vld [vmem:[%s202 + $0x98] sm:$0xff]
        %v4009 = vld [vmem:[%s202 + $0xa0] sm:$0xff]
        %v4010 = vld [vmem:[%s202 + $0xa8] sm:$0xff]
        %v4011 = vld [vmem:[%s202 + $0xb0] sm:$0xff]
        %v4012 = vld [vmem:[%s202 + $0xb8] sm:$0xff]
        %v4013 = vld [vmem:[%s202 + $0xc0] sm:$0xff]
        %v4014 = vld [vmem:[%s202 + $0xc8] sm:$0xff]
        %v4015 = vld [vmem:[%s202 + $0xd0] sm:$0xff]
        %v4016 = vld [vmem:[%s202 + $0xd8] sm:$0xff]
        %v4017 = vld [vmem:[%s202 + $0xe0] sm:$0xff]
        %v4018 = vld [vmem:[%s202 + $0xe8] sm:$0xff]
        %v4019 = vld [vmem:[%s202 + $0xf0] sm:$0xff]
        %v4020 = vld [vmem:[%s202 + $0xf8] sm:$0xff]
        %v4021 = vadd.f32 %v3957, %v3989
        %v4022 = vadd.f32 %v3958, %v3990
        %v4023 = vadd.f32 %v3959, %v3991
        %v4024 = vadd.f32 %v3960, %v3992
        %v4025 = vadd.f32 %v3961, %v3993
        %v4026 = vadd.f32 %v3962, %v3994
        %v4027 = vadd.f32 %v3963, %v3995
        %v4028 = vadd.f32 %v3964, %v3996
        %v4029 = vadd.f32 %v3965, %v3997
        %v4030 = vadd.f32 %v3966, %v3998
        %v4031 = vadd.f32 %v3967, %v3999
        %v4032 = vadd.f32 %v3968, %v4000
        %v4033 = vadd.f32 %v3969, %v4001
        %v4034 = vadd.f32 %v3970, %v4002
        %v4035 = vadd.f32 %v3971, %v4003
        %v4036 = vadd.f32 %v3972, %v4004
        %v4037 = vadd.f32 %v3973, %v4005
        %v4038 = vadd.f32 %v3974, %v4006
        %v4039 = vadd.f32 %v3975, %v4007
        %v4040 = vadd.f32 %v3976, %v4008
        %v4041 = vadd.f32 %v3977, %v4009
        %v4042 = vadd.f32 %v3978, %v4010
        %v4043 = vadd.f32 %v3979, %v4011
        %v4044 = vadd.f32 %v3980, %v4012
        %v4045 = vadd.f32 %v3981, %v4013
        %v4046 = vadd.f32 %v3982, %v4014
        %v4047 = vadd.f32 %v3983, %v4015
        %v4048 = vadd.f32 %v3984, %v4016
        %v4049 = vadd.f32 %v3985, %v4017
        %v4050 = vadd.f32 %v3986, %v4018
        %v4051 = vadd.f32 %v3987, %v4019
        %v4052 = vadd.f32 %v3988, %v4020
        %4053 = vst [vmem:[%s230] sm:$0xff] %v4021
        %4054 = vst [vmem:[%s230 + $0x8] sm:$0xff] %v4022
        %4055 = vst [vmem:[%s230 + $0x10] sm:$0xff] %v4023
        %4056 = vst [vmem:[%s230 + $0x18] sm:$0xff] %v4024
        %4057 = vst [vmem:[%s230 + $0x20] sm:$0xff] %v4025
        %4058 = vst [vmem:[%s230 + $0x28] sm:$0xff] %v4026
        %4059 = vst [vmem:[%s230 + $0x30] sm:$0xff] %v4027
        %4060 = vst [vmem:[%s230 + $0x38] sm:$0xff] %v4028
        %4061 = vst [vmem:[%s230 + $0x40] sm:$0xff] %v4029
        %4062 = vst [vmem:[%s230 + $0x48] sm:$0xff] %v4030
        %4063 = vst [vmem:[%s230 + $0x50] sm:$0xff] %v4031
        %4064 = vst [vmem:[%s230 + $0x58] sm:$0xff] %v4032
        %4065 = vst [vmem:[%s230 + $0x60] sm:$0xff] %v4033
        %4066 = vst [vmem:[%s230 + $0x68] sm:$0xff] %v4034
        %4067 = vst [vmem:[%s230 + $0x70] sm:$0xff] %v4035
        %4068 = vst [vmem:[%s230 + $0x78] sm:$0xff] %v4036
        %4069 = vst [vmem:[%s230 + $0x80] sm:$0xff] %v4037
        %4070 = vst [vmem:[%s230 + $0x88] sm:$0xff] %v4038
        %4071 = vst [vmem:[%s230 + $0x90] sm:$0xff] %v4039
        %4072 = vst [vmem:[%s230 + $0x98] sm:$0xff] %v4040
        %4073 = vst [vmem:[%s230 + $0xa0] sm:$0xff] %v4041
        %4074 = vst [vmem:[%s230 + $0xa8] sm:$0xff] %v4042
        %4075 = vst [vmem:[%s230 + $0xb0] sm:$0xff] %v4043
        %4076 = vst [vmem:[%s230 + $0xb8] sm:$0xff] %v4044
        %4077 = vst [vmem:[%s230 + $0xc0] sm:$0xff] %v4045
        %4078 = vst [vmem:[%s230 + $0xc8] sm:$0xff] %v4046
        %4079 = vst [vmem:[%s230 + $0xd0] sm:$0xff] %v4047
        %4080 = vst [vmem:[%s230 + $0xd8] sm:$0xff] %v4048
        %4081 = vst [vmem:[%s230 + $0xe0] sm:$0xff] %v4049
        %4082 = vst [vmem:[%s230 + $0xe8] sm:$0xff] %v4050
        %4083 = vst [vmem:[%s230 + $0xf0] sm:$0xff] %v4051
        %4084 = vst [vmem:[%s230 + $0xf8] sm:$0xff] %v4052
        %s4085 = sand.u32 %s119, 1
        %s4086 = scalar_lea.sflag [#allocation5], %s4085
        %s4087 = sand.u32 %s119, 1
        %s4088 = smul.addr %s4087, 256
        %s4089 = scalar_lea.vmem [#allocation8], %s4088
        // Predicated region
        $region45: #{tpu_custom_call.1} parent=35 // pred_check
          %p4090 = pneg %p129
        $region46: #{tpu_custom_call.1} parent=35 // pred_check_branch
          %4092 = sbr.rel (%p4090) target = $region48
        $region47: #{tpu_custom_call.1} parent=35 // pred_region
          %s4094 = ssub.s32 4096, 4096
          %4095 = vsyncadd %s4086, %s4094
          %s4096 = smul.addr %s22, 32
          %s4097 = smul.addr %s4096, 128
          %s4098 = scalar_lea.hbm %s4, %s4097
          %s4099 = sshll.u32 %s4089, 4
          %s4100 = int_to_ptr.vmem [resolvable:$true] %s4099
          %4105 = dma.vmem_to_hbm [thread:$0]  %s4100, 4096, %s4098, %s4086, 128, 128, 8
        $region48: #{tpu_custom_call.1} parent=35 // pred_fallthru
          _
      $region36: #{tpu_custom_call.1} parent=5 // pred_fallthru
        _
      %p4106 = scmp.le.s32.totalorder 2, %s17
      // Predicated region
      $region49: #{tpu_custom_call.1} parent=5 // pred_check
        %p4107 = pneg %p4106
      $region50: #{tpu_custom_call.1} parent=5 // pred_check_branch
        %4109 = sbr.rel (%p4107) target = $region52
      $region51: #{tpu_custom_call.1} parent=5 // pred_region
        %s4110 = ssub.s32 %s17, 2
        // Predicated region
        $region53: #{tpu_custom_call.1} parent=51 // pred_check
          %p4111 = pneg %p135
        $region54: #{tpu_custom_call.1} parent=51 // pred_check_branch
          %4113 = sbr.rel (%p4111) target = $region56
        $region55: #{tpu_custom_call.1} parent=51 // pred_region
          %s4114 = sand.u32 %s120, 1
          %s4115 = scalar_lea.sflag [#allocation5], %s4114
          %s4116 = sand.u32 %s120, 1
          %s4117 = smul.addr %s4116, 256
          %s4118 = scalar_lea.vmem [#allocation8], %s4117
          %4119 = dma.done %s4115, 4096
        $region56: #{tpu_custom_call.1} parent=51 // pred_fallthru
          _
      $region52: #{tpu_custom_call.1} parent=5 // pred_fallthru
        _
    $region6: #{tpu_custom_call.1} parent=1 // loop_footer
      %s21 = sadd.s32 1, %s17
    $region7: #{tpu_custom_call.1} parent=1 // loop_footer_branch
      %16 = sbr.rel target = $region3
    $region8: #{tpu_custom_call.1} parent=1 // loop_exit
      _
    %4120 = vsyncpa [#allocation4], 1
    %s4121 = scalar_lea.sflag [#allocation4], 1
    %4122 = vsyncpa %s4121, 1
    %4123 = vsyncpa [#allocation7], 1
    %4124 = vsyncpa [#allocation5], 1
    %s4125 = scalar_lea.sflag [#allocation5], 1
    %4126 = vsyncpa %s4125, 1

</llo_original>
